<compile_context>
chip_gen: v7x
topology: tpu7x:2x2x1
jax: 0.10.0
libtpu: 0.0.40
codegen_flags: <defaults>
</compile_context>

<pallas_src>
import functools

import jax
import jax.numpy as jnp
import numpy as np
from jax.experimental import pallas as pl
from jax.experimental.pallas import tpu as pltpu

# ----------------------------- model config ---------------------------------
VOCAB = 50            # vocabulary_size
EMB = 32              # embedding_dim
WIN = 4               # window_size
FILT = 32             # filter_multiplier
HID = 16              # hidden_dim
BATCH = 8             # fills all 8 sublanes
SEQ = 16              # sequence length (>= WIN, multiple of 8, power of 2)
VPAD = 128            # vocabulary padded to one vreg lane width
OUT_LANES = 128       # lane-padded kernel output width

_VMEM = pl.BlockSpec(memory_space=pltpu.MemorySpace.VMEM)


# ------------------------------ fused kernel --------------------------------
def hybrid_kernel(tok_ref, t_ref, w_ref, b_ref, out_ref, *, B, S, W, F, H, VPAD):
    BS = B * S
    L = S - W + 1
    H2 = 2 * H
    H8 = 8 * H

    # ---- bias slab: one (8,128) vreg ---------------------------------------
    biases = b_ref[...]                                  # (8, 128)
    conv_b = biases[0:1, 0:F]                            # (1, F)
    b0 = biases[1:2, 0:H8]                               # (1, 8H)
    b1 = biases[2:3, 0:H8]                               # (1, 8H)
    fc_b = biases[3:4, :]                                # (1, 128)

    # ---- embedding gather + Conv1d fused into ONE multi-hot MXU matmul -----
    # mh[r, w*VPAD + v] = (token at row r, tap w) == v ;  T[w*VPAD+v, f] = sum_e emb[v,e]*conv_w[f,e,w]
    iota_v = jax.lax.broadcasted_iota(jnp.int32, (BS, VPAD), 1)
    blocks = [(tok_ref[w] == iota_v).astype(jnp.float32) for w in range(W)]
    mh = jnp.concatenate(blocks, axis=1)                 # (BS, W*VPAD)
    conv = jnp.dot(mh, t_ref[...],
                   preferred_element_type=jnp.float32) + conv_b
    conv = jnp.maximum(conv, 0.0)                        # ReLU, (BS, F)

    # mask rows with l >= L (invalid conv positions); relu output >= 0 so a
    # zero fill never changes the max
    pos = jax.lax.broadcasted_iota(jnp.int32, (BS, F), 0) & (S - 1)   # S is 2^k
    conv = jnp.where(pos < L, conv, 0.0)

    # global max-pool per batch: sublane-aligned slices (S is a multiple of 8)
    feat = jnp.concatenate(
        [jnp.max(conv[b * S:(b + 1) * S, :], axis=0, keepdims=True) for b in range(B)],
        axis=0)                                          # (B, F)
    # dropout_cnn: identity in eval mode.

    # ---- weight slab: static lane-aligned windows ---------------------------
    w_ih0 = w_ref[:, 0 * H8:1 * H8]                      # (F, 8H)
    w_hh0 = w_ref[:, 1 * H8:2 * H8]                      # (2H, 8H)
    w_ih1_pk = w_ref[:, 2 * H8:4 * H8]                   # (2H, 16H)
    w_hh1 = w_ref[:, 4 * H8:5 * H8]                      # (2H, 8H)
    fc_w = w_ref[:, 5 * H8:6 * H8]                       # (2H, 128)

    # ---- fused bidirectional LSTM cell (both directions in one 8H gate) ----
    # Packed gate layout: [i_f,i_b | f_f,f_b | g_f,g_b | o_f,o_b]; g columns of
    # all packed weights/biases are pre-scaled by 2 so tanh(g)=2*sigmoid(2g)-1.
    def fused_step(gin, h, c, w_hh):
        g = gin + jnp.dot(h, w_hh, preferred_element_type=jnp.float32)  # (B, 8H)
        sg = jax.nn.sigmoid(g)                           # one EUP pass, 128 lanes
        i = sg[:, 0 * H2:1 * H2]
        f = sg[:, 1 * H2:2 * H2]
        gg = 2.0 * sg[:, 2 * H2:3 * H2] - 1.0            # == tanh(g)
        o = sg[:, 3 * H2:4 * H2]
        c_new = f * c + i * gg                           # state layout [fwd | bwd]
        h_new = o * jnp.tanh(c_new)
        return h_new, c_new

    zeros = jnp.zeros((B, H2), jnp.float32)

    # ---- layer 0: time-constant input projection hoisted out of the loop ----
    gx0 = jnp.dot(feat, w_ih0, preferred_element_type=jnp.float32) + b0   # (B, 8H)
    h, c = zeros, zeros
    states0 = []                        # states0[k] = fused state after k+1 steps
    for _ in range(S):
        h, c = fused_step(gx0, h, c, w_hh0)
        states0.append(h)
    # fwd0[t] = states0[t][:, :H]   bwd0[t] = states0[S-1-t][:, H:]

    # ---- layer 1: ALL input projections as one batched matmul --------------
    ss = jnp.concatenate(states0, axis=0)                            # (S*B, 2H)
    gall = jnp.dot(ss, w_ih1_pk, preferred_element_type=jnp.float32)  # (S*B, 16H)
    h1, c1 = zeros, zeros
    for k in range(S):
        ga = gall[k * B:(k + 1) * B, 0:H8]                   # states0[k]     @ A
        gb = gall[(S - 1 - k) * B:(S - k) * B, H8:2 * H8]    # states0[S-1-k] @ Bm
        h1, c1 = fused_step(ga + gb + b1, h1, c1, w_hh1)
    # h1 == concat(ht[-2], ht[-1])

    # ---- final Linear: lane-tiled weight -> single unmasked (B,128) store ---
    out_ref[...] = jnp.dot(h1, fc_w, preferred_element_type=jnp.float32) + fc_b


# --------------------------- weight packing (once) ---------------------------
def _gate_perm(H):
    """naive cols [i_f,f_f,g_f,o_f | i_b,f_b,g_b,o_b] -> packed
    [i_f,i_b | f_f,f_b | g_f,g_b | o_f,o_b] (each block H wide)."""
    idx = []
    for q in range(4):
        idx.append(np.arange(q * H, (q + 1) * H))             # fwd gate q
        idx.append(4 * H + np.arange(q * H, (q + 1) * H))     # bwd gate q
    return np.concatenate(idx)


def _scale_g(a, H):
    """Pre-scale packed g-gate columns by 2 (tanh(x) = 2*sigmoid(2x) - 1)."""
    return a.at[..., 4 * H:6 * H].multiply(2.0)


def _pack_bilstm(params, H):
    perm = _gate_perm(H)
    f32 = jnp.float32

    def hh_packed(layer):
        uf = params[f"w_hh_{layer}f"].T.astype(f32)            # (H, 4H)
        ub = params[f"w_hh_{layer}b"].T.astype(f32)
        w = jnp.zeros((2 * H, 8 * H), f32)
        w = w.at[:H, :4 * H].set(uf).at[H:, 4 * H:].set(ub)    # block diagonal
        return _scale_g(w[:, perm], H)

    def bias_packed(layer):
        bf = (params[f"b_ih_{layer}f"] + params[f"b_hh_{layer}f"]).astype(f32)
        bb = (params[f"b_ih_{layer}b"] + params[f"b_hh_{layer}b"]).astype(f32)
        return _scale_g(jnp.concatenate([bf, bb])[perm].reshape(1, 8 * H), H)

    # layer 0: both directions see the same time-constant input
    w_ih0 = jnp.concatenate([params["w_ih_l0f"].T.astype(f32),
                             params["w_ih_l0b"].T.astype(f32)], axis=1)[:, perm]
    w_ih0 = _scale_g(w_ih0, H)

    # layer 1 batched projection: gin[k] = states0[k] @ A + states0[S-1-k] @ Bm + b1
    # states0[k] columns: [0:H] = fwd0[k], [H:2H] = bwd0[S-1-k]
    af = params["w_ih_l1f"].T.astype(f32)                      # (2H, 4H)
    ab = params["w_ih_l1b"].T.astype(f32)
    A = jnp.zeros((2 * H, 8 * H), f32)
    A = A.at[0:H, :4 * H].set(af[:H])                          # fwd0[k]     -> fwd gates
    A = A.at[H:2 * H, 4 * H:].set(ab[H:])                      # bwd0[S-1-k] -> bwd gates
    Bm = jnp.zeros((2 * H, 8 * H), f32)
    Bm = Bm.at[H:2 * H, :4 * H].set(af[H:])                    # bwd0[k]     -> fwd gates
    Bm = Bm.at[0:H, 4 * H:].set(ab[:H])                        # fwd0[S-1-k] -> bwd gates
    w_ih1_pk = jnp.concatenate(
        [_scale_g(A[:, perm], H), _scale_g(Bm[:, perm], H)], axis=1)   # (2H, 16H)

    return (w_ih0, hh_packed("l0"), bias_packed("l0"),
            w_ih1_pk, hh_packed("l1"), bias_packed("l1"))


def pack_params(params):
    """One-time packing of inference constants (keep OUTSIDE the per-call jit)."""
    f32 = jnp.float32
    emb = params["emb"].astype(f32)                            # (V+1, E)
    conv_w = params["conv_w"].astype(f32)                      # (F, E, W)
    F_, _, W = conv_w.shape
    H = HID
    assert F_ == 2 * H, "weight-slab packing assumes filter_multiplier == 2*hidden_dim"
    assert 8 * H == OUT_LANES
    assert emb.shape[0] <= VPAD

    # fused embedding * conv-tap table: T[w*VPAD+v, f] = sum_e emb[v,e]*conv_w[f,e,w]
    t = jnp.einsum("ve,few->wvf", emb, conv_w)                 # (W, V+1, F)
    t = jnp.pad(t, ((0, 0), (0, VPAD - emb.shape[0]), (0, 0))).reshape(W * VPAD, F_)

    w_ih0, w_hh0, b0, w_ih1_pk, w_hh1, b1 = _pack_bilstm(params, H)

    # final Linear lane-tiled to 128 so the kernel output store is unmasked
    fc_w = jnp.tile(params["fc_w"].T.astype(f32), (1, OUT_LANES))       # (2H, 128)

    # one weight slab (all blocks have 2H == F rows), lane offsets are k*128
    w_slab = jnp.concatenate([w_ih0, w_hh0, w_ih1_pk, w_hh1, fc_w], axis=1)   # (2H, 48H)

    # one (8,128) bias slab
    b_slab = jnp.zeros((8, OUT_LANES), f32)
    b_slab = b_slab.at[0, :F_].set(params["conv_b"].astype(f32))
    b_slab = b_slab.at[1, :8 * H].set(b0[0])
    b_slab = b_slab.at[2, :8 * H].set(b1[0])
    b_slab = b_slab.at[3, :].set(params["fc_b"].astype(f32)[0])

    return {"emb_conv": t, "w_slab": w_slab, "b_slab": b_slab}


# ------------------------------ wrapper --------------------------------------
def hybrid_forward(tokens, packed):
    """Replicates Hybrid.forward (eval mode) with one fused Pallas TPU kernel."""
    B, S = tokens.shape
    W, F_, H = WIN, FILT, HID
    assert S >= W and S % 8 == 0 and (S & (S - 1)) == 0

    # per-call glue: W shifted token columns (tiny int32 ops); pad token 0 maps
    # to the zero embedding row and the affected rows are masked in-kernel.
    taps = [jnp.pad(tokens[:, w:], ((0, 0), (0, w))).reshape(B * S, 1)
            for w in range(W)]
    tok_taps = jnp.stack(taps, axis=0).astype(jnp.int32)       # (W, B*S, 1)

    out = pl.pallas_call(
        functools.partial(hybrid_kernel, B=B, S=S, W=W, F=F_, H=H, VPAD=VPAD),
        out_shape=jax.ShapeDtypeStruct((B, OUT_LANES), jnp.float32),
        in_specs=[_VMEM] * 4,
        out_specs=_VMEM,
    )(tok_taps, packed["emb_conv"], packed["w_slab"], packed["b_slab"])

    return out[:, 0]                                           # (B,) == output.view(-1)


# --------------------------- pure-JAX reference ------------------------------
def hybrid_reference(tokens, params):
    """Straightforward port of the PyTorch module (eval mode), for verification."""
    emb = params["emb"]
    x = jnp.take(emb, tokens, axis=0).astype(jnp.float32)      # (B, S, E)
    B, S, _ = x.shape
    F_, _, W = params["conv_w"].shape
    H = params["w_hh_l0f"].shape[1]
    L = S - W + 1

    patches = jnp.stack([x[:, w:w + L, :] for w in range(W)], axis=-1)       # (B,L,E,W)
    conv = jnp.einsum("blew,few->blf", patches,
                      params["conv_w"].astype(jnp.float32)) + params["conv_b"]
    feat = jnp.max(jnp.maximum(conv, 0.0), axis=1)             # (B, F)

    def cell(x_t, h, c, w_ih, w_hh, b_ih, b_hh):
        g = x_t @ w_ih.T + b_ih + h @ w_hh.T + b_hh
        i = jax.nn.sigmoid(g[:, 0 * H:1 * H])
        f = jax.nn.sigmoid(g[:, 1 * H:2 * H])
        gg = jnp.tanh(g[:, 2 * H:3 * H])
        o = jax.nn.sigmoid(g[:, 3 * H:4 * H])
        c = f * c + i * gg
        return o * jnp.tanh(c), c

    def run_dir(seq, tag, reverse):
        w_ih, w_hh = params[f"w_ih_{tag}"], params[f"w_hh_{tag}"]
        b_ih, b_hh = params[f"b_ih_{tag}"], params[f"b_hh_{tag}"]
        h = jnp.zeros((B, H), jnp.float32)
        c = jnp.zeros((B, H), jnp.float32)
        outs = [None] * S
        order = range(S - 1, -1, -1) if reverse else range(S)
        for t in order:
            h, c = cell(seq[t], h, c, w_ih, w_hh, b_ih, b_hh)
            outs[t] = h
        return outs, h

    seq0 = [feat] * S                                          # unsqueeze(1).repeat
    f0, _ = run_dir(seq0, "l0f", reverse=False)
    b0_, _ = run_dir(seq0, "l0b", reverse=True)
    seq1 = [jnp.concatenate([f0[t], b0_[t]], axis=1) for t in range(S)]
    _, hf = run_dir(seq1, "l1f", reverse=False)
    _, hb = run_dir(seq1, "l1b", reverse=True)
    hcat = jnp.concatenate([hf, hb], axis=1)                   # cat(ht[-2], ht[-1])
    out = hcat @ params["fc_w"].T + params["fc_b"]
    return out.reshape(-1)


# ------------------------- deterministic params ------------------------------
def init_params(key):
    ks = jax.random.split(key, 24)
    ki = iter(ks)

    def u(k, shape, scale):
        return jax.random.uniform(k, shape, jnp.float32, -scale, scale)

    p = {}
    emb = jax.random.normal(next(ki), (VOCAB + 1, EMB), jnp.float32) * 0.1
    p["emb"] = emb.at[0].set(0.0)                              # padding_idx=0

    k_conv = 1.0 / jnp.sqrt(EMB * WIN)
    p["conv_w"] = u(next(ki), (FILT, EMB, WIN), k_conv)
    p["conv_b"] = u(next(ki), (FILT,), k_conv)

    k_lstm = 1.0 / jnp.sqrt(HID)
    for layer, in_dim in (("l0", FILT), ("l1", 2 * HID)):
        for d in ("f", "b"):
            p[f"w_ih_{layer}{d}"] = u(next(ki), (4 * HID, in_dim), k_lstm)
            p[f"w_hh_{layer}{d}"] = u(next(ki), (4 * HID, HID), k_lstm)
            p[f"b_ih_{layer}{d}"] = u(next(ki), (4 * HID,), k_lstm)
            p[f"b_hh_{layer}{d}"] = u(next(ki), (4 * HID,), k_lstm)

    k_fc = 1.0 / jnp.sqrt(2 * HID)
    p["fc_w"] = u(next(ki), (1, 2 * HID), k_fc)
    p["fc_b"] = u(next(ki), (1,), k_fc)
    return p


if __name__ == "__main__":
    key = jax.random.PRNGKey(0)
    pkey, tkey = jax.random.split(key)
    params = init_params(pkey)
    tokens = jax.random.randint(tkey, (BATCH, SEQ), 1, VOCAB + 1, dtype=jnp.int32)

    # one-time weight packing (inference constants), outside the per-call jit
    packed = jax.tree_util.tree_map(jax.block_until_ready, pack_params(params))

    fwd = jax.jit(hybrid_forward)
    out = jax.block_until_ready(fwd(tokens, packed))
    assert out.shape == (BATCH,) and out.dtype == jnp.float32

    ref = jax.block_until_ready(jax.jit(hybrid_reference)(tokens, params))
    err = float(jnp.max(jnp.abs(out - ref)))
    assert err < 1e-4, f"mismatch vs pure-JAX reference: {err}"

    print("KERNEL_OK")
</pallas_src>

<mosaic_0001>
module attributes {stable_mosaic.version = 11 : i64} {
  func.func @hybrid_kernel(%arg0: memref<4x128x1xi32, #tpu.memory_space<vmem>>, %arg1: memref<512x32xf32, #tpu.memory_space<vmem>>, %arg2: memref<32x768xf32, #tpu.memory_space<vmem>>, %arg3: memref<8x128xf32, #tpu.memory_space<vmem>>, %arg4: memref<8x128xf32, #tpu.memory_space<vmem>>) attributes {dimension_semantics = [], scalar_prefetch = 0 : i64, scratch_operands = 0 : i64, tpu.core_type = #tpu.core_type<tc>} {
    %c0 = arith.constant 0 : index
    %c0_0 = arith.constant 0 : index
    %0 = vector.load %arg3[%c0, %c0_0] : memref<8x128xf32, #tpu.memory_space<vmem>>, vector<8x128xf32>
    %1 = vector.extract_strided_slice %0 {offsets = [0, 0], sizes = [1, 32], strides = [1, 1]} : vector<8x128xf32> to vector<1x32xf32>
    %2 = vector.extract_strided_slice %0 {offsets = [1, 0], sizes = [1, 128], strides = [1, 1]} : vector<8x128xf32> to vector<1x128xf32>
    %3 = vector.extract_strided_slice %0 {offsets = [2, 0], sizes = [1, 128], strides = [1, 1]} : vector<8x128xf32> to vector<1x128xf32>
    %4 = vector.extract_strided_slice %0 {offsets = [3, 0], sizes = [1, 128], strides = [1, 1]} : vector<8x128xf32> to vector<1x128xf32>
    %5 = tpu.iota {dimensions = array<i32: 1>} : vector<128x128xi32>
    %c0_1 = arith.constant 0 : index
    %c0_2 = arith.constant 0 : index
    %c0_3 = arith.constant 0 : index
    %6 = vector.load %arg0[%c0_1, %c0_2, %c0_3] : memref<4x128x1xi32, #tpu.memory_space<vmem>>, vector<1x128x1xi32>
    %7 = vector.shape_cast %6 : vector<1x128x1xi32> to vector<128x1xi32>
    %8 = vector.broadcast %7 : vector<128x1xi32> to vector<128x128xi32>
    %9 = arith.cmpi eq, %8, %5 : vector<128x128xi32>
    %10 = arith.extui %9 : vector<128x128xi1> to vector<128x128xi32>
    %11 = arith.sitofp %10 : vector<128x128xi32> to vector<128x128xf32>
    %c1 = arith.constant 1 : index
    %c0_4 = arith.constant 0 : index
    %c0_5 = arith.constant 0 : index
    %12 = vector.load %arg0[%c1, %c0_4, %c0_5] : memref<4x128x1xi32, #tpu.memory_space<vmem>>, vector<1x128x1xi32>
    %13 = vector.shape_cast %12 : vector<1x128x1xi32> to vector<128x1xi32>
    %14 = vector.broadcast %13 : vector<128x1xi32> to vector<128x128xi32>
    %15 = arith.cmpi eq, %14, %5 : vector<128x128xi32>
    %16 = arith.extui %15 : vector<128x128xi1> to vector<128x128xi32>
    %17 = arith.sitofp %16 : vector<128x128xi32> to vector<128x128xf32>
    %c2 = arith.constant 2 : index
    %c0_6 = arith.constant 0 : index
    %c0_7 = arith.constant 0 : index
    %18 = vector.load %arg0[%c2, %c0_6, %c0_7] : memref<4x128x1xi32, #tpu.memory_space<vmem>>, vector<1x128x1xi32>
    %19 = vector.shape_cast %18 : vector<1x128x1xi32> to vector<128x1xi32>
    %20 = vector.broadcast %19 : vector<128x1xi32> to vector<128x128xi32>
    %21 = arith.cmpi eq, %20, %5 : vector<128x128xi32>
    %22 = arith.extui %21 : vector<128x128xi1> to vector<128x128xi32>
    %23 = arith.sitofp %22 : vector<128x128xi32> to vector<128x128xf32>
    %c3 = arith.constant 3 : index
    %c0_8 = arith.constant 0 : index
    %c0_9 = arith.constant 0 : index
    %24 = vector.load %arg0[%c3, %c0_8, %c0_9] : memref<4x128x1xi32, #tpu.memory_space<vmem>>, vector<1x128x1xi32>
    %25 = vector.shape_cast %24 : vector<1x128x1xi32> to vector<128x1xi32>
    %26 = vector.broadcast %25 : vector<128x1xi32> to vector<128x128xi32>
    %27 = arith.cmpi eq, %26, %5 : vector<128x128xi32>
    %28 = arith.extui %27 : vector<128x128xi1> to vector<128x128xi32>
    %29 = arith.sitofp %28 : vector<128x128xi32> to vector<128x128xf32>
    %30 = tpu.concatenate %11, %17, %23, %29 in 1 : vector<128x128xf32>, vector<128x128xf32>, vector<128x128xf32>, vector<128x128xf32> -> vector<128x512xf32>
    %c0_10 = arith.constant 0 : index
    %c0_11 = arith.constant 0 : index
    %31 = vector.load %arg1[%c0_10, %c0_11] : memref<512x32xf32, #tpu.memory_space<vmem>>, vector<512x32xf32>
    %cst = arith.constant dense<0.000000e+00> : vector<128x32xf32>
    %32 = tpu.matmul %30, %31, %cst {dimension_numbers = #tpu.dot_dimension_numbers<[1], [0], [0], [1], [0, 0, 1, 1], [], []>} : vector<128x512xf32>, vector<512x32xf32>, vector<128x32xf32> -> vector<128x32xf32>
    %33 = vector.broadcast %1 : vector<1x32xf32> to vector<128x32xf32>
    %34 = arith.addf %32, %33 : vector<128x32xf32>
    %cst_12 = arith.constant 0.000000e+00 : f32
    %35 = vector.broadcast %cst_12 : f32 to vector<128x32xf32>
    %36 = arith.maximumf %34, %35 : vector<128x32xf32>
    %37 = tpu.iota {dimensions = array<i32: 0>} : vector<128x32xi32>
    %c15_i32 = arith.constant 15 : i32
    %38 = vector.broadcast %c15_i32 : i32 to vector<128x32xi32>
    %39 = arith.andi %37, %38 : vector<128x32xi32>
    %c13_i32 = arith.constant 13 : i32
    %40 = vector.broadcast %c13_i32 : i32 to vector<128x32xi32>
    %41 = arith.cmpi slt, %39, %40 : vector<128x32xi32>
    %cst_13 = arith.constant 0.000000e+00 : f32
    %42 = vector.broadcast %cst_13 : f32 to vector<128x32xf32>
    %43 = arith.select %41, %36, %42 : vector<128x32xi1>, vector<128x32xf32>
    %44 = vector.extract_strided_slice %43 {offsets = [0, 0], sizes = [16, 32], strides = [1, 1]} : vector<128x32xf32> to vector<16x32xf32>
    %cst_14 = arith.constant dense<0xFF800000> : vector<32xf32>
    %45 = vector.multi_reduction <maximumf>, %44, %cst_14 [0] : vector<16x32xf32> to vector<32xf32>
    %46 = vector.shape_cast %45 : vector<32xf32> to vector<1x32xf32>
    %47 = vector.extract_strided_slice %43 {offsets = [16, 0], sizes = [16, 32], strides = [1, 1]} : vector<128x32xf32> to vector<16x32xf32>
    %cst_15 = arith.constant dense<0xFF800000> : vector<32xf32>
    %48 = vector.multi_reduction <maximumf>, %47, %cst_15 [0] : vector<16x32xf32> to vector<32xf32>
    %49 = vector.shape_cast %48 : vector<32xf32> to vector<1x32xf32>
    %50 = vector.extract_strided_slice %43 {offsets = [32, 0], sizes = [16, 32], strides = [1, 1]} : vector<128x32xf32> to vector<16x32xf32>
    %cst_16 = arith.constant dense<0xFF800000> : vector<32xf32>
    %51 = vector.multi_reduction <maximumf>, %50, %cst_16 [0] : vector<16x32xf32> to vector<32xf32>
    %52 = vector.shape_cast %51 : vector<32xf32> to vector<1x32xf32>
    %53 = vector.extract_strided_slice %43 {offsets = [48, 0], sizes = [16, 32], strides = [1, 1]} : vector<128x32xf32> to vector<16x32xf32>
    %cst_17 = arith.constant dense<0xFF800000> : vector<32xf32>
    %54 = vector.multi_reduction <maximumf>, %53, %cst_17 [0] : vector<16x32xf32> to vector<32xf32>
    %55 = vector.shape_cast %54 : vector<32xf32> to vector<1x32xf32>
    %56 = vector.extract_strided_slice %43 {offsets = [64, 0], sizes = [16, 32], strides = [1, 1]} : vector<128x32xf32> to vector<16x32xf32>
    %cst_18 = arith.constant dense<0xFF800000> : vector<32xf32>
    %57 = vector.multi_reduction <maximumf>, %56, %cst_18 [0] : vector<16x32xf32> to vector<32xf32>
    %58 = vector.shape_cast %57 : vector<32xf32> to vector<1x32xf32>
    %59 = vector.extract_strided_slice %43 {offsets = [80, 0], sizes = [16, 32], strides = [1, 1]} : vector<128x32xf32> to vector<16x32xf32>
    %cst_19 = arith.constant dense<0xFF800000> : vector<32xf32>
    %60 = vector.multi_reduction <maximumf>, %59, %cst_19 [0] : vector<16x32xf32> to vector<32xf32>
    %61 = vector.shape_cast %60 : vector<32xf32> to vector<1x32xf32>
    %62 = vector.extract_strided_slice %43 {offsets = [96, 0], sizes = [16, 32], strides = [1, 1]} : vector<128x32xf32> to vector<16x32xf32>
    %cst_20 = arith.constant dense<0xFF800000> : vector<32xf32>
    %63 = vector.multi_reduction <maximumf>, %62, %cst_20 [0] : vector<16x32xf32> to vector<32xf32>
    %64 = vector.shape_cast %63 : vector<32xf32> to vector<1x32xf32>
    %65 = vector.extract_strided_slice %43 {offsets = [112, 0], sizes = [16, 32], strides = [1, 1]} : vector<128x32xf32> to vector<16x32xf32>
    %cst_21 = arith.constant dense<0xFF800000> : vector<32xf32>
    %66 = vector.multi_reduction <maximumf>, %65, %cst_21 [0] : vector<16x32xf32> to vector<32xf32>
    %67 = vector.shape_cast %66 : vector<32xf32> to vector<1x32xf32>
    %68 = tpu.concatenate %46, %49, %52, %55, %58, %61, %64, %67 in 0 : vector<1x32xf32>, vector<1x32xf32>, vector<1x32xf32>, vector<1x32xf32>, vector<1x32xf32>, vector<1x32xf32>, vector<1x32xf32>, vector<1x32xf32> -> vector<8x32xf32>
    %c0_22 = arith.constant 0 : index
    %c0_23 = arith.constant 0 : index
    %69 = vector.load %arg2[%c0_22, %c0_23] : memref<32x768xf32, #tpu.memory_space<vmem>>, vector<32x128xf32>
    %c0_24 = arith.constant 0 : index
    %c128 = arith.constant 128 : index
    %70 = vector.load %arg2[%c0_24, %c128] : memref<32x768xf32, #tpu.memory_space<vmem>>, vector<32x128xf32>
    %c0_25 = arith.constant 0 : index
    %c256 = arith.constant 256 : index
    %71 = vector.load %arg2[%c0_25, %c256] : memref<32x768xf32, #tpu.memory_space<vmem>>, vector<32x256xf32>
    %c0_26 = arith.constant 0 : index
    %c512 = arith.constant 512 : index
    %72 = vector.load %arg2[%c0_26, %c512] : memref<32x768xf32, #tpu.memory_space<vmem>>, vector<32x128xf32>
    %c0_27 = arith.constant 0 : index
    %c640 = arith.constant 640 : index
    %73 = vector.load %arg2[%c0_27, %c640] : memref<32x768xf32, #tpu.memory_space<vmem>>, vector<32x128xf32>
    %cst_28 = arith.constant 0.000000e+00 : f32
    %74 = vector.broadcast %cst_28 : f32 to vector<8x32xf32>
    %cst_29 = arith.constant dense<0.000000e+00> : vector<8x128xf32>
    %75 = tpu.matmul %68, %69, %cst_29 {dimension_numbers = #tpu.dot_dimension_numbers<[1], [0], [0], [1], [0, 0, 1, 1], [], []>} : vector<8x32xf32>, vector<32x128xf32>, vector<8x128xf32> -> vector<8x128xf32>
    %76 = vector.broadcast %2 : vector<1x128xf32> to vector<8x128xf32>
    %77 = arith.addf %75, %76 : vector<8x128xf32>
    %cst_30 = arith.constant dense<0.000000e+00> : vector<8x128xf32>
    %78 = tpu.matmul %74, %70, %cst_30 {dimension_numbers = #tpu.dot_dimension_numbers<[1], [0], [0], [1], [0, 0, 1, 1], [], []>} : vector<8x32xf32>, vector<32x128xf32>, vector<8x128xf32> -> vector<8x128xf32>
    %79 = arith.addf %77, %78 : vector<8x128xf32>
    %80 = arith.negf %79 : vector<8x128xf32>
    %81 = math.exp %80 : vector<8x128xf32>
    %cst_31 = arith.constant 1.000000e+00 : f32
    %82 = vector.broadcast %cst_31 : f32 to vector<8x128xf32>
    %83 = arith.addf %82, %81 : vector<8x128xf32>
    %84 = arith.divf %82, %83 : vector<8x128xf32>
    %85 = vector.extract_strided_slice %84 {offsets = [0, 0], sizes = [8, 32], strides = [1, 1]} : vector<8x128xf32> to vector<8x32xf32>
    %86 = vector.extract_strided_slice %84 {offsets = [0, 32], sizes = [8, 32], strides = [1, 1]} : vector<8x128xf32> to vector<8x32xf32>
    %87 = vector.extract_strided_slice %84 {offsets = [0, 64], sizes = [8, 32], strides = [1, 1]} : vector<8x128xf32> to vector<8x32xf32>
    %cst_32 = arith.constant 2.000000e+00 : f32
    %88 = vector.broadcast %cst_32 : f32 to vector<8x32xf32>
    %89 = arith.mulf %88, %87 : vector<8x32xf32>
    %cst_33 = arith.constant 1.000000e+00 : f32
    %90 = vector.broadcast %cst_33 : f32 to vector<8x32xf32>
    %91 = arith.subf %89, %90 : vector<8x32xf32>
    %92 = vector.extract_strided_slice %84 {offsets = [0, 96], sizes = [8, 32], strides = [1, 1]} : vector<8x128xf32> to vector<8x32xf32>
    %93 = arith.mulf %86, %74 : vector<8x32xf32>
    %94 = arith.mulf %85, %91 : vector<8x32xf32>
    %95 = arith.addf %93, %94 : vector<8x32xf32>
    %96 = math.tanh %95 : vector<8x32xf32>
    %97 = arith.mulf %92, %96 : vector<8x32xf32>
    %cst_34 = arith.constant dense<0.000000e+00> : vector<8x128xf32>
    %98 = tpu.matmul %97, %70, %cst_34 {dimension_numbers = #tpu.dot_dimension_numbers<[1], [0], [0], [1], [0, 0, 1, 1], [], []>} : vector<8x32xf32>, vector<32x128xf32>, vector<8x128xf32> -> vector<8x128xf32>
    %99 = arith.addf %77, %98 : vector<8x128xf32>
    %100 = arith.negf %99 : vector<8x128xf32>
    %101 = math.exp %100 : vector<8x128xf32>
    %cst_35 = arith.constant 1.000000e+00 : f32
    %102 = vector.broadcast %cst_35 : f32 to vector<8x128xf32>
    %103 = arith.addf %102, %101 : vector<8x128xf32>
    %104 = arith.divf %102, %103 : vector<8x128xf32>
    %105 = vector.extract_strided_slice %104 {offsets = [0, 0], sizes = [8, 32], strides = [1, 1]} : vector<8x128xf32> to vector<8x32xf32>
    %106 = vector.extract_strided_slice %104 {offsets = [0, 32], sizes = [8, 32], strides = [1, 1]} : vector<8x128xf32> to vector<8x32xf32>
    %107 = vector.extract_strided_slice %104 {offsets = [0, 64], sizes = [8, 32], strides = [1, 1]} : vector<8x128xf32> to vector<8x32xf32>
    %cst_36 = arith.constant 2.000000e+00 : f32
    %108 = vector.broadcast %cst_36 : f32 to vector<8x32xf32>
    %109 = arith.mulf %108, %107 : vector<8x32xf32>
    %cst_37 = arith.constant 1.000000e+00 : f32
    %110 = vector.broadcast %cst_37 : f32 to vector<8x32xf32>
    %111 = arith.subf %109, %110 : vector<8x32xf32>
    %112 = vector.extract_strided_slice %104 {offsets = [0, 96], sizes = [8, 32], strides = [1, 1]} : vector<8x128xf32> to vector<8x32xf32>
    %113 = arith.mulf %106, %95 : vector<8x32xf32>
    %114 = arith.mulf %105, %111 : vector<8x32xf32>
    %115 = arith.addf %113, %114 : vector<8x32xf32>
    %116 = math.tanh %115 : vector<8x32xf32>
    %117 = arith.mulf %112, %116 : vector<8x32xf32>
    %cst_38 = arith.constant dense<0.000000e+00> : vector<8x128xf32>
    %118 = tpu.matmul %117, %70, %cst_38 {dimension_numbers = #tpu.dot_dimension_numbers<[1], [0], [0], [1], [0, 0, 1, 1], [], []>} : vector<8x32xf32>, vector<32x128xf32>, vector<8x128xf32> -> vector<8x128xf32>
    %119 = arith.addf %77, %118 : vector<8x128xf32>
    %120 = arith.negf %119 : vector<8x128xf32>
    %121 = math.exp %120 : vector<8x128xf32>
    %cst_39 = arith.constant 1.000000e+00 : f32
    %122 = vector.broadcast %cst_39 : f32 to vector<8x128xf32>
    %123 = arith.addf %122, %121 : vector<8x128xf32>
    %124 = arith.divf %122, %123 : vector<8x128xf32>
    %125 = vector.extract_strided_slice %124 {offsets = [0, 0], sizes = [8, 32], strides = [1, 1]} : vector<8x128xf32> to vector<8x32xf32>
    %126 = vector.extract_strided_slice %124 {offsets = [0, 32], sizes = [8, 32], strides = [1, 1]} : vector<8x128xf32> to vector<8x32xf32>
    %127 = vector.extract_strided_slice %124 {offsets = [0, 64], sizes = [8, 32], strides = [1, 1]} : vector<8x128xf32> to vector<8x32xf32>
    %cst_40 = arith.constant 2.000000e+00 : f32
    %128 = vector.broadcast %cst_40 : f32 to vector<8x32xf32>
    %129 = arith.mulf %128, %127 : vector<8x32xf32>
    %cst_41 = arith.constant 1.000000e+00 : f32
    %130 = vector.broadcast %cst_41 : f32 to vector<8x32xf32>
    %131 = arith.subf %129, %130 : vector<8x32xf32>
    %132 = vector.extract_strided_slice %124 {offsets = [0, 96], sizes = [8, 32], strides = [1, 1]} : vector<8x128xf32> to vector<8x32xf32>
    %133 = arith.mulf %126, %115 : vector<8x32xf32>
    %134 = arith.mulf %125, %131 : vector<8x32xf32>
    %135 = arith.addf %133, %134 : vector<8x32xf32>
    %136 = math.tanh %135 : vector<8x32xf32>
    %137 = arith.mulf %132, %136 : vector<8x32xf32>
    %cst_42 = arith.constant dense<0.000000e+00> : vector<8x128xf32>
    %138 = tpu.matmul %137, %70, %cst_42 {dimension_numbers = #tpu.dot_dimension_numbers<[1], [0], [0], [1], [0, 0, 1, 1], [], []>} : vector<8x32xf32>, vector<32x128xf32>, vector<8x128xf32> -> vector<8x128xf32>
    %139 = arith.addf %77, %138 : vector<8x128xf32>
    %140 = arith.negf %139 : vector<8x128xf32>
    %141 = math.exp %140 : vector<8x128xf32>
    %cst_43 = arith.constant 1.000000e+00 : f32
    %142 = vector.broadcast %cst_43 : f32 to vector<8x128xf32>
    %143 = arith.addf %142, %141 : vector<8x128xf32>
    %144 = arith.divf %142, %143 : vector<8x128xf32>
    %145 = vector.extract_strided_slice %144 {offsets = [0, 0], sizes = [8, 32], strides = [1, 1]} : vector<8x128xf32> to vector<8x32xf32>
    %146 = vector.extract_strided_slice %144 {offsets = [0, 32], sizes = [8, 32], strides = [1, 1]} : vector<8x128xf32> to vector<8x32xf32>
    %147 = vector.extract_strided_slice %144 {offsets = [0, 64], sizes = [8, 32], strides = [1, 1]} : vector<8x128xf32> to vector<8x32xf32>
    %cst_44 = arith.constant 2.000000e+00 : f32
    %148 = vector.broadcast %cst_44 : f32 to vector<8x32xf32>
    %149 = arith.mulf %148, %147 : vector<8x32xf32>
    %cst_45 = arith.constant 1.000000e+00 : f32
    %150 = vector.broadcast %cst_45 : f32 to vector<8x32xf32>
    %151 = arith.subf %149, %150 : vector<8x32xf32>
    %152 = vector.extract_strided_slice %144 {offsets = [0, 96], sizes = [8, 32], strides = [1, 1]} : vector<8x128xf32> to vector<8x32xf32>
    %153 = arith.mulf %146, %135 : vector<8x32xf32>
    %154 = arith.mulf %145, %151 : vector<8x32xf32>
    %155 = arith.addf %153, %154 : vector<8x32xf32>
    %156 = math.tanh %155 : vector<8x32xf32>
    %157 = arith.mulf %152, %156 : vector<8x32xf32>
    %cst_46 = arith.constant dense<0.000000e+00> : vector<8x128xf32>
    %158 = tpu.matmul %157, %70, %cst_46 {dimension_numbers = #tpu.dot_dimension_numbers<[1], [0], [0], [1], [0, 0, 1, 1], [], []>} : vector<8x32xf32>, vector<32x128xf32>, vector<8x128xf32> -> vector<8x128xf32>
    %159 = arith.addf %77, %158 : vector<8x128xf32>
    %160 = arith.negf %159 : vector<8x128xf32>
    %161 = math.exp %160 : vector<8x128xf32>
    %cst_47 = arith.constant 1.000000e+00 : f32
    %162 = vector.broadcast %cst_47 : f32 to vector<8x128xf32>
    %163 = arith.addf %162, %161 : vector<8x128xf32>
    %164 = arith.divf %162, %163 : vector<8x128xf32>
    %165 = vector.extract_strided_slice %164 {offsets = [0, 0], sizes = [8, 32], strides = [1, 1]} : vector<8x128xf32> to vector<8x32xf32>
    %166 = vector.extract_strided_slice %164 {offsets = [0, 32], sizes = [8, 32], strides = [1, 1]} : vector<8x128xf32> to vector<8x32xf32>
    %167 = vector.extract_strided_slice %164 {offsets = [0, 64], sizes = [8, 32], strides = [1, 1]} : vector<8x128xf32> to vector<8x32xf32>
    %cst_48 = arith.constant 2.000000e+00 : f32
    %168 = vector.broadcast %cst_48 : f32 to vector<8x32xf32>
    %169 = arith.mulf %168, %167 : vector<8x32xf32>
    %cst_49 = arith.constant 1.000000e+00 : f32
    %170 = vector.broadcast %cst_49 : f32 to vector<8x32xf32>
    %171 = arith.subf %169, %170 : vector<8x32xf32>
    %172 = vector.extract_strided_slice %164 {offsets = [0, 96], sizes = [8, 32], strides = [1, 1]} : vector<8x128xf32> to vector<8x32xf32>
    %173 = arith.mulf %166, %155 : vector<8x32xf32>
    %174 = arith.mulf %165, %171 : vector<8x32xf32>
    %175 = arith.addf %173, %174 : vector<8x32xf32>
    %176 = math.tanh %175 : vector<8x32xf32>
    %177 = arith.mulf %172, %176 : vector<8x32xf32>
    %cst_50 = arith.constant dense<0.000000e+00> : vector<8x128xf32>
    %178 = tpu.matmul %177, %70, %cst_50 {dimension_numbers = #tpu.dot_dimension_numbers<[1], [0], [0], [1], [0, 0, 1, 1], [], []>} : vector<8x32xf32>, vector<32x128xf32>, vector<8x128xf32> -> vector<8x128xf32>
    %179 = arith.addf %77, %178 : vector<8x128xf32>
    %180 = arith.negf %179 : vector<8x128xf32>
    %181 = math.exp %180 : vector<8x128xf32>
    %cst_51 = arith.constant 1.000000e+00 : f32
    %182 = vector.broadcast %cst_51 : f32 to vector<8x128xf32>
    %183 = arith.addf %182, %181 : vector<8x128xf32>
    %184 = arith.divf %182, %183 : vector<8x128xf32>
    %185 = vector.extract_strided_slice %184 {offsets = [0, 0], sizes = [8, 32], strides = [1, 1]} : vector<8x128xf32> to vector<8x32xf32>
    %186 = vector.extract_strided_slice %184 {offsets = [0, 32], sizes = [8, 32], strides = [1, 1]} : vector<8x128xf32> to vector<8x32xf32>
    %187 = vector.extract_strided_slice %184 {offsets = [0, 64], sizes = [8, 32], strides = [1, 1]} : vector<8x128xf32> to vector<8x32xf32>
    %cst_52 = arith.constant 2.000000e+00 : f32
    %188 = vector.broadcast %cst_52 : f32 to vector<8x32xf32>
    %189 = arith.mulf %188, %187 : vector<8x32xf32>
    %cst_53 = arith.constant 1.000000e+00 : f32
    %190 = vector.broadcast %cst_53 : f32 to vector<8x32xf32>
    %191 = arith.subf %189, %190 : vector<8x32xf32>
    %192 = vector.extract_strided_slice %184 {offsets = [0, 96], sizes = [8, 32], strides = [1, 1]} : vector<8x128xf32> to vector<8x32xf32>
    %193 = arith.mulf %186, %175 : vector<8x32xf32>
    %194 = arith.mulf %185, %191 : vector<8x32xf32>
    %195 = arith.addf %193, %194 : vector<8x32xf32>
    %196 = math.tanh %195 : vector<8x32xf32>
    %197 = arith.mulf %192, %196 : vector<8x32xf32>
    %cst_54 = arith.constant dense<0.000000e+00> : vector<8x128xf32>
    %198 = tpu.matmul %197, %70, %cst_54 {dimension_numbers = #tpu.dot_dimension_numbers<[1], [0], [0], [1], [0, 0, 1, 1], [], []>} : vector<8x32xf32>, vector<32x128xf32>, vector<8x128xf32> -> vector<8x128xf32>
    %199 = arith.addf %77, %198 : vector<8x128xf32>
    %200 = arith.negf %199 : vector<8x128xf32>
    %201 = math.exp %200 : vector<8x128xf32>
    %cst_55 = arith.constant 1.000000e+00 : f32
    %202 = vector.broadcast %cst_55 : f32 to vector<8x128xf32>
    %203 = arith.addf %202, %201 : vector<8x128xf32>
    %204 = arith.divf %202, %203 : vector<8x128xf32>
    %205 = vector.extract_strided_slice %204 {offsets = [0, 0], sizes = [8, 32], strides = [1, 1]} : vector<8x128xf32> to vector<8x32xf32>
    %206 = vector.extract_strided_slice %204 {offsets = [0, 32], sizes = [8, 32], strides = [1, 1]} : vector<8x128xf32> to vector<8x32xf32>
    %207 = vector.extract_strided_slice %204 {offsets = [0, 64], sizes = [8, 32], strides = [1, 1]} : vector<8x128xf32> to vector<8x32xf32>
    %cst_56 = arith.constant 2.000000e+00 : f32
    %208 = vector.broadcast %cst_56 : f32 to vector<8x32xf32>
    %209 = arith.mulf %208, %207 : vector<8x32xf32>
    %cst_57 = arith.constant 1.000000e+00 : f32
    %210 = vector.broadcast %cst_57 : f32 to vector<8x32xf32>
    %211 = arith.subf %209, %210 : vector<8x32xf32>
    %212 = vector.extract_strided_slice %204 {offsets = [0, 96], sizes = [8, 32], strides = [1, 1]} : vector<8x128xf32> to vector<8x32xf32>
    %213 = arith.mulf %206, %195 : vector<8x32xf32>
    %214 = arith.mulf %205, %211 : vector<8x32xf32>
    %215 = arith.addf %213, %214 : vector<8x32xf32>
    %216 = math.tanh %215 : vector<8x32xf32>
    %217 = arith.mulf %212, %216 : vector<8x32xf32>
    %cst_58 = arith.constant dense<0.000000e+00> : vector<8x128xf32>
    %218 = tpu.matmul %217, %70, %cst_58 {dimension_numbers = #tpu.dot_dimension_numbers<[1], [0], [0], [1], [0, 0, 1, 1], [], []>} : vector<8x32xf32>, vector<32x128xf32>, vector<8x128xf32> -> vector<8x128xf32>
    %219 = arith.addf %77, %218 : vector<8x128xf32>
    %220 = arith.negf %219 : vector<8x128xf32>
    %221 = math.exp %220 : vector<8x128xf32>
    %cst_59 = arith.constant 1.000000e+00 : f32
    %222 = vector.broadcast %cst_59 : f32 to vector<8x128xf32>
    %223 = arith.addf %222, %221 : vector<8x128xf32>
    %224 = arith.divf %222, %223 : vector<8x128xf32>
    %225 = vector.extract_strided_slice %224 {offsets = [0, 0], sizes = [8, 32], strides = [1, 1]} : vector<8x128xf32> to vector<8x32xf32>
    %226 = vector.extract_strided_slice %224 {offsets = [0, 32], sizes = [8, 32], strides = [1, 1]} : vector<8x128xf32> to vector<8x32xf32>
    %227 = vector.extract_strided_slice %224 {offsets = [0, 64], sizes = [8, 32], strides = [1, 1]} : vector<8x128xf32> to vector<8x32xf32>
    %cst_60 = arith.constant 2.000000e+00 : f32
    %228 = vector.broadcast %cst_60 : f32 to vector<8x32xf32>
    %229 = arith.mulf %228, %227 : vector<8x32xf32>
    %cst_61 = arith.constant 1.000000e+00 : f32
    %230 = vector.broadcast %cst_61 : f32 to vector<8x32xf32>
    %231 = arith.subf %229, %230 : vector<8x32xf32>
    %232 = vector.extract_strided_slice %224 {offsets = [0, 96], sizes = [8, 32], strides = [1, 1]} : vector<8x128xf32> to vector<8x32xf32>
    %233 = arith.mulf %226, %215 : vector<8x32xf32>
    %234 = arith.mulf %225, %231 : vector<8x32xf32>
    %235 = arith.addf %233, %234 : vector<8x32xf32>
    %236 = math.tanh %235 : vector<8x32xf32>
    %237 = arith.mulf %232, %236 : vector<8x32xf32>
    %cst_62 = arith.constant dense<0.000000e+00> : vector<8x128xf32>
    %238 = tpu.matmul %237, %70, %cst_62 {dimension_numbers = #tpu.dot_dimension_numbers<[1], [0], [0], [1], [0, 0, 1, 1], [], []>} : vector<8x32xf32>, vector<32x128xf32>, vector<8x128xf32> -> vector<8x128xf32>
    %239 = arith.addf %77, %238 : vector<8x128xf32>
    %240 = arith.negf %239 : vector<8x128xf32>
    %241 = math.exp %240 : vector<8x128xf32>
    %cst_63 = arith.constant 1.000000e+00 : f32
    %242 = vector.broadcast %cst_63 : f32 to vector<8x128xf32>
    %243 = arith.addf %242, %241 : vector<8x128xf32>
    %244 = arith.divf %242, %243 : vector<8x128xf32>
    %245 = vector.extract_strided_slice %244 {offsets = [0, 0], sizes = [8, 32], strides = [1, 1]} : vector<8x128xf32> to vector<8x32xf32>
    %246 = vector.extract_strided_slice %244 {offsets = [0, 32], sizes = [8, 32], strides = [1, 1]} : vector<8x128xf32> to vector<8x32xf32>
    %247 = vector.extract_strided_slice %244 {offsets = [0, 64], sizes = [8, 32], strides = [1, 1]} : vector<8x128xf32> to vector<8x32xf32>
    %cst_64 = arith.constant 2.000000e+00 : f32
    %248 = vector.broadcast %cst_64 : f32 to vector<8x32xf32>
    %249 = arith.mulf %248, %247 : vector<8x32xf32>
    %cst_65 = arith.constant 1.000000e+00 : f32
    %250 = vector.broadcast %cst_65 : f32 to vector<8x32xf32>
    %251 = arith.subf %249, %250 : vector<8x32xf32>
    %252 = vector.extract_strided_slice %244 {offsets = [0, 96], sizes = [8, 32], strides = [1, 1]} : vector<8x128xf32> to vector<8x32xf32>
    %253 = arith.mulf %246, %235 : vector<8x32xf32>
    %254 = arith.mulf %245, %251 : vector<8x32xf32>
    %255 = arith.addf %253, %254 : vector<8x32xf32>
    %256 = math.tanh %255 : vector<8x32xf32>
    %257 = arith.mulf %252, %256 : vector<8x32xf32>
    %cst_66 = arith.constant dense<0.000000e+00> : vector<8x128xf32>
    %258 = tpu.matmul %257, %70, %cst_66 {dimension_numbers = #tpu.dot_dimension_numbers<[1], [0], [0], [1], [0, 0, 1, 1], [], []>} : vector<8x32xf32>, vector<32x128xf32>, vector<8x128xf32> -> vector<8x128xf32>
    %259 = arith.addf %77, %258 : vector<8x128xf32>
    %260 = arith.negf %259 : vector<8x128xf32>
    %261 = math.exp %260 : vector<8x128xf32>
    %cst_67 = arith.constant 1.000000e+00 : f32
    %262 = vector.broadcast %cst_67 : f32 to vector<8x128xf32>
    %263 = arith.addf %262, %261 : vector<8x128xf32>
    %264 = arith.divf %262, %263 : vector<8x128xf32>
    %265 = vector.extract_strided_slice %264 {offsets = [0, 0], sizes = [8, 32], strides = [1, 1]} : vector<8x128xf32> to vector<8x32xf32>
    %266 = vector.extract_strided_slice %264 {offsets = [0, 32], sizes = [8, 32], strides = [1, 1]} : vector<8x128xf32> to vector<8x32xf32>
    %267 = vector.extract_strided_slice %264 {offsets = [0, 64], sizes = [8, 32], strides = [1, 1]} : vector<8x128xf32> to vector<8x32xf32>
    %cst_68 = arith.constant 2.000000e+00 : f32
    %268 = vector.broadcast %cst_68 : f32 to vector<8x32xf32>
    %269 = arith.mulf %268, %267 : vector<8x32xf32>
    %cst_69 = arith.constant 1.000000e+00 : f32
    %270 = vector.broadcast %cst_69 : f32 to vector<8x32xf32>
    %271 = arith.subf %269, %270 : vector<8x32xf32>
    %272 = vector.extract_strided_slice %264 {offsets = [0, 96], sizes = [8, 32], strides = [1, 1]} : vector<8x128xf32> to vector<8x32xf32>
    %273 = arith.mulf %266, %255 : vector<8x32xf32>
    %274 = arith.mulf %265, %271 : vector<8x32xf32>
    %275 = arith.addf %273, %274 : vector<8x32xf32>
    %276 = math.tanh %275 : vector<8x32xf32>
    %277 = arith.mulf %272, %276 : vector<8x32xf32>
    %cst_70 = arith.constant dense<0.000000e+00> : vector<8x128xf32>
    %278 = tpu.matmul %277, %70, %cst_70 {dimension_numbers = #tpu.dot_dimension_numbers<[1], [0], [0], [1], [0, 0, 1, 1], [], []>} : vector<8x32xf32>, vector<32x128xf32>, vector<8x128xf32> -> vector<8x128xf32>
    %279 = arith.addf %77, %278 : vector<8x128xf32>
    %280 = arith.negf %279 : vector<8x128xf32>
    %281 = math.exp %280 : vector<8x128xf32>
    %cst_71 = arith.constant 1.000000e+00 : f32
    %282 = vector.broadcast %cst_71 : f32 to vector<8x128xf32>
    %283 = arith.addf %282, %281 : vector<8x128xf32>
    %284 = arith.divf %282, %283 : vector<8x128xf32>
    %285 = vector.extract_strided_slice %284 {offsets = [0, 0], sizes = [8, 32], strides = [1, 1]} : vector<8x128xf32> to vector<8x32xf32>
    %286 = vector.extract_strided_slice %284 {offsets = [0, 32], sizes = [8, 32], strides = [1, 1]} : vector<8x128xf32> to vector<8x32xf32>
    %287 = vector.extract_strided_slice %284 {offsets = [0, 64], sizes = [8, 32], strides = [1, 1]} : vector<8x128xf32> to vector<8x32xf32>
    %cst_72 = arith.constant 2.000000e+00 : f32
    %288 = vector.broadcast %cst_72 : f32 to vector<8x32xf32>
    %289 = arith.mulf %288, %287 : vector<8x32xf32>
    %cst_73 = arith.constant 1.000000e+00 : f32
    %290 = vector.broadcast %cst_73 : f32 to vector<8x32xf32>
    %291 = arith.subf %289, %290 : vector<8x32xf32>
    %292 = vector.extract_strided_slice %284 {offsets = [0, 96], sizes = [8, 32], strides = [1, 1]} : vector<8x128xf32> to vector<8x32xf32>
    %293 = arith.mulf %286, %275 : vector<8x32xf32>
    %294 = arith.mulf %285, %291 : vector<8x32xf32>
    %295 = arith.addf %293, %294 : vector<8x32xf32>
    %296 = math.tanh %295 : vector<8x32xf32>
    %297 = arith.mulf %292, %296 : vector<8x32xf32>
    %cst_74 = arith.constant dense<0.000000e+00> : vector<8x128xf32>
    %298 = tpu.matmul %297, %70, %cst_74 {dimension_numbers = #tpu.dot_dimension_numbers<[1], [0], [0], [1], [0, 0, 1, 1], [], []>} : vector<8x32xf32>, vector<32x128xf32>, vector<8x128xf32> -> vector<8x128xf32>
    %299 = arith.addf %77, %298 : vector<8x128xf32>
    %300 = arith.negf %299 : vector<8x128xf32>
    %301 = math.exp %300 : vector<8x128xf32>
    %cst_75 = arith.constant 1.000000e+00 : f32
    %302 = vector.broadcast %cst_75 : f32 to vector<8x128xf32>
    %303 = arith.addf %302, %301 : vector<8x128xf32>
    %304 = arith.divf %302, %303 : vector<8x128xf32>
    %305 = vector.extract_strided_slice %304 {offsets = [0, 0], sizes = [8, 32], strides = [1, 1]} : vector<8x128xf32> to vector<8x32xf32>
    %306 = vector.extract_strided_slice %304 {offsets = [0, 32], sizes = [8, 32], strides = [1, 1]} : vector<8x128xf32> to vector<8x32xf32>
    %307 = vector.extract_strided_slice %304 {offsets = [0, 64], sizes = [8, 32], strides = [1, 1]} : vector<8x128xf32> to vector<8x32xf32>
    %cst_76 = arith.constant 2.000000e+00 : f32
    %308 = vector.broadcast %cst_76 : f32 to vector<8x32xf32>
    %309 = arith.mulf %308, %307 : vector<8x32xf32>
    %cst_77 = arith.constant 1.000000e+00 : f32
    %310 = vector.broadcast %cst_77 : f32 to vector<8x32xf32>
    %311 = arith.subf %309, %310 : vector<8x32xf32>
    %312 = vector.extract_strided_slice %304 {offsets = [0, 96], sizes = [8, 32], strides = [1, 1]} : vector<8x128xf32> to vector<8x32xf32>
    %313 = arith.mulf %306, %295 : vector<8x32xf32>
    %314 = arith.mulf %305, %311 : vector<8x32xf32>
    %315 = arith.addf %313, %314 : vector<8x32xf32>
    %316 = math.tanh %315 : vector<8x32xf32>
    %317 = arith.mulf %312, %316 : vector<8x32xf32>
    %cst_78 = arith.constant dense<0.000000e+00> : vector<8x128xf32>
    %318 = tpu.matmul %317, %70, %cst_78 {dimension_numbers = #tpu.dot_dimension_numbers<[1], [0], [0], [1], [0, 0, 1, 1], [], []>} : vector<8x32xf32>, vector<32x128xf32>, vector<8x128xf32> -> vector<8x128xf32>
    %319 = arith.addf %77, %318 : vector<8x128xf32>
    %320 = arith.negf %319 : vector<8x128xf32>
    %321 = math.exp %320 : vector<8x128xf32>
    %cst_79 = arith.constant 1.000000e+00 : f32
    %322 = vector.broadcast %cst_79 : f32 to vector<8x128xf32>
    %323 = arith.addf %322, %321 : vector<8x128xf32>
    %324 = arith.divf %322, %323 : vector<8x128xf32>
    %325 = vector.extract_strided_slice %324 {offsets = [0, 0], sizes = [8, 32], strides = [1, 1]} : vector<8x128xf32> to vector<8x32xf32>
    %326 = vector.extract_strided_slice %324 {offsets = [0, 32], sizes = [8, 32], strides = [1, 1]} : vector<8x128xf32> to vector<8x32xf32>
    %327 = vector.extract_strided_slice %324 {offsets = [0, 64], sizes = [8, 32], strides = [1, 1]} : vector<8x128xf32> to vector<8x32xf32>
    %cst_80 = arith.constant 2.000000e+00 : f32
    %328 = vector.broadcast %cst_80 : f32 to vector<8x32xf32>
    %329 = arith.mulf %328, %327 : vector<8x32xf32>
    %cst_81 = arith.constant 1.000000e+00 : f32
    %330 = vector.broadcast %cst_81 : f32 to vector<8x32xf32>
    %331 = arith.subf %329, %330 : vector<8x32xf32>
    %332 = vector.extract_strided_slice %324 {offsets = [0, 96], sizes = [8, 32], strides = [1, 1]} : vector<8x128xf32> to vector<8x32xf32>
    %333 = arith.mulf %326, %315 : vector<8x32xf32>
    %334 = arith.mulf %325, %331 : vector<8x32xf32>
    %335 = arith.addf %333, %334 : vector<8x32xf32>
    %336 = math.tanh %335 : vector<8x32xf32>
    %337 = arith.mulf %332, %336 : vector<8x32xf32>
    %cst_82 = arith.constant dense<0.000000e+00> : vector<8x128xf32>
    %338 = tpu.matmul %337, %70, %cst_82 {dimension_numbers = #tpu.dot_dimension_numbers<[1], [0], [0], [1], [0, 0, 1, 1], [], []>} : vector<8x32xf32>, vector<32x128xf32>, vector<8x128xf32> -> vector<8x128xf32>
    %339 = arith.addf %77, %338 : vector<8x128xf32>
    %340 = arith.negf %339 : vector<8x128xf32>
    %341 = math.exp %340 : vector<8x128xf32>
    %cst_83 = arith.constant 1.000000e+00 : f32
    %342 = vector.broadcast %cst_83 : f32 to vector<8x128xf32>
    %343 = arith.addf %342, %341 : vector<8x128xf32>
    %344 = arith.divf %342, %343 : vector<8x128xf32>
    %345 = vector.extract_strided_slice %344 {offsets = [0, 0], sizes = [8, 32], strides = [1, 1]} : vector<8x128xf32> to vector<8x32xf32>
    %346 = vector.extract_strided_slice %344 {offsets = [0, 32], sizes = [8, 32], strides = [1, 1]} : vector<8x128xf32> to vector<8x32xf32>
    %347 = vector.extract_strided_slice %344 {offsets = [0, 64], sizes = [8, 32], strides = [1, 1]} : vector<8x128xf32> to vector<8x32xf32>
    %cst_84 = arith.constant 2.000000e+00 : f32
    %348 = vector.broadcast %cst_84 : f32 to vector<8x32xf32>
    %349 = arith.mulf %348, %347 : vector<8x32xf32>
    %cst_85 = arith.constant 1.000000e+00 : f32
    %350 = vector.broadcast %cst_85 : f32 to vector<8x32xf32>
    %351 = arith.subf %349, %350 : vector<8x32xf32>
    %352 = vector.extract_strided_slice %344 {offsets = [0, 96], sizes = [8, 32], strides = [1, 1]} : vector<8x128xf32> to vector<8x32xf32>
    %353 = arith.mulf %346, %335 : vector<8x32xf32>
    %354 = arith.mulf %345, %351 : vector<8x32xf32>
    %355 = arith.addf %353, %354 : vector<8x32xf32>
    %356 = math.tanh %355 : vector<8x32xf32>
    %357 = arith.mulf %352, %356 : vector<8x32xf32>
    %cst_86 = arith.constant dense<0.000000e+00> : vector<8x128xf32>
    %358 = tpu.matmul %357, %70, %cst_86 {dimension_numbers = #tpu.dot_dimension_numbers<[1], [0], [0], [1], [0, 0, 1, 1], [], []>} : vector<8x32xf32>, vector<32x128xf32>, vector<8x128xf32> -> vector<8x128xf32>
    %359 = arith.addf %77, %358 : vector<8x128xf32>
    %360 = arith.negf %359 : vector<8x128xf32>
    %361 = math.exp %360 : vector<8x128xf32>
    %cst_87 = arith.constant 1.000000e+00 : f32
    %362 = vector.broadcast %cst_87 : f32 to vector<8x128xf32>
    %363 = arith.addf %362, %361 : vector<8x128xf32>
    %364 = arith.divf %362, %363 : vector<8x128xf32>
    %365 = vector.extract_strided_slice %364 {offsets = [0, 0], sizes = [8, 32], strides = [1, 1]} : vector<8x128xf32> to vector<8x32xf32>
    %366 = vector.extract_strided_slice %364 {offsets = [0, 32], sizes = [8, 32], strides = [1, 1]} : vector<8x128xf32> to vector<8x32xf32>
    %367 = vector.extract_strided_slice %364 {offsets = [0, 64], sizes = [8, 32], strides = [1, 1]} : vector<8x128xf32> to vector<8x32xf32>
    %cst_88 = arith.constant 2.000000e+00 : f32
    %368 = vector.broadcast %cst_88 : f32 to vector<8x32xf32>
    %369 = arith.mulf %368, %367 : vector<8x32xf32>
    %cst_89 = arith.constant 1.000000e+00 : f32
    %370 = vector.broadcast %cst_89 : f32 to vector<8x32xf32>
    %371 = arith.subf %369, %370 : vector<8x32xf32>
    %372 = vector.extract_strided_slice %364 {offsets = [0, 96], sizes = [8, 32], strides = [1, 1]} : vector<8x128xf32> to vector<8x32xf32>
    %373 = arith.mulf %366, %355 : vector<8x32xf32>
    %374 = arith.mulf %365, %371 : vector<8x32xf32>
    %375 = arith.addf %373, %374 : vector<8x32xf32>
    %376 = math.tanh %375 : vector<8x32xf32>
    %377 = arith.mulf %372, %376 : vector<8x32xf32>
    %cst_90 = arith.constant dense<0.000000e+00> : vector<8x128xf32>
    %378 = tpu.matmul %377, %70, %cst_90 {dimension_numbers = #tpu.dot_dimension_numbers<[1], [0], [0], [1], [0, 0, 1, 1], [], []>} : vector<8x32xf32>, vector<32x128xf32>, vector<8x128xf32> -> vector<8x128xf32>
    %379 = arith.addf %77, %378 : vector<8x128xf32>
    %380 = arith.negf %379 : vector<8x128xf32>
    %381 = math.exp %380 : vector<8x128xf32>
    %cst_91 = arith.constant 1.000000e+00 : f32
    %382 = vector.broadcast %cst_91 : f32 to vector<8x128xf32>
    %383 = arith.addf %382, %381 : vector<8x128xf32>
    %384 = arith.divf %382, %383 : vector<8x128xf32>
    %385 = vector.extract_strided_slice %384 {offsets = [0, 0], sizes = [8, 32], strides = [1, 1]} : vector<8x128xf32> to vector<8x32xf32>
    %386 = vector.extract_strided_slice %384 {offsets = [0, 32], sizes = [8, 32], strides = [1, 1]} : vector<8x128xf32> to vector<8x32xf32>
    %387 = vector.extract_strided_slice %384 {offsets = [0, 64], sizes = [8, 32], strides = [1, 1]} : vector<8x128xf32> to vector<8x32xf32>
    %cst_92 = arith.constant 2.000000e+00 : f32
    %388 = vector.broadcast %cst_92 : f32 to vector<8x32xf32>
    %389 = arith.mulf %388, %387 : vector<8x32xf32>
    %cst_93 = arith.constant 1.000000e+00 : f32
    %390 = vector.broadcast %cst_93 : f32 to vector<8x32xf32>
    %391 = arith.subf %389, %390 : vector<8x32xf32>
    %392 = vector.extract_strided_slice %384 {offsets = [0, 96], sizes = [8, 32], strides = [1, 1]} : vector<8x128xf32> to vector<8x32xf32>
    %393 = arith.mulf %386, %375 : vector<8x32xf32>
    %394 = arith.mulf %385, %391 : vector<8x32xf32>
    %395 = arith.addf %393, %394 : vector<8x32xf32>
    %396 = math.tanh %395 : vector<8x32xf32>
    %397 = arith.mulf %392, %396 : vector<8x32xf32>
    %398 = tpu.concatenate %97, %117, %137, %157, %177, %197, %217, %237, %257, %277, %297, %317, %337, %357, %377, %397 in 0 : vector<8x32xf32>, vector<8x32xf32>, vector<8x32xf32>, vector<8x32xf32>, vector<8x32xf32>, vector<8x32xf32>, vector<8x32xf32>, vector<8x32xf32>, vector<8x32xf32>, vector<8x32xf32>, vector<8x32xf32>, vector<8x32xf32>, vector<8x32xf32>, vector<8x32xf32>, vector<8x32xf32>, vector<8x32xf32> -> vector<128x32xf32>
    %cst_94 = arith.constant dense<0.000000e+00> : vector<128x256xf32>
    %399 = tpu.matmul %398, %71, %cst_94 {dimension_numbers = #tpu.dot_dimension_numbers<[1], [0], [0], [1], [0, 0, 1, 1], [], []>} : vector<128x32xf32>, vector<32x256xf32>, vector<128x256xf32> -> vector<128x256xf32>
    %400 = vector.extract_strided_slice %399 {offsets = [0, 0], sizes = [8, 128], strides = [1, 1]} : vector<128x256xf32> to vector<8x128xf32>
    %401 = vector.extract_strided_slice %399 {offsets = [120, 128], sizes = [8, 128], strides = [1, 1]} : vector<128x256xf32> to vector<8x128xf32>
    %402 = arith.addf %400, %401 : vector<8x128xf32>
    %403 = vector.broadcast %3 : vector<1x128xf32> to vector<8x128xf32>
    %404 = arith.addf %402, %403 : vector<8x128xf32>
    %cst_95 = arith.constant dense<0.000000e+00> : vector<8x128xf32>
    %405 = tpu.matmul %74, %72, %cst_95 {dimension_numbers = #tpu.dot_dimension_numbers<[1], [0], [0], [1], [0, 0, 1, 1], [], []>} : vector<8x32xf32>, vector<32x128xf32>, vector<8x128xf32> -> vector<8x128xf32>
    %406 = arith.addf %404, %405 : vector<8x128xf32>
    %407 = arith.negf %406 : vector<8x128xf32>
    %408 = math.exp %407 : vector<8x128xf32>
    %cst_96 = arith.constant 1.000000e+00 : f32
    %409 = vector.broadcast %cst_96 : f32 to vector<8x128xf32>
    %410 = arith.addf %409, %408 : vector<8x128xf32>
    %411 = arith.divf %409, %410 : vector<8x128xf32>
    %412 = vector.extract_strided_slice %411 {offsets = [0, 0], sizes = [8, 32], strides = [1, 1]} : vector<8x128xf32> to vector<8x32xf32>
    %413 = vector.extract_strided_slice %411 {offsets = [0, 32], sizes = [8, 32], strides = [1, 1]} : vector<8x128xf32> to vector<8x32xf32>
    %414 = vector.extract_strided_slice %411 {offsets = [0, 64], sizes = [8, 32], strides = [1, 1]} : vector<8x128xf32> to vector<8x32xf32>
    %cst_97 = arith.constant 2.000000e+00 : f32
    %415 = vector.broadcast %cst_97 : f32 to vector<8x32xf32>
    %416 = arith.mulf %415, %414 : vector<8x32xf32>
    %cst_98 = arith.constant 1.000000e+00 : f32
    %417 = vector.broadcast %cst_98 : f32 to vector<8x32xf32>
    %418 = arith.subf %416, %417 : vector<8x32xf32>
    %419 = vector.extract_strided_slice %411 {offsets = [0, 96], sizes = [8, 32], strides = [1, 1]} : vector<8x128xf32> to vector<8x32xf32>
    %420 = arith.mulf %413, %74 : vector<8x32xf32>
    %421 = arith.mulf %412, %418 : vector<8x32xf32>
    %422 = arith.addf %420, %421 : vector<8x32xf32>
    %423 = math.tanh %422 : vector<8x32xf32>
    %424 = arith.mulf %419, %423 : vector<8x32xf32>
    %425 = vector.extract_strided_slice %399 {offsets = [8, 0], sizes = [8, 128], strides = [1, 1]} : vector<128x256xf32> to vector<8x128xf32>
    %426 = vector.extract_strided_slice %399 {offsets = [112, 128], sizes = [8, 128], strides = [1, 1]} : vector<128x256xf32> to vector<8x128xf32>
    %427 = arith.addf %425, %426 : vector<8x128xf32>
    %428 = vector.broadcast %3 : vector<1x128xf32> to vector<8x128xf32>
    %429 = arith.addf %427, %428 : vector<8x128xf32>
    %cst_99 = arith.constant dense<0.000000e+00> : vector<8x128xf32>
    %430 = tpu.matmul %424, %72, %cst_99 {dimension_numbers = #tpu.dot_dimension_numbers<[1], [0], [0], [1], [0, 0, 1, 1], [], []>} : vector<8x32xf32>, vector<32x128xf32>, vector<8x128xf32> -> vector<8x128xf32>
    %431 = arith.addf %429, %430 : vector<8x128xf32>
    %432 = arith.negf %431 : vector<8x128xf32>
    %433 = math.exp %432 : vector<8x128xf32>
    %cst_100 = arith.constant 1.000000e+00 : f32
    %434 = vector.broadcast %cst_100 : f32 to vector<8x128xf32>
    %435 = arith.addf %434, %433 : vector<8x128xf32>
    %436 = arith.divf %434, %435 : vector<8x128xf32>
    %437 = vector.extract_strided_slice %436 {offsets = [0, 0], sizes = [8, 32], strides = [1, 1]} : vector<8x128xf32> to vector<8x32xf32>
    %438 = vector.extract_strided_slice %436 {offsets = [0, 32], sizes = [8, 32], strides = [1, 1]} : vector<8x128xf32> to vector<8x32xf32>
    %439 = vector.extract_strided_slice %436 {offsets = [0, 64], sizes = [8, 32], strides = [1, 1]} : vector<8x128xf32> to vector<8x32xf32>
    %cst_101 = arith.constant 2.000000e+00 : f32
    %440 = vector.broadcast %cst_101 : f32 to vector<8x32xf32>
    %441 = arith.mulf %440, %439 : vector<8x32xf32>
    %cst_102 = arith.constant 1.000000e+00 : f32
    %442 = vector.broadcast %cst_102 : f32 to vector<8x32xf32>
    %443 = arith.subf %441, %442 : vector<8x32xf32>
    %444 = vector.extract_strided_slice %436 {offsets = [0, 96], sizes = [8, 32], strides = [1, 1]} : vector<8x128xf32> to vector<8x32xf32>
    %445 = arith.mulf %438, %422 : vector<8x32xf32>
    %446 = arith.mulf %437, %443 : vector<8x32xf32>
    %447 = arith.addf %445, %446 : vector<8x32xf32>
    %448 = math.tanh %447 : vector<8x32xf32>
    %449 = arith.mulf %444, %448 : vector<8x32xf32>
    %450 = vector.extract_strided_slice %399 {offsets = [16, 0], sizes = [8, 128], strides = [1, 1]} : vector<128x256xf32> to vector<8x128xf32>
    %451 = vector.extract_strided_slice %399 {offsets = [104, 128], sizes = [8, 128], strides = [1, 1]} : vector<128x256xf32> to vector<8x128xf32>
    %452 = arith.addf %450, %451 : vector<8x128xf32>
    %453 = vector.broadcast %3 : vector<1x128xf32> to vector<8x128xf32>
    %454 = arith.addf %452, %453 : vector<8x128xf32>
    %cst_103 = arith.constant dense<0.000000e+00> : vector<8x128xf32>
    %455 = tpu.matmul %449, %72, %cst_103 {dimension_numbers = #tpu.dot_dimension_numbers<[1], [0], [0], [1], [0, 0, 1, 1], [], []>} : vector<8x32xf32>, vector<32x128xf32>, vector<8x128xf32> -> vector<8x128xf32>
    %456 = arith.addf %454, %455 : vector<8x128xf32>
    %457 = arith.negf %456 : vector<8x128xf32>
    %458 = math.exp %457 : vector<8x128xf32>
    %cst_104 = arith.constant 1.000000e+00 : f32
    %459 = vector.broadcast %cst_104 : f32 to vector<8x128xf32>
    %460 = arith.addf %459, %458 : vector<8x128xf32>
    %461 = arith.divf %459, %460 : vector<8x128xf32>
    %462 = vector.extract_strided_slice %461 {offsets = [0, 0], sizes = [8, 32], strides = [1, 1]} : vector<8x128xf32> to vector<8x32xf32>
    %463 = vector.extract_strided_slice %461 {offsets = [0, 32], sizes = [8, 32], strides = [1, 1]} : vector<8x128xf32> to vector<8x32xf32>
    %464 = vector.extract_strided_slice %461 {offsets = [0, 64], sizes = [8, 32], strides = [1, 1]} : vector<8x128xf32> to vector<8x32xf32>
    %cst_105 = arith.constant 2.000000e+00 : f32
    %465 = vector.broadcast %cst_105 : f32 to vector<8x32xf32>
    %466 = arith.mulf %465, %464 : vector<8x32xf32>
    %cst_106 = arith.constant 1.000000e+00 : f32
    %467 = vector.broadcast %cst_106 : f32 to vector<8x32xf32>
    %468 = arith.subf %466, %467 : vector<8x32xf32>
    %469 = vector.extract_strided_slice %461 {offsets = [0, 96], sizes = [8, 32], strides = [1, 1]} : vector<8x128xf32> to vector<8x32xf32>
    %470 = arith.mulf %463, %447 : vector<8x32xf32>
    %471 = arith.mulf %462, %468 : vector<8x32xf32>
    %472 = arith.addf %470, %471 : vector<8x32xf32>
    %473 = math.tanh %472 : vector<8x32xf32>
    %474 = arith.mulf %469, %473 : vector<8x32xf32>
    %475 = vector.extract_strided_slice %399 {offsets = [24, 0], sizes = [8, 128], strides = [1, 1]} : vector<128x256xf32> to vector<8x128xf32>
    %476 = vector.extract_strided_slice %399 {offsets = [96, 128], sizes = [8, 128], strides = [1, 1]} : vector<128x256xf32> to vector<8x128xf32>
    %477 = arith.addf %475, %476 : vector<8x128xf32>
    %478 = vector.broadcast %3 : vector<1x128xf32> to vector<8x128xf32>
    %479 = arith.addf %477, %478 : vector<8x128xf32>
    %cst_107 = arith.constant dense<0.000000e+00> : vector<8x128xf32>
    %480 = tpu.matmul %474, %72, %cst_107 {dimension_numbers = #tpu.dot_dimension_numbers<[1], [0], [0], [1], [0, 0, 1, 1], [], []>} : vector<8x32xf32>, vector<32x128xf32>, vector<8x128xf32> -> vector<8x128xf32>
    %481 = arith.addf %479, %480 : vector<8x128xf32>
    %482 = arith.negf %481 : vector<8x128xf32>
    %483 = math.exp %482 : vector<8x128xf32>
    %cst_108 = arith.constant 1.000000e+00 : f32
    %484 = vector.broadcast %cst_108 : f32 to vector<8x128xf32>
    %485 = arith.addf %484, %483 : vector<8x128xf32>
    %486 = arith.divf %484, %485 : vector<8x128xf32>
    %487 = vector.extract_strided_slice %486 {offsets = [0, 0], sizes = [8, 32], strides = [1, 1]} : vector<8x128xf32> to vector<8x32xf32>
    %488 = vector.extract_strided_slice %486 {offsets = [0, 32], sizes = [8, 32], strides = [1, 1]} : vector<8x128xf32> to vector<8x32xf32>
    %489 = vector.extract_strided_slice %486 {offsets = [0, 64], sizes = [8, 32], strides = [1, 1]} : vector<8x128xf32> to vector<8x32xf32>
    %cst_109 = arith.constant 2.000000e+00 : f32
    %490 = vector.broadcast %cst_109 : f32 to vector<8x32xf32>
    %491 = arith.mulf %490, %489 : vector<8x32xf32>
    %cst_110 = arith.constant 1.000000e+00 : f32
    %492 = vector.broadcast %cst_110 : f32 to vector<8x32xf32>
    %493 = arith.subf %491, %492 : vector<8x32xf32>
    %494 = vector.extract_strided_slice %486 {offsets = [0, 96], sizes = [8, 32], strides = [1, 1]} : vector<8x128xf32> to vector<8x32xf32>
    %495 = arith.mulf %488, %472 : vector<8x32xf32>
    %496 = arith.mulf %487, %493 : vector<8x32xf32>
    %497 = arith.addf %495, %496 : vector<8x32xf32>
    %498 = math.tanh %497 : vector<8x32xf32>
    %499 = arith.mulf %494, %498 : vector<8x32xf32>
    %500 = vector.extract_strided_slice %399 {offsets = [32, 0], sizes = [8, 128], strides = [1, 1]} : vector<128x256xf32> to vector<8x128xf32>
    %501 = vector.extract_strided_slice %399 {offsets = [88, 128], sizes = [8, 128], strides = [1, 1]} : vector<128x256xf32> to vector<8x128xf32>
    %502 = arith.addf %500, %501 : vector<8x128xf32>
    %503 = vector.broadcast %3 : vector<1x128xf32> to vector<8x128xf32>
    %504 = arith.addf %502, %503 : vector<8x128xf32>
    %cst_111 = arith.constant dense<0.000000e+00> : vector<8x128xf32>
    %505 = tpu.matmul %499, %72, %cst_111 {dimension_numbers = #tpu.dot_dimension_numbers<[1], [0], [0], [1], [0, 0, 1, 1], [], []>} : vector<8x32xf32>, vector<32x128xf32>, vector<8x128xf32> -> vector<8x128xf32>
    %506 = arith.addf %504, %505 : vector<8x128xf32>
    %507 = arith.negf %506 : vector<8x128xf32>
    %508 = math.exp %507 : vector<8x128xf32>
    %cst_112 = arith.constant 1.000000e+00 : f32
    %509 = vector.broadcast %cst_112 : f32 to vector<8x128xf32>
    %510 = arith.addf %509, %508 : vector<8x128xf32>
    %511 = arith.divf %509, %510 : vector<8x128xf32>
    %512 = vector.extract_strided_slice %511 {offsets = [0, 0], sizes = [8, 32], strides = [1, 1]} : vector<8x128xf32> to vector<8x32xf32>
    %513 = vector.extract_strided_slice %511 {offsets = [0, 32], sizes = [8, 32], strides = [1, 1]} : vector<8x128xf32> to vector<8x32xf32>
    %514 = vector.extract_strided_slice %511 {offsets = [0, 64], sizes = [8, 32], strides = [1, 1]} : vector<8x128xf32> to vector<8x32xf32>
    %cst_113 = arith.constant 2.000000e+00 : f32
    %515 = vector.broadcast %cst_113 : f32 to vector<8x32xf32>
    %516 = arith.mulf %515, %514 : vector<8x32xf32>
    %cst_114 = arith.constant 1.000000e+00 : f32
    %517 = vector.broadcast %cst_114 : f32 to vector<8x32xf32>
    %518 = arith.subf %516, %517 : vector<8x32xf32>
    %519 = vector.extract_strided_slice %511 {offsets = [0, 96], sizes = [8, 32], strides = [1, 1]} : vector<8x128xf32> to vector<8x32xf32>
    %520 = arith.mulf %513, %497 : vector<8x32xf32>
    %521 = arith.mulf %512, %518 : vector<8x32xf32>
    %522 = arith.addf %520, %521 : vector<8x32xf32>
    %523 = math.tanh %522 : vector<8x32xf32>
    %524 = arith.mulf %519, %523 : vector<8x32xf32>
    %525 = vector.extract_strided_slice %399 {offsets = [40, 0], sizes = [8, 128], strides = [1, 1]} : vector<128x256xf32> to vector<8x128xf32>
    %526 = vector.extract_strided_slice %399 {offsets = [80, 128], sizes = [8, 128], strides = [1, 1]} : vector<128x256xf32> to vector<8x128xf32>
    %527 = arith.addf %525, %526 : vector<8x128xf32>
    %528 = vector.broadcast %3 : vector<1x128xf32> to vector<8x128xf32>
    %529 = arith.addf %527, %528 : vector<8x128xf32>
    %cst_115 = arith.constant dense<0.000000e+00> : vector<8x128xf32>
    %530 = tpu.matmul %524, %72, %cst_115 {dimension_numbers = #tpu.dot_dimension_numbers<[1], [0], [0], [1], [0, 0, 1, 1], [], []>} : vector<8x32xf32>, vector<32x128xf32>, vector<8x128xf32> -> vector<8x128xf32>
    %531 = arith.addf %529, %530 : vector<8x128xf32>
    %532 = arith.negf %531 : vector<8x128xf32>
    %533 = math.exp %532 : vector<8x128xf32>
    %cst_116 = arith.constant 1.000000e+00 : f32
    %534 = vector.broadcast %cst_116 : f32 to vector<8x128xf32>
    %535 = arith.addf %534, %533 : vector<8x128xf32>
    %536 = arith.divf %534, %535 : vector<8x128xf32>
    %537 = vector.extract_strided_slice %536 {offsets = [0, 0], sizes = [8, 32], strides = [1, 1]} : vector<8x128xf32> to vector<8x32xf32>
    %538 = vector.extract_strided_slice %536 {offsets = [0, 32], sizes = [8, 32], strides = [1, 1]} : vector<8x128xf32> to vector<8x32xf32>
    %539 = vector.extract_strided_slice %536 {offsets = [0, 64], sizes = [8, 32], strides = [1, 1]} : vector<8x128xf32> to vector<8x32xf32>
    %cst_117 = arith.constant 2.000000e+00 : f32
    %540 = vector.broadcast %cst_117 : f32 to vector<8x32xf32>
    %541 = arith.mulf %540, %539 : vector<8x32xf32>
    %cst_118 = arith.constant 1.000000e+00 : f32
    %542 = vector.broadcast %cst_118 : f32 to vector<8x32xf32>
    %543 = arith.subf %541, %542 : vector<8x32xf32>
    %544 = vector.extract_strided_slice %536 {offsets = [0, 96], sizes = [8, 32], strides = [1, 1]} : vector<8x128xf32> to vector<8x32xf32>
    %545 = arith.mulf %538, %522 : vector<8x32xf32>
    %546 = arith.mulf %537, %543 : vector<8x32xf32>
    %547 = arith.addf %545, %546 : vector<8x32xf32>
    %548 = math.tanh %547 : vector<8x32xf32>
    %549 = arith.mulf %544, %548 : vector<8x32xf32>
    %550 = vector.extract_strided_slice %399 {offsets = [48, 0], sizes = [8, 128], strides = [1, 1]} : vector<128x256xf32> to vector<8x128xf32>
    %551 = vector.extract_strided_slice %399 {offsets = [72, 128], sizes = [8, 128], strides = [1, 1]} : vector<128x256xf32> to vector<8x128xf32>
    %552 = arith.addf %550, %551 : vector<8x128xf32>
    %553 = vector.broadcast %3 : vector<1x128xf32> to vector<8x128xf32>
    %554 = arith.addf %552, %553 : vector<8x128xf32>
    %cst_119 = arith.constant dense<0.000000e+00> : vector<8x128xf32>
    %555 = tpu.matmul %549, %72, %cst_119 {dimension_numbers = #tpu.dot_dimension_numbers<[1], [0], [0], [1], [0, 0, 1, 1], [], []>} : vector<8x32xf32>, vector<32x128xf32>, vector<8x128xf32> -> vector<8x128xf32>
    %556 = arith.addf %554, %555 : vector<8x128xf32>
    %557 = arith.negf %556 : vector<8x128xf32>
    %558 = math.exp %557 : vector<8x128xf32>
    %cst_120 = arith.constant 1.000000e+00 : f32
    %559 = vector.broadcast %cst_120 : f32 to vector<8x128xf32>
    %560 = arith.addf %559, %558 : vector<8x128xf32>
    %561 = arith.divf %559, %560 : vector<8x128xf32>
    %562 = vector.extract_strided_slice %561 {offsets = [0, 0], sizes = [8, 32], strides = [1, 1]} : vector<8x128xf32> to vector<8x32xf32>
    %563 = vector.extract_strided_slice %561 {offsets = [0, 32], sizes = [8, 32], strides = [1, 1]} : vector<8x128xf32> to vector<8x32xf32>
    %564 = vector.extract_strided_slice %561 {offsets = [0, 64], sizes = [8, 32], strides = [1, 1]} : vector<8x128xf32> to vector<8x32xf32>
    %cst_121 = arith.constant 2.000000e+00 : f32
    %565 = vector.broadcast %cst_121 : f32 to vector<8x32xf32>
    %566 = arith.mulf %565, %564 : vector<8x32xf32>
    %cst_122 = arith.constant 1.000000e+00 : f32
    %567 = vector.broadcast %cst_122 : f32 to vector<8x32xf32>
    %568 = arith.subf %566, %567 : vector<8x32xf32>
    %569 = vector.extract_strided_slice %561 {offsets = [0, 96], sizes = [8, 32], strides = [1, 1]} : vector<8x128xf32> to vector<8x32xf32>
    %570 = arith.mulf %563, %547 : vector<8x32xf32>
    %571 = arith.mulf %562, %568 : vector<8x32xf32>
    %572 = arith.addf %570, %571 : vector<8x32xf32>
    %573 = math.tanh %572 : vector<8x32xf32>
    %574 = arith.mulf %569, %573 : vector<8x32xf32>
    %575 = vector.extract_strided_slice %399 {offsets = [56, 0], sizes = [8, 128], strides = [1, 1]} : vector<128x256xf32> to vector<8x128xf32>
    %576 = vector.extract_strided_slice %399 {offsets = [64, 128], sizes = [8, 128], strides = [1, 1]} : vector<128x256xf32> to vector<8x128xf32>
    %577 = arith.addf %575, %576 : vector<8x128xf32>
    %578 = vector.broadcast %3 : vector<1x128xf32> to vector<8x128xf32>
    %579 = arith.addf %577, %578 : vector<8x128xf32>
    %cst_123 = arith.constant dense<0.000000e+00> : vector<8x128xf32>
    %580 = tpu.matmul %574, %72, %cst_123 {dimension_numbers = #tpu.dot_dimension_numbers<[1], [0], [0], [1], [0, 0, 1, 1], [], []>} : vector<8x32xf32>, vector<32x128xf32>, vector<8x128xf32> -> vector<8x128xf32>
    %581 = arith.addf %579, %580 : vector<8x128xf32>
    %582 = arith.negf %581 : vector<8x128xf32>
    %583 = math.exp %582 : vector<8x128xf32>
    %cst_124 = arith.constant 1.000000e+00 : f32
    %584 = vector.broadcast %cst_124 : f32 to vector<8x128xf32>
    %585 = arith.addf %584, %583 : vector<8x128xf32>
    %586 = arith.divf %584, %585 : vector<8x128xf32>
    %587 = vector.extract_strided_slice %586 {offsets = [0, 0], sizes = [8, 32], strides = [1, 1]} : vector<8x128xf32> to vector<8x32xf32>
    %588 = vector.extract_strided_slice %586 {offsets = [0, 32], sizes = [8, 32], strides = [1, 1]} : vector<8x128xf32> to vector<8x32xf32>
    %589 = vector.extract_strided_slice %586 {offsets = [0, 64], sizes = [8, 32], strides = [1, 1]} : vector<8x128xf32> to vector<8x32xf32>
    %cst_125 = arith.constant 2.000000e+00 : f32
    %590 = vector.broadcast %cst_125 : f32 to vector<8x32xf32>
    %591 = arith.mulf %590, %589 : vector<8x32xf32>
    %cst_126 = arith.constant 1.000000e+00 : f32
    %592 = vector.broadcast %cst_126 : f32 to vector<8x32xf32>
    %593 = arith.subf %591, %592 : vector<8x32xf32>
    %594 = vector.extract_strided_slice %586 {offsets = [0, 96], sizes = [8, 32], strides = [1, 1]} : vector<8x128xf32> to vector<8x32xf32>
    %595 = arith.mulf %588, %572 : vector<8x32xf32>
    %596 = arith.mulf %587, %593 : vector<8x32xf32>
    %597 = arith.addf %595, %596 : vector<8x32xf32>
    %598 = math.tanh %597 : vector<8x32xf32>
    %599 = arith.mulf %594, %598 : vector<8x32xf32>
    %600 = vector.extract_strided_slice %399 {offsets = [64, 0], sizes = [8, 128], strides = [1, 1]} : vector<128x256xf32> to vector<8x128xf32>
    %601 = vector.extract_strided_slice %399 {offsets = [56, 128], sizes = [8, 128], strides = [1, 1]} : vector<128x256xf32> to vector<8x128xf32>
    %602 = arith.addf %600, %601 : vector<8x128xf32>
    %603 = vector.broadcast %3 : vector<1x128xf32> to vector<8x128xf32>
    %604 = arith.addf %602, %603 : vector<8x128xf32>
    %cst_127 = arith.constant dense<0.000000e+00> : vector<8x128xf32>
    %605 = tpu.matmul %599, %72, %cst_127 {dimension_numbers = #tpu.dot_dimension_numbers<[1], [0], [0], [1], [0, 0, 1, 1], [], []>} : vector<8x32xf32>, vector<32x128xf32>, vector<8x128xf32> -> vector<8x128xf32>
    %606 = arith.addf %604, %605 : vector<8x128xf32>
    %607 = arith.negf %606 : vector<8x128xf32>
    %608 = math.exp %607 : vector<8x128xf32>
    %cst_128 = arith.constant 1.000000e+00 : f32
    %609 = vector.broadcast %cst_128 : f32 to vector<8x128xf32>
    %610 = arith.addf %609, %608 : vector<8x128xf32>
    %611 = arith.divf %609, %610 : vector<8x128xf32>
    %612 = vector.extract_strided_slice %611 {offsets = [0, 0], sizes = [8, 32], strides = [1, 1]} : vector<8x128xf32> to vector<8x32xf32>
    %613 = vector.extract_strided_slice %611 {offsets = [0, 32], sizes = [8, 32], strides = [1, 1]} : vector<8x128xf32> to vector<8x32xf32>
    %614 = vector.extract_strided_slice %611 {offsets = [0, 64], sizes = [8, 32], strides = [1, 1]} : vector<8x128xf32> to vector<8x32xf32>
    %cst_129 = arith.constant 2.000000e+00 : f32
    %615 = vector.broadcast %cst_129 : f32 to vector<8x32xf32>
    %616 = arith.mulf %615, %614 : vector<8x32xf32>
    %cst_130 = arith.constant 1.000000e+00 : f32
    %617 = vector.broadcast %cst_130 : f32 to vector<8x32xf32>
    %618 = arith.subf %616, %617 : vector<8x32xf32>
    %619 = vector.extract_strided_slice %611 {offsets = [0, 96], sizes = [8, 32], strides = [1, 1]} : vector<8x128xf32> to vector<8x32xf32>
    %620 = arith.mulf %613, %597 : vector<8x32xf32>
    %621 = arith.mulf %612, %618 : vector<8x32xf32>
    %622 = arith.addf %620, %621 : vector<8x32xf32>
    %623 = math.tanh %622 : vector<8x32xf32>
    %624 = arith.mulf %619, %623 : vector<8x32xf32>
    %625 = vector.extract_strided_slice %399 {offsets = [72, 0], sizes = [8, 128], strides = [1, 1]} : vector<128x256xf32> to vector<8x128xf32>
    %626 = vector.extract_strided_slice %399 {offsets = [48, 128], sizes = [8, 128], strides = [1, 1]} : vector<128x256xf32> to vector<8x128xf32>
    %627 = arith.addf %625, %626 : vector<8x128xf32>
    %628 = vector.broadcast %3 : vector<1x128xf32> to vector<8x128xf32>
    %629 = arith.addf %627, %628 : vector<8x128xf32>
    %cst_131 = arith.constant dense<0.000000e+00> : vector<8x128xf32>
    %630 = tpu.matmul %624, %72, %cst_131 {dimension_numbers = #tpu.dot_dimension_numbers<[1], [0], [0], [1], [0, 0, 1, 1], [], []>} : vector<8x32xf32>, vector<32x128xf32>, vector<8x128xf32> -> vector<8x128xf32>
    %631 = arith.addf %629, %630 : vector<8x128xf32>
    %632 = arith.negf %631 : vector<8x128xf32>
    %633 = math.exp %632 : vector<8x128xf32>
    %cst_132 = arith.constant 1.000000e+00 : f32
    %634 = vector.broadcast %cst_132 : f32 to vector<8x128xf32>
    %635 = arith.addf %634, %633 : vector<8x128xf32>
    %636 = arith.divf %634, %635 : vector<8x128xf32>
    %637 = vector.extract_strided_slice %636 {offsets = [0, 0], sizes = [8, 32], strides = [1, 1]} : vector<8x128xf32> to vector<8x32xf32>
    %638 = vector.extract_strided_slice %636 {offsets = [0, 32], sizes = [8, 32], strides = [1, 1]} : vector<8x128xf32> to vector<8x32xf32>
    %639 = vector.extract_strided_slice %636 {offsets = [0, 64], sizes = [8, 32], strides = [1, 1]} : vector<8x128xf32> to vector<8x32xf32>
    %cst_133 = arith.constant 2.000000e+00 : f32
    %640 = vector.broadcast %cst_133 : f32 to vector<8x32xf32>
    %641 = arith.mulf %640, %639 : vector<8x32xf32>
    %cst_134 = arith.constant 1.000000e+00 : f32
    %642 = vector.broadcast %cst_134 : f32 to vector<8x32xf32>
    %643 = arith.subf %641, %642 : vector<8x32xf32>
    %644 = vector.extract_strided_slice %636 {offsets = [0, 96], sizes = [8, 32], strides = [1, 1]} : vector<8x128xf32> to vector<8x32xf32>
    %645 = arith.mulf %638, %622 : vector<8x32xf32>
    %646 = arith.mulf %637, %643 : vector<8x32xf32>
    %647 = arith.addf %645, %646 : vector<8x32xf32>
    %648 = math.tanh %647 : vector<8x32xf32>
    %649 = arith.mulf %644, %648 : vector<8x32xf32>
    %650 = vector.extract_strided_slice %399 {offsets = [80, 0], sizes = [8, 128], strides = [1, 1]} : vector<128x256xf32> to vector<8x128xf32>
    %651 = vector.extract_strided_slice %399 {offsets = [40, 128], sizes = [8, 128], strides = [1, 1]} : vector<128x256xf32> to vector<8x128xf32>
    %652 = arith.addf %650, %651 : vector<8x128xf32>
    %653 = vector.broadcast %3 : vector<1x128xf32> to vector<8x128xf32>
    %654 = arith.addf %652, %653 : vector<8x128xf32>
    %cst_135 = arith.constant dense<0.000000e+00> : vector<8x128xf32>
    %655 = tpu.matmul %649, %72, %cst_135 {dimension_numbers = #tpu.dot_dimension_numbers<[1], [0], [0], [1], [0, 0, 1, 1], [], []>} : vector<8x32xf32>, vector<32x128xf32>, vector<8x128xf32> -> vector<8x128xf32>
    %656 = arith.addf %654, %655 : vector<8x128xf32>
    %657 = arith.negf %656 : vector<8x128xf32>
    %658 = math.exp %657 : vector<8x128xf32>
    %cst_136 = arith.constant 1.000000e+00 : f32
    %659 = vector.broadcast %cst_136 : f32 to vector<8x128xf32>
    %660 = arith.addf %659, %658 : vector<8x128xf32>
    %661 = arith.divf %659, %660 : vector<8x128xf32>
    %662 = vector.extract_strided_slice %661 {offsets = [0, 0], sizes = [8, 32], strides = [1, 1]} : vector<8x128xf32> to vector<8x32xf32>
    %663 = vector.extract_strided_slice %661 {offsets = [0, 32], sizes = [8, 32], strides = [1, 1]} : vector<8x128xf32> to vector<8x32xf32>
    %664 = vector.extract_strided_slice %661 {offsets = [0, 64], sizes = [8, 32], strides = [1, 1]} : vector<8x128xf32> to vector<8x32xf32>
    %cst_137 = arith.constant 2.000000e+00 : f32
    %665 = vector.broadcast %cst_137 : f32 to vector<8x32xf32>
    %666 = arith.mulf %665, %664 : vector<8x32xf32>
    %cst_138 = arith.constant 1.000000e+00 : f32
    %667 = vector.broadcast %cst_138 : f32 to vector<8x32xf32>
    %668 = arith.subf %666, %667 : vector<8x32xf32>
    %669 = vector.extract_strided_slice %661 {offsets = [0, 96], sizes = [8, 32], strides = [1, 1]} : vector<8x128xf32> to vector<8x32xf32>
    %670 = arith.mulf %663, %647 : vector<8x32xf32>
    %671 = arith.mulf %662, %668 : vector<8x32xf32>
    %672 = arith.addf %670, %671 : vector<8x32xf32>
    %673 = math.tanh %672 : vector<8x32xf32>
    %674 = arith.mulf %669, %673 : vector<8x32xf32>
    %675 = vector.extract_strided_slice %399 {offsets = [88, 0], sizes = [8, 128], strides = [1, 1]} : vector<128x256xf32> to vector<8x128xf32>
    %676 = vector.extract_strided_slice %399 {offsets = [32, 128], sizes = [8, 128], strides = [1, 1]} : vector<128x256xf32> to vector<8x128xf32>
    %677 = arith.addf %675, %676 : vector<8x128xf32>
    %678 = vector.broadcast %3 : vector<1x128xf32> to vector<8x128xf32>
    %679 = arith.addf %677, %678 : vector<8x128xf32>
    %cst_139 = arith.constant dense<0.000000e+00> : vector<8x128xf32>
    %680 = tpu.matmul %674, %72, %cst_139 {dimension_numbers = #tpu.dot_dimension_numbers<[1], [0], [0], [1], [0, 0, 1, 1], [], []>} : vector<8x32xf32>, vector<32x128xf32>, vector<8x128xf32> -> vector<8x128xf32>
    %681 = arith.addf %679, %680 : vector<8x128xf32>
    %682 = arith.negf %681 : vector<8x128xf32>
    %683 = math.exp %682 : vector<8x128xf32>
    %cst_140 = arith.constant 1.000000e+00 : f32
    %684 = vector.broadcast %cst_140 : f32 to vector<8x128xf32>
    %685 = arith.addf %684, %683 : vector<8x128xf32>
    %686 = arith.divf %684, %685 : vector<8x128xf32>
    %687 = vector.extract_strided_slice %686 {offsets = [0, 0], sizes = [8, 32], strides = [1, 1]} : vector<8x128xf32> to vector<8x32xf32>
    %688 = vector.extract_strided_slice %686 {offsets = [0, 32], sizes = [8, 32], strides = [1, 1]} : vector<8x128xf32> to vector<8x32xf32>
    %689 = vector.extract_strided_slice %686 {offsets = [0, 64], sizes = [8, 32], strides = [1, 1]} : vector<8x128xf32> to vector<8x32xf32>
    %cst_141 = arith.constant 2.000000e+00 : f32
    %690 = vector.broadcast %cst_141 : f32 to vector<8x32xf32>
    %691 = arith.mulf %690, %689 : vector<8x32xf32>
    %cst_142 = arith.constant 1.000000e+00 : f32
    %692 = vector.broadcast %cst_142 : f32 to vector<8x32xf32>
    %693 = arith.subf %691, %692 : vector<8x32xf32>
    %694 = vector.extract_strided_slice %686 {offsets = [0, 96], sizes = [8, 32], strides = [1, 1]} : vector<8x128xf32> to vector<8x32xf32>
    %695 = arith.mulf %688, %672 : vector<8x32xf32>
    %696 = arith.mulf %687, %693 : vector<8x32xf32>
    %697 = arith.addf %695, %696 : vector<8x32xf32>
    %698 = math.tanh %697 : vector<8x32xf32>
    %699 = arith.mulf %694, %698 : vector<8x32xf32>
    %700 = vector.extract_strided_slice %399 {offsets = [96, 0], sizes = [8, 128], strides = [1, 1]} : vector<128x256xf32> to vector<8x128xf32>
    %701 = vector.extract_strided_slice %399 {offsets = [24, 128], sizes = [8, 128], strides = [1, 1]} : vector<128x256xf32> to vector<8x128xf32>
    %702 = arith.addf %700, %701 : vector<8x128xf32>
    %703 = vector.broadcast %3 : vector<1x128xf32> to vector<8x128xf32>
    %704 = arith.addf %702, %703 : vector<8x128xf32>
    %cst_143 = arith.constant dense<0.000000e+00> : vector<8x128xf32>
    %705 = tpu.matmul %699, %72, %cst_143 {dimension_numbers = #tpu.dot_dimension_numbers<[1], [0], [0], [1], [0, 0, 1, 1], [], []>} : vector<8x32xf32>, vector<32x128xf32>, vector<8x128xf32> -> vector<8x128xf32>
    %706 = arith.addf %704, %705 : vector<8x128xf32>
    %707 = arith.negf %706 : vector<8x128xf32>
    %708 = math.exp %707 : vector<8x128xf32>
    %cst_144 = arith.constant 1.000000e+00 : f32
    %709 = vector.broadcast %cst_144 : f32 to vector<8x128xf32>
    %710 = arith.addf %709, %708 : vector<8x128xf32>
    %711 = arith.divf %709, %710 : vector<8x128xf32>
    %712 = vector.extract_strided_slice %711 {offsets = [0, 0], sizes = [8, 32], strides = [1, 1]} : vector<8x128xf32> to vector<8x32xf32>
    %713 = vector.extract_strided_slice %711 {offsets = [0, 32], sizes = [8, 32], strides = [1, 1]} : vector<8x128xf32> to vector<8x32xf32>
    %714 = vector.extract_strided_slice %711 {offsets = [0, 64], sizes = [8, 32], strides = [1, 1]} : vector<8x128xf32> to vector<8x32xf32>
    %cst_145 = arith.constant 2.000000e+00 : f32
    %715 = vector.broadcast %cst_145 : f32 to vector<8x32xf32>
    %716 = arith.mulf %715, %714 : vector<8x32xf32>
    %cst_146 = arith.constant 1.000000e+00 : f32
    %717 = vector.broadcast %cst_146 : f32 to vector<8x32xf32>
    %718 = arith.subf %716, %717 : vector<8x32xf32>
    %719 = vector.extract_strided_slice %711 {offsets = [0, 96], sizes = [8, 32], strides = [1, 1]} : vector<8x128xf32> to vector<8x32xf32>
    %720 = arith.mulf %713, %697 : vector<8x32xf32>
    %721 = arith.mulf %712, %718 : vector<8x32xf32>
    %722 = arith.addf %720, %721 : vector<8x32xf32>
    %723 = math.tanh %722 : vector<8x32xf32>
    %724 = arith.mulf %719, %723 : vector<8x32xf32>
    %725 = vector.extract_strided_slice %399 {offsets = [104, 0], sizes = [8, 128], strides = [1, 1]} : vector<128x256xf32> to vector<8x128xf32>
    %726 = vector.extract_strided_slice %399 {offsets = [16, 128], sizes = [8, 128], strides = [1, 1]} : vector<128x256xf32> to vector<8x128xf32>
    %727 = arith.addf %725, %726 : vector<8x128xf32>
    %728 = vector.broadcast %3 : vector<1x128xf32> to vector<8x128xf32>
    %729 = arith.addf %727, %728 : vector<8x128xf32>
    %cst_147 = arith.constant dense<0.000000e+00> : vector<8x128xf32>
    %730 = tpu.matmul %724, %72, %cst_147 {dimension_numbers = #tpu.dot_dimension_numbers<[1], [0], [0], [1], [0, 0, 1, 1], [], []>} : vector<8x32xf32>, vector<32x128xf32>, vector<8x128xf32> -> vector<8x128xf32>
    %731 = arith.addf %729, %730 : vector<8x128xf32>
    %732 = arith.negf %731 : vector<8x128xf32>
    %733 = math.exp %732 : vector<8x128xf32>
    %cst_148 = arith.constant 1.000000e+00 : f32
    %734 = vector.broadcast %cst_148 : f32 to vector<8x128xf32>
    %735 = arith.addf %734, %733 : vector<8x128xf32>
    %736 = arith.divf %734, %735 : vector<8x128xf32>
    %737 = vector.extract_strided_slice %736 {offsets = [0, 0], sizes = [8, 32], strides = [1, 1]} : vector<8x128xf32> to vector<8x32xf32>
    %738 = vector.extract_strided_slice %736 {offsets = [0, 32], sizes = [8, 32], strides = [1, 1]} : vector<8x128xf32> to vector<8x32xf32>
    %739 = vector.extract_strided_slice %736 {offsets = [0, 64], sizes = [8, 32], strides = [1, 1]} : vector<8x128xf32> to vector<8x32xf32>
    %cst_149 = arith.constant 2.000000e+00 : f32
    %740 = vector.broadcast %cst_149 : f32 to vector<8x32xf32>
    %741 = arith.mulf %740, %739 : vector<8x32xf32>
    %cst_150 = arith.constant 1.000000e+00 : f32
    %742 = vector.broadcast %cst_150 : f32 to vector<8x32xf32>
    %743 = arith.subf %741, %742 : vector<8x32xf32>
    %744 = vector.extract_strided_slice %736 {offsets = [0, 96], sizes = [8, 32], strides = [1, 1]} : vector<8x128xf32> to vector<8x32xf32>
    %745 = arith.mulf %738, %722 : vector<8x32xf32>
    %746 = arith.mulf %737, %743 : vector<8x32xf32>
    %747 = arith.addf %745, %746 : vector<8x32xf32>
    %748 = math.tanh %747 : vector<8x32xf32>
    %749 = arith.mulf %744, %748 : vector<8x32xf32>
    %750 = vector.extract_strided_slice %399 {offsets = [112, 0], sizes = [8, 128], strides = [1, 1]} : vector<128x256xf32> to vector<8x128xf32>
    %751 = vector.extract_strided_slice %399 {offsets = [8, 128], sizes = [8, 128], strides = [1, 1]} : vector<128x256xf32> to vector<8x128xf32>
    %752 = arith.addf %750, %751 : vector<8x128xf32>
    %753 = vector.broadcast %3 : vector<1x128xf32> to vector<8x128xf32>
    %754 = arith.addf %752, %753 : vector<8x128xf32>
    %cst_151 = arith.constant dense<0.000000e+00> : vector<8x128xf32>
    %755 = tpu.matmul %749, %72, %cst_151 {dimension_numbers = #tpu.dot_dimension_numbers<[1], [0], [0], [1], [0, 0, 1, 1], [], []>} : vector<8x32xf32>, vector<32x128xf32>, vector<8x128xf32> -> vector<8x128xf32>
    %756 = arith.addf %754, %755 : vector<8x128xf32>
    %757 = arith.negf %756 : vector<8x128xf32>
    %758 = math.exp %757 : vector<8x128xf32>
    %cst_152 = arith.constant 1.000000e+00 : f32
    %759 = vector.broadcast %cst_152 : f32 to vector<8x128xf32>
    %760 = arith.addf %759, %758 : vector<8x128xf32>
    %761 = arith.divf %759, %760 : vector<8x128xf32>
    %762 = vector.extract_strided_slice %761 {offsets = [0, 0], sizes = [8, 32], strides = [1, 1]} : vector<8x128xf32> to vector<8x32xf32>
    %763 = vector.extract_strided_slice %761 {offsets = [0, 32], sizes = [8, 32], strides = [1, 1]} : vector<8x128xf32> to vector<8x32xf32>
    %764 = vector.extract_strided_slice %761 {offsets = [0, 64], sizes = [8, 32], strides = [1, 1]} : vector<8x128xf32> to vector<8x32xf32>
    %cst_153 = arith.constant 2.000000e+00 : f32
    %765 = vector.broadcast %cst_153 : f32 to vector<8x32xf32>
    %766 = arith.mulf %765, %764 : vector<8x32xf32>
    %cst_154 = arith.constant 1.000000e+00 : f32
    %767 = vector.broadcast %cst_154 : f32 to vector<8x32xf32>
    %768 = arith.subf %766, %767 : vector<8x32xf32>
    %769 = vector.extract_strided_slice %761 {offsets = [0, 96], sizes = [8, 32], strides = [1, 1]} : vector<8x128xf32> to vector<8x32xf32>
    %770 = arith.mulf %763, %747 : vector<8x32xf32>
    %771 = arith.mulf %762, %768 : vector<8x32xf32>
    %772 = arith.addf %770, %771 : vector<8x32xf32>
    %773 = math.tanh %772 : vector<8x32xf32>
    %774 = arith.mulf %769, %773 : vector<8x32xf32>
    %775 = vector.extract_strided_slice %399 {offsets = [120, 0], sizes = [8, 128], strides = [1, 1]} : vector<128x256xf32> to vector<8x128xf32>
    %776 = vector.extract_strided_slice %399 {offsets = [0, 128], sizes = [8, 128], strides = [1, 1]} : vector<128x256xf32> to vector<8x128xf32>
    %777 = arith.addf %775, %776 : vector<8x128xf32>
    %778 = vector.broadcast %3 : vector<1x128xf32> to vector<8x128xf32>
    %779 = arith.addf %777, %778 : vector<8x128xf32>
    %cst_155 = arith.constant dense<0.000000e+00> : vector<8x128xf32>
    %780 = tpu.matmul %774, %72, %cst_155 {dimension_numbers = #tpu.dot_dimension_numbers<[1], [0], [0], [1], [0, 0, 1, 1], [], []>} : vector<8x32xf32>, vector<32x128xf32>, vector<8x128xf32> -> vector<8x128xf32>
    %781 = arith.addf %779, %780 : vector<8x128xf32>
    %782 = arith.negf %781 : vector<8x128xf32>
    %783 = math.exp %782 : vector<8x128xf32>
    %cst_156 = arith.constant 1.000000e+00 : f32
    %784 = vector.broadcast %cst_156 : f32 to vector<8x128xf32>
    %785 = arith.addf %784, %783 : vector<8x128xf32>
    %786 = arith.divf %784, %785 : vector<8x128xf32>
    %787 = vector.extract_strided_slice %786 {offsets = [0, 0], sizes = [8, 32], strides = [1, 1]} : vector<8x128xf32> to vector<8x32xf32>
    %788 = vector.extract_strided_slice %786 {offsets = [0, 32], sizes = [8, 32], strides = [1, 1]} : vector<8x128xf32> to vector<8x32xf32>
    %789 = vector.extract_strided_slice %786 {offsets = [0, 64], sizes = [8, 32], strides = [1, 1]} : vector<8x128xf32> to vector<8x32xf32>
    %cst_157 = arith.constant 2.000000e+00 : f32
    %790 = vector.broadcast %cst_157 : f32 to vector<8x32xf32>
    %791 = arith.mulf %790, %789 : vector<8x32xf32>
    %cst_158 = arith.constant 1.000000e+00 : f32
    %792 = vector.broadcast %cst_158 : f32 to vector<8x32xf32>
    %793 = arith.subf %791, %792 : vector<8x32xf32>
    %794 = vector.extract_strided_slice %786 {offsets = [0, 96], sizes = [8, 32], strides = [1, 1]} : vector<8x128xf32> to vector<8x32xf32>
    %795 = arith.mulf %788, %772 : vector<8x32xf32>
    %796 = arith.mulf %787, %793 : vector<8x32xf32>
    %797 = arith.addf %795, %796 : vector<8x32xf32>
    %798 = math.tanh %797 : vector<8x32xf32>
    %799 = arith.mulf %794, %798 : vector<8x32xf32>
    %cst_159 = arith.constant dense<0.000000e+00> : vector<8x128xf32>
    %800 = tpu.matmul %799, %73, %cst_159 {dimension_numbers = #tpu.dot_dimension_numbers<[1], [0], [0], [1], [0, 0, 1, 1], [], []>} : vector<8x32xf32>, vector<32x128xf32>, vector<8x128xf32> -> vector<8x128xf32>
    %801 = vector.broadcast %4 : vector<1x128xf32> to vector<8x128xf32>
    %802 = arith.addf %800, %801 : vector<8x128xf32>
    %c0_160 = arith.constant 0 : index
    %c0_161 = arith.constant 0 : index
    %803 = vector.load %arg4[%c0_160, %c0_161] : memref<8x128xf32, #tpu.memory_space<vmem>>, vector<8x128xf32>
    tpu.vector_store %arg4[%c0_160, %c0_161], %802 {strides = array<i32>} : memref<8x128xf32, #tpu.memory_space<vmem>>, vector<8x128xf32>,
    return
  }
}

</mosaic_0001>

<llo_original>
// kernel: hybrid_forward.1
$region0: #{hybrid_forward.1}
  #allocation0 [shape = 'u32[]', space=smem, size = 0x4, offset = 0x4, fixed_abs, tag = 'smem constant byte address 0x4 - core index']
  #allocation1 [shape = 'u32[144,128]{1,0:T(1,128)}', space=vmem, size = 0x12000, scoped, tag = 'internal scratch']
  %s0 = inlined_call_operand.vmem [shape: s32[4,128,1], index: 0, kind: input, shape index: {}]
  %s1 = inlined_call_operand.vmem [shape: f32[512,32], index: 1, kind: input, shape index: {}]
  %s2 = inlined_call_operand.vmem [shape: f32[32,768], index: 2, kind: input, shape index: {}]
  %s3 = inlined_call_operand.vmem [shape: f32[8,128], index: 3, kind: input, shape index: {}]
  %s4 = inlined_call_operand.vmem [shape: f32[8,128], index: 4, kind: output, shape index: {}]
  %s5 = sld [smem:[#allocation0]]
  $region26: #{hybrid_forward.1} parent=0
    _
  %s7 = ssub.s32 1, %s5
  %s8 = scalar_select 0, %s7, %s5
  // Predicated region
  $region2: #{hybrid_forward.1} parent=0 // pred_check
    _
  $region3: #{hybrid_forward.1} parent=0 // pred_check_branch
    %10 = sbr.rel (0) target = $region5
  $region4: #{hybrid_forward.1} parent=0 // pred_region
    _
  $region5: #{hybrid_forward.1} parent=0 // pred_fallthru
    _
  // Predicated region
  $region6: #{hybrid_forward.1} parent=0 // pred_check
    _
  $region7: #{hybrid_forward.1} parent=0 // pred_check_branch
    %12 = sbr.rel (0) target = $region9
  $region8: #{hybrid_forward.1} parent=0 // pred_region
    _
  $region9: #{hybrid_forward.1} parent=0 // pred_fallthru
    _
  // Predicated region
  $region10: #{hybrid_forward.1} parent=0 // pred_check
    _
  $region11: #{hybrid_forward.1} parent=0 // pred_check_branch
    %14 = sbr.rel (0) target = $region13
  $region12: #{hybrid_forward.1} parent=0 // pred_region
    _
  $region13: #{hybrid_forward.1} parent=0 // pred_fallthru
    _
  // Predicated region
  $region14: #{hybrid_forward.1} parent=0 // pred_check
    _
  $region15: #{hybrid_forward.1} parent=0 // pred_check_branch
    %16 = sbr.rel (0) target = $region17
  $region16: #{hybrid_forward.1} parent=0 // pred_region
    _
  $region17: #{hybrid_forward.1} parent=0 // pred_fallthru
    _
  %v17 = vld [vmem:[%s3] sm:$0xff]
  %v18 = vlaneseq
  %v19 = vand.u32 %v18, 127
  %v20 = vld [vmem:[%s0] sm:$0xff]
  %v21 = vld [vmem:[%s0 + $0x8] sm:$0xff]
  %v22 = vld [vmem:[%s0 + $0x10] sm:$0xff]
  %v23 = vld [vmem:[%s0 + $0x18] sm:$0xff]
  %v24 = vld [vmem:[%s0 + $0x20] sm:$0xff]
  %v25 = vld [vmem:[%s0 + $0x28] sm:$0xff]
  %v26 = vld [vmem:[%s0 + $0x30] sm:$0xff]
  %v27 = vld [vmem:[%s0 + $0x38] sm:$0xff]
  %v28 = vld [vmem:[%s0 + $0x40] sm:$0xff]
  %v29 = vld [vmem:[%s0 + $0x48] sm:$0xff]
  %v30 = vld [vmem:[%s0 + $0x50] sm:$0xff]
  %v31 = vld [vmem:[%s0 + $0x58] sm:$0xff]
  %v32 = vld [vmem:[%s0 + $0x60] sm:$0xff]
  %v33 = vld [vmem:[%s0 + $0x68] sm:$0xff]
  %v34 = vld [vmem:[%s0 + $0x70] sm:$0xff]
  %v35 = vld [vmem:[%s0 + $0x78] sm:$0xff]
  %36 = vset.pattern.permute.xlu0 0
  %37 = vperm.xlu0 %36, %v20
  %v38 = vpop.permute.xlu0 %37
  %39 = vset.pattern.permute.xlu0 0
  %40 = vperm.xlu0 %39, %v21
  %v41 = vpop.permute.xlu0 %40
  %42 = vset.pattern.permute.xlu0 0
  %43 = vperm.xlu0 %42, %v22
  %v44 = vpop.permute.xlu0 %43
  %45 = vset.pattern.permute.xlu0 0
  %46 = vperm.xlu0 %45, %v23
  %v47 = vpop.permute.xlu0 %46
  %48 = vset.pattern.permute.xlu0 0
  %49 = vperm.xlu0 %48, %v24
  %v50 = vpop.permute.xlu0 %49
  %51 = vset.pattern.permute.xlu0 0
  %52 = vperm.xlu0 %51, %v25
  %v53 = vpop.permute.xlu0 %52
  %54 = vset.pattern.permute.xlu0 0
  %55 = vperm.xlu0 %54, %v26
  %v56 = vpop.permute.xlu0 %55
  %57 = vset.pattern.permute.xlu0 0
  %58 = vperm.xlu0 %57, %v27
  %v59 = vpop.permute.xlu0 %58
  %60 = vset.pattern.permute.xlu0 0
  %61 = vperm.xlu0 %60, %v28
  %v62 = vpop.permute.xlu0 %61
  %63 = vset.pattern.permute.xlu0 0
  %64 = vperm.xlu0 %63, %v29
  %v65 = vpop.permute.xlu0 %64
  %66 = vset.pattern.permute.xlu0 0
  %67 = vperm.xlu0 %66, %v30
  %v68 = vpop.permute.xlu0 %67
  %69 = vset.pattern.permute.xlu0 0
  %70 = vperm.xlu0 %69, %v31
  %v71 = vpop.permute.xlu0 %70
  %72 = vset.pattern.permute.xlu0 0
  %73 = vperm.xlu0 %72, %v32
  %v74 = vpop.permute.xlu0 %73
  %75 = vset.pattern.permute.xlu0 0
  %76 = vperm.xlu0 %75, %v33
  %v77 = vpop.permute.xlu0 %76
  %78 = vset.pattern.permute.xlu0 0
  %79 = vperm.xlu0 %78, %v34
  %v80 = vpop.permute.xlu0 %79
  %81 = vset.pattern.permute.xlu0 0
  %82 = vperm.xlu0 %81, %v35
  %v83 = vpop.permute.xlu0 %82
  %vm84 = vcmp.eq.s32.totalorder %v38, %v19
  %vm85 = vcmp.eq.s32.totalorder %v41, %v19
  %vm86 = vcmp.eq.s32.totalorder %v44, %v19
  %vm87 = vcmp.eq.s32.totalorder %v47, %v19
  %vm88 = vcmp.eq.s32.totalorder %v50, %v19
  %vm89 = vcmp.eq.s32.totalorder %v53, %v19
  %vm90 = vcmp.eq.s32.totalorder %v56, %v19
  %vm91 = vcmp.eq.s32.totalorder %v59, %v19
  %vm92 = vcmp.eq.s32.totalorder %v62, %v19
  %vm93 = vcmp.eq.s32.totalorder %v65, %v19
  %vm94 = vcmp.eq.s32.totalorder %v68, %v19
  %vm95 = vcmp.eq.s32.totalorder %v71, %v19
  %vm96 = vcmp.eq.s32.totalorder %v74, %v19
  %vm97 = vcmp.eq.s32.totalorder %v77, %v19
  %vm98 = vcmp.eq.s32.totalorder %v80, %v19
  %vm99 = vcmp.eq.s32.totalorder %v83, %v19
  %v100 = vsel %vm84, 1, 0
  %v101 = vsel %vm85, 1, 0
  %v102 = vsel %vm86, 1, 0
  %v103 = vsel %vm87, 1, 0
  %v104 = vsel %vm88, 1, 0
  %v105 = vsel %vm89, 1, 0
  %v106 = vsel %vm90, 1, 0
  %v107 = vsel %vm91, 1, 0
  %v108 = vsel %vm92, 1, 0
  %v109 = vsel %vm93, 1, 0
  %v110 = vsel %vm94, 1, 0
  %v111 = vsel %vm95, 1, 0
  %v112 = vsel %vm96, 1, 0
  %v113 = vsel %vm97, 1, 0
  %v114 = vsel %vm98, 1, 0
  %v115 = vsel %vm99, 1, 0
  %v116 = vcvt.s32.f32 %v100
  %v117 = vcvt.s32.f32 %v101
  %v118 = vcvt.s32.f32 %v102
  %v119 = vcvt.s32.f32 %v103
  %v120 = vcvt.s32.f32 %v104
  %v121 = vcvt.s32.f32 %v105
  %v122 = vcvt.s32.f32 %v106
  %v123 = vcvt.s32.f32 %v107
  %v124 = vcvt.s32.f32 %v108
  %v125 = vcvt.s32.f32 %v109
  %v126 = vcvt.s32.f32 %v110
  %v127 = vcvt.s32.f32 %v111
  %v128 = vcvt.s32.f32 %v112
  %v129 = vcvt.s32.f32 %v113
  %v130 = vcvt.s32.f32 %v114
  %v131 = vcvt.s32.f32 %v115
  %s132 = scalar_lea.vmem %s0, 128
  %v133 = vld [vmem:[%s132] sm:$0xff]
  %v134 = vld [vmem:[%s132 + $0x8] sm:$0xff]
  %v135 = vld [vmem:[%s132 + $0x10] sm:$0xff]
  %v136 = vld [vmem:[%s132 + $0x18] sm:$0xff]
  %v137 = vld [vmem:[%s132 + $0x20] sm:$0xff]
  %v138 = vld [vmem:[%s132 + $0x28] sm:$0xff]
  %v139 = vld [vmem:[%s132 + $0x30] sm:$0xff]
  %v140 = vld [vmem:[%s132 + $0x38] sm:$0xff]
  %v141 = vld [vmem:[%s132 + $0x40] sm:$0xff]
  %v142 = vld [vmem:[%s132 + $0x48] sm:$0xff]
  %v143 = vld [vmem:[%s132 + $0x50] sm:$0xff]
  %v144 = vld [vmem:[%s132 + $0x58] sm:$0xff]
  %v145 = vld [vmem:[%s132 + $0x60] sm:$0xff]
  %v146 = vld [vmem:[%s132 + $0x68] sm:$0xff]
  %v147 = vld [vmem:[%s132 + $0x70] sm:$0xff]
  %v148 = vld [vmem:[%s132 + $0x78] sm:$0xff]
  %149 = vset.pattern.permute.xlu0 0
  %150 = vperm.xlu0 %149, %v133
  %v151 = vpop.permute.xlu0 %150
  %152 = vset.pattern.permute.xlu0 0
  %153 = vperm.xlu0 %152, %v134
  %v154 = vpop.permute.xlu0 %153
  %155 = vset.pattern.permute.xlu0 0
  %156 = vperm.xlu0 %155, %v135
  %v157 = vpop.permute.xlu0 %156
  %158 = vset.pattern.permute.xlu0 0
  %159 = vperm.xlu0 %158, %v136
  %v160 = vpop.permute.xlu0 %159
  %161 = vset.pattern.permute.xlu0 0
  %162 = vperm.xlu0 %161, %v137
  %v163 = vpop.permute.xlu0 %162
  %164 = vset.pattern.permute.xlu0 0
  %165 = vperm.xlu0 %164, %v138
  %v166 = vpop.permute.xlu0 %165
  %167 = vset.pattern.permute.xlu0 0
  %168 = vperm.xlu0 %167, %v139
  %v169 = vpop.permute.xlu0 %168
  %170 = vset.pattern.permute.xlu0 0
  %171 = vperm.xlu0 %170, %v140
  %v172 = vpop.permute.xlu0 %171
  %173 = vset.pattern.permute.xlu0 0
  %174 = vperm.xlu0 %173, %v141
  %v175 = vpop.permute.xlu0 %174
  %176 = vset.pattern.permute.xlu0 0
  %177 = vperm.xlu0 %176, %v142
  %v178 = vpop.permute.xlu0 %177
  %179 = vset.pattern.permute.xlu0 0
  %180 = vperm.xlu0 %179, %v143
  %v181 = vpop.permute.xlu0 %180
  %182 = vset.pattern.permute.xlu0 0
  %183 = vperm.xlu0 %182, %v144
  %v184 = vpop.permute.xlu0 %183
  %185 = vset.pattern.permute.xlu0 0
  %186 = vperm.xlu0 %185, %v145
  %v187 = vpop.permute.xlu0 %186
  %188 = vset.pattern.permute.xlu0 0
  %189 = vperm.xlu0 %188, %v146
  %v190 = vpop.permute.xlu0 %189
  %191 = vset.pattern.permute.xlu0 0
  %192 = vperm.xlu0 %191, %v147
  %v193 = vpop.permute.xlu0 %192
  %194 = vset.pattern.permute.xlu0 0
  %195 = vperm.xlu0 %194, %v148
  %v196 = vpop.permute.xlu0 %195
  %vm197 = vcmp.eq.s32.totalorder %v151, %v19
  %vm198 = vcmp.eq.s32.totalorder %v154, %v19
  %vm199 = vcmp.eq.s32.totalorder %v157, %v19
  %vm200 = vcmp.eq.s32.totalorder %v160, %v19
  %vm201 = vcmp.eq.s32.totalorder %v163, %v19
  %vm202 = vcmp.eq.s32.totalorder %v166, %v19
  %vm203 = vcmp.eq.s32.totalorder %v169, %v19
  %vm204 = vcmp.eq.s32.totalorder %v172, %v19
  %vm205 = vcmp.eq.s32.totalorder %v175, %v19
  %vm206 = vcmp.eq.s32.totalorder %v178, %v19
  %vm207 = vcmp.eq.s32.totalorder %v181, %v19
  %vm208 = vcmp.eq.s32.totalorder %v184, %v19
  %vm209 = vcmp.eq.s32.totalorder %v187, %v19
  %vm210 = vcmp.eq.s32.totalorder %v190, %v19
  %vm211 = vcmp.eq.s32.totalorder %v193, %v19
  %vm212 = vcmp.eq.s32.totalorder %v196, %v19
  %v213 = vsel %vm197, 1, 0
  %v214 = vsel %vm198, 1, 0
  %v215 = vsel %vm199, 1, 0
  %v216 = vsel %vm200, 1, 0
  %v217 = vsel %vm201, 1, 0
  %v218 = vsel %vm202, 1, 0
  %v219 = vsel %vm203, 1, 0
  %v220 = vsel %vm204, 1, 0
  %v221 = vsel %vm205, 1, 0
  %v222 = vsel %vm206, 1, 0
  %v223 = vsel %vm207, 1, 0
  %v224 = vsel %vm208, 1, 0
  %v225 = vsel %vm209, 1, 0
  %v226 = vsel %vm210, 1, 0
  %v227 = vsel %vm211, 1, 0
  %v228 = vsel %vm212, 1, 0
  %v229 = vcvt.s32.f32 %v213
  %v230 = vcvt.s32.f32 %v214
  %v231 = vcvt.s32.f32 %v215
  %v232 = vcvt.s32.f32 %v216
  %v233 = vcvt.s32.f32 %v217
  %v234 = vcvt.s32.f32 %v218
  %v235 = vcvt.s32.f32 %v219
  %v236 = vcvt.s32.f32 %v220
  %v237 = vcvt.s32.f32 %v221
  %v238 = vcvt.s32.f32 %v222
  %v239 = vcvt.s32.f32 %v223
  %v240 = vcvt.s32.f32 %v224
  %v241 = vcvt.s32.f32 %v225
  %v242 = vcvt.s32.f32 %v226
  %v243 = vcvt.s32.f32 %v227
  %v244 = vcvt.s32.f32 %v228
  %s245 = scalar_lea.vmem %s0, 256
  %v246 = vld [vmem:[%s245] sm:$0xff]
  %v247 = vld [vmem:[%s245 + $0x8] sm:$0xff]
  %v248 = vld [vmem:[%s245 + $0x10] sm:$0xff]
  %v249 = vld [vmem:[%s245 + $0x18] sm:$0xff]
  %v250 = vld [vmem:[%s245 + $0x20] sm:$0xff]
  %v251 = vld [vmem:[%s245 + $0x28] sm:$0xff]
  %v252 = vld [vmem:[%s245 + $0x30] sm:$0xff]
  %v253 = vld [vmem:[%s245 + $0x38] sm:$0xff]
  %v254 = vld [vmem:[%s245 + $0x40] sm:$0xff]
  %v255 = vld [vmem:[%s245 + $0x48] sm:$0xff]
  %v256 = vld [vmem:[%s245 + $0x50] sm:$0xff]
  %v257 = vld [vmem:[%s245 + $0x58] sm:$0xff]
  %v258 = vld [vmem:[%s245 + $0x60] sm:$0xff]
  %v259 = vld [vmem:[%s245 + $0x68] sm:$0xff]
  %v260 = vld [vmem:[%s245 + $0x70] sm:$0xff]
  %v261 = vld [vmem:[%s245 + $0x78] sm:$0xff]
  %262 = vset.pattern.permute.xlu0 0
  %263 = vperm.xlu0 %262, %v246
  %v264 = vpop.permute.xlu0 %263
  %265 = vset.pattern.permute.xlu0 0
  %266 = vperm.xlu0 %265, %v247
  %v267 = vpop.permute.xlu0 %266
  %268 = vset.pattern.permute.xlu0 0
  %269 = vperm.xlu0 %268, %v248
  %v270 = vpop.permute.xlu0 %269
  %271 = vset.pattern.permute.xlu0 0
  %272 = vperm.xlu0 %271, %v249
  %v273 = vpop.permute.xlu0 %272
  %274 = vset.pattern.permute.xlu0 0
  %275 = vperm.xlu0 %274, %v250
  %v276 = vpop.permute.xlu0 %275
  %277 = vset.pattern.permute.xlu0 0
  %278 = vperm.xlu0 %277, %v251
  %v279 = vpop.permute.xlu0 %278
  %280 = vset.pattern.permute.xlu0 0
  %281 = vperm.xlu0 %280, %v252
  %v282 = vpop.permute.xlu0 %281
  %283 = vset.pattern.permute.xlu0 0
  %284 = vperm.xlu0 %283, %v253
  %v285 = vpop.permute.xlu0 %284
  %286 = vset.pattern.permute.xlu0 0
  %287 = vperm.xlu0 %286, %v254
  %v288 = vpop.permute.xlu0 %287
  %289 = vset.pattern.permute.xlu0 0
  %290 = vperm.xlu0 %289, %v255
  %v291 = vpop.permute.xlu0 %290
  %292 = vset.pattern.permute.xlu0 0
  %293 = vperm.xlu0 %292, %v256
  %v294 = vpop.permute.xlu0 %293
  %295 = vset.pattern.permute.xlu0 0
  %296 = vperm.xlu0 %295, %v257
  %v297 = vpop.permute.xlu0 %296
  %298 = vset.pattern.permute.xlu0 0
  %299 = vperm.xlu0 %298, %v258
  %v300 = vpop.permute.xlu0 %299
  %301 = vset.pattern.permute.xlu0 0
  %302 = vperm.xlu0 %301, %v259
  %v303 = vpop.permute.xlu0 %302
  %304 = vset.pattern.permute.xlu0 0
  %305 = vperm.xlu0 %304, %v260
  %v306 = vpop.permute.xlu0 %305
  %307 = vset.pattern.permute.xlu0 0
  %308 = vperm.xlu0 %307, %v261
  %v309 = vpop.permute.xlu0 %308
  %vm310 = vcmp.eq.s32.totalorder %v264, %v19
  %vm311 = vcmp.eq.s32.totalorder %v267, %v19
  %vm312 = vcmp.eq.s32.totalorder %v270, %v19
  %vm313 = vcmp.eq.s32.totalorder %v273, %v19
  %vm314 = vcmp.eq.s32.totalorder %v276, %v19
  %vm315 = vcmp.eq.s32.totalorder %v279, %v19
  %vm316 = vcmp.eq.s32.totalorder %v282, %v19
  %vm317 = vcmp.eq.s32.totalorder %v285, %v19
  %vm318 = vcmp.eq.s32.totalorder %v288, %v19
  %vm319 = vcmp.eq.s32.totalorder %v291, %v19
  %vm320 = vcmp.eq.s32.totalorder %v294, %v19
  %vm321 = vcmp.eq.s32.totalorder %v297, %v19
  %vm322 = vcmp.eq.s32.totalorder %v300, %v19
  %vm323 = vcmp.eq.s32.totalorder %v303, %v19
  %vm324 = vcmp.eq.s32.totalorder %v306, %v19
  %vm325 = vcmp.eq.s32.totalorder %v309, %v19
  %v326 = vsel %vm310, 1, 0
  %v327 = vsel %vm311, 1, 0
  %v328 = vsel %vm312, 1, 0
  %v329 = vsel %vm313, 1, 0
  %v330 = vsel %vm314, 1, 0
  %v331 = vsel %vm315, 1, 0
  %v332 = vsel %vm316, 1, 0
  %v333 = vsel %vm317, 1, 0
  %v334 = vsel %vm318, 1, 0
  %v335 = vsel %vm319, 1, 0
  %v336 = vsel %vm320, 1, 0
  %v337 = vsel %vm321, 1, 0
  %v338 = vsel %vm322, 1, 0
  %v339 = vsel %vm323, 1, 0
  %v340 = vsel %vm324, 1, 0
  %v341 = vsel %vm325, 1, 0
  %v342 = vcvt.s32.f32 %v326
  %v343 = vcvt.s32.f32 %v327
  %v344 = vcvt.s32.f32 %v328
  %v345 = vcvt.s32.f32 %v329
  %v346 = vcvt.s32.f32 %v330
  %v347 = vcvt.s32.f32 %v331
  %v348 = vcvt.s32.f32 %v332
  %v349 = vcvt.s32.f32 %v333
  %v350 = vcvt.s32.f32 %v334
  %v351 = vcvt.s32.f32 %v335
  %v352 = vcvt.s32.f32 %v336
  %v353 = vcvt.s32.f32 %v337
  %v354 = vcvt.s32.f32 %v338
  %v355 = vcvt.s32.f32 %v339
  %v356 = vcvt.s32.f32 %v340
  %v357 = vcvt.s32.f32 %v341
  %s358 = scalar_lea.vmem %s0, 384
  %v359 = vld [vmem:[%s358] sm:$0xff]
  %v360 = vld [vmem:[%s358 + $0x8] sm:$0xff]
  %v361 = vld [vmem:[%s358 + $0x10] sm:$0xff]
  %v362 = vld [vmem:[%s358 + $0x18] sm:$0xff]
  %v363 = vld [vmem:[%s358 + $0x20] sm:$0xff]
  %v364 = vld [vmem:[%s358 + $0x28] sm:$0xff]
  %v365 = vld [vmem:[%s358 + $0x30] sm:$0xff]
  %v366 = vld [vmem:[%s358 + $0x38] sm:$0xff]
  %v367 = vld [vmem:[%s358 + $0x40] sm:$0xff]
  %v368 = vld [vmem:[%s358 + $0x48] sm:$0xff]
  %v369 = vld [vmem:[%s358 + $0x50] sm:$0xff]
  %v370 = vld [vmem:[%s358 + $0x58] sm:$0xff]
  %v371 = vld [vmem:[%s358 + $0x60] sm:$0xff]
  %v372 = vld [vmem:[%s358 + $0x68] sm:$0xff]
  %v373 = vld [vmem:[%s358 + $0x70] sm:$0xff]
  %v374 = vld [vmem:[%s358 + $0x78] sm:$0xff]
  %375 = vset.pattern.permute.xlu0 0
  %376 = vperm.xlu0 %375, %v359
  %v377 = vpop.permute.xlu0 %376
  %378 = vset.pattern.permute.xlu0 0
  %379 = vperm.xlu0 %378, %v360
  %v380 = vpop.permute.xlu0 %379
  %381 = vset.pattern.permute.xlu0 0
  %382 = vperm.xlu0 %381, %v361
  %v383 = vpop.permute.xlu0 %382
  %384 = vset.pattern.permute.xlu0 0
  %385 = vperm.xlu0 %384, %v362
  %v386 = vpop.permute.xlu0 %385
  %387 = vset.pattern.permute.xlu0 0
  %388 = vperm.xlu0 %387, %v363
  %v389 = vpop.permute.xlu0 %388
  %390 = vset.pattern.permute.xlu0 0
  %391 = vperm.xlu0 %390, %v364
  %v392 = vpop.permute.xlu0 %391
  %393 = vset.pattern.permute.xlu0 0
  %394 = vperm.xlu0 %393, %v365
  %v395 = vpop.permute.xlu0 %394
  %396 = vset.pattern.permute.xlu0 0
  %397 = vperm.xlu0 %396, %v366
  %v398 = vpop.permute.xlu0 %397
  %399 = vset.pattern.permute.xlu0 0
  %400 = vperm.xlu0 %399, %v367
  %v401 = vpop.permute.xlu0 %400
  %402 = vset.pattern.permute.xlu0 0
  %403 = vperm.xlu0 %402, %v368
  %v404 = vpop.permute.xlu0 %403
  %405 = vset.pattern.permute.xlu0 0
  %406 = vperm.xlu0 %405, %v369
  %v407 = vpop.permute.xlu0 %406
  %408 = vset.pattern.permute.xlu0 0
  %409 = vperm.xlu0 %408, %v370
  %v410 = vpop.permute.xlu0 %409
  %411 = vset.pattern.permute.xlu0 0
  %412 = vperm.xlu0 %411, %v371
  %v413 = vpop.permute.xlu0 %412
  %414 = vset.pattern.permute.xlu0 0
  %415 = vperm.xlu0 %414, %v372
  %v416 = vpop.permute.xlu0 %415
  %417 = vset.pattern.permute.xlu0 0
  %418 = vperm.xlu0 %417, %v373
  %v419 = vpop.permute.xlu0 %418
  %420 = vset.pattern.permute.xlu0 0
  %421 = vperm.xlu0 %420, %v374
  %v422 = vpop.permute.xlu0 %421
  %vm423 = vcmp.eq.s32.totalorder %v377, %v19
  %vm424 = vcmp.eq.s32.totalorder %v380, %v19
  %vm425 = vcmp.eq.s32.totalorder %v383, %v19
  %vm426 = vcmp.eq.s32.totalorder %v386, %v19
  %vm427 = vcmp.eq.s32.totalorder %v389, %v19
  %vm428 = vcmp.eq.s32.totalorder %v392, %v19
  %vm429 = vcmp.eq.s32.totalorder %v395, %v19
  %vm430 = vcmp.eq.s32.totalorder %v398, %v19
  %vm431 = vcmp.eq.s32.totalorder %v401, %v19
  %vm432 = vcmp.eq.s32.totalorder %v404, %v19
  %vm433 = vcmp.eq.s32.totalorder %v407, %v19
  %vm434 = vcmp.eq.s32.totalorder %v410, %v19
  %vm435 = vcmp.eq.s32.totalorder %v413, %v19
  %vm436 = vcmp.eq.s32.totalorder %v416, %v19
  %vm437 = vcmp.eq.s32.totalorder %v419, %v19
  %vm438 = vcmp.eq.s32.totalorder %v422, %v19
  %v439 = vsel %vm423, 1, 0
  %v440 = vsel %vm424, 1, 0
  %v441 = vsel %vm425, 1, 0
  %v442 = vsel %vm426, 1, 0
  %v443 = vsel %vm427, 1, 0
  %v444 = vsel %vm428, 1, 0
  %v445 = vsel %vm429, 1, 0
  %v446 = vsel %vm430, 1, 0
  %v447 = vsel %vm431, 1, 0
  %v448 = vsel %vm432, 1, 0
  %v449 = vsel %vm433, 1, 0
  %v450 = vsel %vm434, 1, 0
  %v451 = vsel %vm435, 1, 0
  %v452 = vsel %vm436, 1, 0
  %v453 = vsel %vm437, 1, 0
  %v454 = vsel %vm438, 1, 0
  %v455 = vcvt.s32.f32 %v439
  %v456 = vcvt.s32.f32 %v440
  %v457 = vcvt.s32.f32 %v441
  %v458 = vcvt.s32.f32 %v442
  %v459 = vcvt.s32.f32 %v443
  %v460 = vcvt.s32.f32 %v444
  %v461 = vcvt.s32.f32 %v445
  %v462 = vcvt.s32.f32 %v446
  %v463 = vcvt.s32.f32 %v447
  %v464 = vcvt.s32.f32 %v448
  %v465 = vcvt.s32.f32 %v449
  %v466 = vcvt.s32.f32 %v450
  %v467 = vcvt.s32.f32 %v451
  %v468 = vcvt.s32.f32 %v452
  %v469 = vcvt.s32.f32 %v453
  %v470 = vcvt.s32.f32 %v454
  %v471 = vld [vmem:[%s1] sm:$0xff]
  %v472 = vld [vmem:[%s1 + $0x8] sm:$0xff]
  %v473 = vld [vmem:[%s1 + $0x10] sm:$0xff]
  %v474 = vld [vmem:[%s1 + $0x18] sm:$0xff]
  %v475 = vld [vmem:[%s1 + $0x20] sm:$0xff]
  %v476 = vld [vmem:[%s1 + $0x28] sm:$0xff]
  %v477 = vld [vmem:[%s1 + $0x30] sm:$0xff]
  %v478 = vld [vmem:[%s1 + $0x38] sm:$0xff]
  %v479 = vld [vmem:[%s1 + $0x40] sm:$0xff]
  %v480 = vld [vmem:[%s1 + $0x48] sm:$0xff]
  %v481 = vld [vmem:[%s1 + $0x50] sm:$0xff]
  %v482 = vld [vmem:[%s1 + $0x58] sm:$0xff]
  %v483 = vld [vmem:[%s1 + $0x60] sm:$0xff]
  %v484 = vld [vmem:[%s1 + $0x68] sm:$0xff]
  %v485 = vld [vmem:[%s1 + $0x70] sm:$0xff]
  %v486 = vld [vmem:[%s1 + $0x78] sm:$0xff]
  %v487 = vld [vmem:[%s1 + $0x80] sm:$0xff]
  %v488 = vld [vmem:[%s1 + $0x88] sm:$0xff]
  %v489 = vld [vmem:[%s1 + $0x90] sm:$0xff]
  %v490 = vld [vmem:[%s1 + $0x98] sm:$0xff]
  %v491 = vld [vmem:[%s1 + $0xa0] sm:$0xff]
  %v492 = vld [vmem:[%s1 + $0xa8] sm:$0xff]
  %v493 = vld [vmem:[%s1 + $0xb0] sm:$0xff]
  %v494 = vld [vmem:[%s1 + $0xb8] sm:$0xff]
  %v495 = vld [vmem:[%s1 + $0xc0] sm:$0xff]
  %v496 = vld [vmem:[%s1 + $0xc8] sm:$0xff]
  %v497 = vld [vmem:[%s1 + $0xd0] sm:$0xff]
  %v498 = vld [vmem:[%s1 + $0xd8] sm:$0xff]
  %v499 = vld [vmem:[%s1 + $0xe0] sm:$0xff]
  %v500 = vld [vmem:[%s1 + $0xe8] sm:$0xff]
  %v501 = vld [vmem:[%s1 + $0xf0] sm:$0xff]
  %v502 = vld [vmem:[%s1 + $0xf8] sm:$0xff]
  %v503 = vld [vmem:[%s1 + $0x100] sm:$0xff]
  %v504 = vld [vmem:[%s1 + $0x108] sm:$0xff]
  %v505 = vld [vmem:[%s1 + $0x110] sm:$0xff]
  %v506 = vld [vmem:[%s1 + $0x118] sm:$0xff]
  %v507 = vld [vmem:[%s1 + $0x120] sm:$0xff]
  %v508 = vld [vmem:[%s1 + $0x128] sm:$0xff]
  %v509 = vld [vmem:[%s1 + $0x130] sm:$0xff]
  %v510 = vld [vmem:[%s1 + $0x138] sm:$0xff]
  %v511 = vld [vmem:[%s1 + $0x140] sm:$0xff]
  %v512 = vld [vmem:[%s1 + $0x148] sm:$0xff]
  %v513 = vld [vmem:[%s1 + $0x150] sm:$0xff]
  %v514 = vld [vmem:[%s1 + $0x158] sm:$0xff]
  %v515 = vld [vmem:[%s1 + $0x160] sm:$0xff]
  %v516 = vld [vmem:[%s1 + $0x168] sm:$0xff]
  %v517 = vld [vmem:[%s1 + $0x170] sm:$0xff]
  %v518 = vld [vmem:[%s1 + $0x178] sm:$0xff]
  %v519 = vld [vmem:[%s1 + $0x180] sm:$0xff]
  %v520 = vld [vmem:[%s1 + $0x188] sm:$0xff]
  %v521 = vld [vmem:[%s1 + $0x190] sm:$0xff]
  %v522 = vld [vmem:[%s1 + $0x198] sm:$0xff]
  %v523 = vld [vmem:[%s1 + $0x1a0] sm:$0xff]
  %v524 = vld [vmem:[%s1 + $0x1a8] sm:$0xff]
  %v525 = vld [vmem:[%s1 + $0x1b0] sm:$0xff]
  %v526 = vld [vmem:[%s1 + $0x1b8] sm:$0xff]
  %v527 = vld [vmem:[%s1 + $0x1c0] sm:$0xff]
  %v528 = vld [vmem:[%s1 + $0x1c8] sm:$0xff]
  %v529 = vld [vmem:[%s1 + $0x1d0] sm:$0xff]
  %v530 = vld [vmem:[%s1 + $0x1d8] sm:$0xff]
  %v531 = vld [vmem:[%s1 + $0x1e0] sm:$0xff]
  %v532 = vld [vmem:[%s1 + $0x1e8] sm:$0xff]
  %v533 = vld [vmem:[%s1 + $0x1f0] sm:$0xff]
  %v534 = vld [vmem:[%s1 + $0x1f8] sm:$0xff]
  %v535 = vlaneseq
  %v536 = vshrl.u32 %v535, 7
  %v537 = vsub.s32 0, %v536
  %v538 = vrot.slane %v17, %v537
  %539 = vmatprep.subr.mxu0 0.0
  %540 = vmatpush1.msra.mxu0 %v471
  %541 = vmatprep.subr.mxu0 0.0
  %542 = vmatpush1.msra.mxu0 %v472
  %543 = vmatprep.subr.mxu0 0.0
  %544 = vmatpush1.msra.mxu0 %v473
  %545 = vmatprep.subr.mxu0 0.0
  %546 = vmatpush1.msra.mxu0 %v474
  %547 = vmatprep.subr.mxu0 0.0
  %548 = vmatpush1.msra.mxu0 %v475
  %549 = vmatprep.subr.mxu0 0.0
  %550 = vmatpush1.msra.mxu0 %v476
  %551 = vmatprep.subr.mxu0 0.0
  %552 = vmatpush1.msra.mxu0 %v477
  %553 = vmatprep.subr.mxu0 0.0
  %554 = vmatpush1.msra.mxu0 %v478
  %555 = vmatprep.subr.mxu0 0.0
  %556 = vmatpush1.msra.mxu0 %v479
  %557 = vmatprep.subr.mxu0 0.0
  %558 = vmatpush1.msra.mxu0 %v480
  %559 = vmatprep.subr.mxu0 0.0
  %560 = vmatpush1.msra.mxu0 %v481
  %561 = vmatprep.subr.mxu0 0.0
  %562 = vmatpush1.msra.mxu0 %v482
  %563 = vmatprep.subr.mxu0 0.0
  %564 = vmatpush1.msra.mxu0 %v483
  %565 = vmatprep.subr.mxu0 0.0
  %566 = vmatpush1.msra.mxu0 %v484
  %567 = vmatprep.subr.mxu0 0.0
  %568 = vmatpush1.msra.mxu0 %v485
  %569 = vmatprep.subr.mxu0 0.0
  %570 = vmatpush1.msra.mxu0 %v486
  %571 = vmatprep.subr.mxu0 0.0
  %572 = vmatpush1.msra.mxu0 %v487
  %573 = vmatprep.subr.mxu0 0.0
  %574 = vmatpush1.msra.mxu0 %v488
  %575 = vmatprep.subr.mxu0 0.0
  %576 = vmatpush1.msra.mxu0 %v489
  %577 = vmatprep.subr.mxu0 0.0
  %578 = vmatpush1.msra.mxu0 %v490
  %579 = vmatprep.subr.mxu0 0.0
  %580 = vmatpush1.msra.mxu0 %v491
  %581 = vmatprep.subr.mxu0 0.0
  %582 = vmatpush1.msra.mxu0 %v492
  %583 = vmatprep.subr.mxu0 0.0
  %584 = vmatpush1.msra.mxu0 %v493
  %585 = vmatprep.subr.mxu0 0.0
  %586 = vmatpush1.msra.mxu0 %v494
  %587 = vmatprep.subr.mxu0 0.0
  %588 = vmatpush1.msra.mxu0 %v495
  %589 = vmatprep.subr.mxu0 0.0
  %590 = vmatpush1.msra.mxu0 %v496
  %591 = vmatprep.subr.mxu0 0.0
  %592 = vmatpush1.msra.mxu0 %v497
  %593 = vmatprep.subr.mxu0 0.0
  %594 = vmatpush1.msra.mxu0 %v498
  %595 = vmatprep.subr.mxu0 0.0
  %596 = vmatpush1.msra.mxu0 %v499
  %597 = vmatprep.subr.mxu0 0.0
  %598 = vmatpush1.msra.mxu0 %v500
  %599 = vmatprep.subr.mxu0 0.0
  %600 = vmatpush1.msra.mxu0 %v501
  %601 = vmatprep.subr.mxu0 0.0
  %602 = vmatpush1.msra.mxu0 %v502
  %603 = vmatprep.mubr.f32.mxu0 %v229
  %604 = vmatmul.mubr.f32.gmra.mrb[0].mxu0 %v116
  %v605 = vpop.f32.mrb[0].mxu0
  %v606 = vadd.f32 %v538, %v605
  %v607 = vpop.f32.mrb[0].mxu0
  %608 = vmatprep.mubr.f32.mxu0 %v230
  %609 = vmatmul.mubr.f32.gmra.mrb[0].mxu0 %v117
  %v610 = vpop.f32.mrb[0].mxu0
  %v611 = vadd.f32 %v538, %v610
  %v612 = vpop.f32.mrb[0].mxu0
  %613 = vmatprep.mubr.f32.mxu0 %v231
  %614 = vmatmul.mubr.f32.gmra.mrb[0].mxu0 %v118
  %v615 = vpop.f32.mrb[0].mxu0
  %v616 = vadd.f32 %v538, %v615
  %v617 = vpop.f32.mrb[0].mxu0
  %618 = vmatprep.mubr.f32.mxu0 %v232
  %619 = vmatmul.mubr.f32.gmra.mrb[0].mxu0 %v119
  %v620 = vpop.f32.mrb[0].mxu0
  %v621 = vadd.f32 %v538, %v620
  %v622 = vpop.f32.mrb[0].mxu0
  %623 = vmatprep.mubr.f32.mxu0 %v233
  %624 = vmatmul.mubr.f32.gmra.mrb[0].mxu0 %v120
  %v625 = vpop.f32.mrb[0].mxu0
  %v626 = vadd.f32 %v538, %v625
  %v627 = vpop.f32.mrb[0].mxu0
  %628 = vmatprep.mubr.f32.mxu0 %v234
  %629 = vmatmul.mubr.f32.gmra.mrb[0].mxu0 %v121
  %v630 = vpop.f32.mrb[0].mxu0
  %v631 = vadd.f32 %v538, %v630
  %v632 = vpop.f32.mrb[0].mxu0
  %633 = vmatprep.mubr.f32.mxu0 %v235
  %634 = vmatmul.mubr.f32.gmra.mrb[0].mxu0 %v122
  %v635 = vpop.f32.mrb[0].mxu0
  %v636 = vadd.f32 %v538, %v635
  %v637 = vpop.f32.mrb[0].mxu0
  %638 = vmatprep.mubr.f32.mxu0 %v236
  %639 = vmatmul.mubr.f32.gmra.mrb[0].mxu0 %v123
  %v640 = vpop.f32.mrb[0].mxu0
  %v641 = vadd.f32 %v538, %v640
  %v642 = vpop.f32.mrb[0].mxu0
  %643 = vmatprep.mubr.f32.mxu0 %v237
  %644 = vmatmul.mubr.f32.gmra.mrb[0].mxu0 %v124
  %v645 = vpop.f32.mrb[0].mxu0
  %v646 = vadd.f32 %v538, %v645
  %v647 = vpop.f32.mrb[0].mxu0
  %648 = vmatprep.mubr.f32.mxu0 %v238
  %649 = vmatmul.mubr.f32.gmra.mrb[0].mxu0 %v125
  %v650 = vpop.f32.mrb[0].mxu0
  %v651 = vadd.f32 %v538, %v650
  %v652 = vpop.f32.mrb[0].mxu0
  %653 = vmatprep.mubr.f32.mxu0 %v239
  %654 = vmatmul.mubr.f32.gmra.mrb[0].mxu0 %v126
  %v655 = vpop.f32.mrb[0].mxu0
  %v656 = vadd.f32 %v538, %v655
  %v657 = vpop.f32.mrb[0].mxu0
  %658 = vmatprep.mubr.f32.mxu0 %v240
  %659 = vmatmul.mubr.f32.gmra.mrb[0].mxu0 %v127
  %v660 = vpop.f32.mrb[0].mxu0
  %v661 = vadd.f32 %v538, %v660
  %v662 = vpop.f32.mrb[0].mxu0
  %663 = vmatprep.mubr.f32.mxu0 %v241
  %664 = vmatmul.mubr.f32.gmra.mrb[0].mxu0 %v128
  %v665 = vpop.f32.mrb[0].mxu0
  %v666 = vadd.f32 %v538, %v665
  %v667 = vpop.f32.mrb[0].mxu0
  %668 = vmatprep.mubr.f32.mxu0 %v242
  %669 = vmatmul.mubr.f32.gmra.mrb[0].mxu0 %v129
  %v670 = vpop.f32.mrb[0].mxu0
  %v671 = vadd.f32 %v538, %v670
  %v672 = vpop.f32.mrb[0].mxu0
  %673 = vmatprep.mubr.f32.mxu0 %v243
  %674 = vmatmul.mubr.f32.gmra.mrb[0].mxu0 %v130
  %v675 = vpop.f32.mrb[0].mxu0
  %v676 = vadd.f32 %v538, %v675
  %v677 = vpop.f32.mrb[0].mxu0
  %678 = vmatprep.mubr.f32.mxu0 %v244
  %679 = vmatmul.mubr.f32.gmra.mrb[0].mxu0 %v131
  %v680 = vpop.f32.mrb[0].mxu0
  %v681 = vadd.f32 %v538, %v680
  %v682 = vpop.f32.mrb[0].mxu0
  %683 = vdwg.mxu0
  %684 = vmatprep.subr.mxu0 0.0
  %685 = vmatpush1.msra.mxu0 %v503
  %686 = vmatprep.subr.mxu0 0.0
  %687 = vmatpush1.msra.mxu0 %v504
  %688 = vmatprep.subr.mxu0 0.0
  %689 = vmatpush1.msra.mxu0 %v505
  %690 = vmatprep.subr.mxu0 0.0
  %691 = vmatpush1.msra.mxu0 %v506
  %692 = vmatprep.subr.mxu0 0.0
  %693 = vmatpush1.msra.mxu0 %v507
  %694 = vmatprep.subr.mxu0 0.0
  %695 = vmatpush1.msra.mxu0 %v508
  %696 = vmatprep.subr.mxu0 0.0
  %697 = vmatpush1.msra.mxu0 %v509
  %698 = vmatprep.subr.mxu0 0.0
  %699 = vmatpush1.msra.mxu0 %v510
  %700 = vmatprep.subr.mxu0 0.0
  %701 = vmatpush1.msra.mxu0 %v511
  %702 = vmatprep.subr.mxu0 0.0
  %703 = vmatpush1.msra.mxu0 %v512
  %704 = vmatprep.subr.mxu0 0.0
  %705 = vmatpush1.msra.mxu0 %v513
  %706 = vmatprep.subr.mxu0 0.0
  %707 = vmatpush1.msra.mxu0 %v514
  %708 = vmatprep.subr.mxu0 0.0
  %709 = vmatpush1.msra.mxu0 %v515
  %710 = vmatprep.subr.mxu0 0.0
  %711 = vmatpush1.msra.mxu0 %v516
  %712 = vmatprep.subr.mxu0 0.0
  %713 = vmatpush1.msra.mxu0 %v517
  %714 = vmatprep.subr.mxu0 0.0
  %715 = vmatpush1.msra.mxu0 %v518
  %716 = vmatprep.subr.mxu0 0.0
  %717 = vmatpush1.msra.mxu0 %v519
  %718 = vmatprep.subr.mxu0 0.0
  %719 = vmatpush1.msra.mxu0 %v520
  %720 = vmatprep.subr.mxu0 0.0
  %721 = vmatpush1.msra.mxu0 %v521
  %722 = vmatprep.subr.mxu0 0.0
  %723 = vmatpush1.msra.mxu0 %v522
  %724 = vmatprep.subr.mxu0 0.0
  %725 = vmatpush1.msra.mxu0 %v523
  %726 = vmatprep.subr.mxu0 0.0
  %727 = vmatpush1.msra.mxu0 %v524
  %728 = vmatprep.subr.mxu0 0.0
  %729 = vmatpush1.msra.mxu0 %v525
  %730 = vmatprep.subr.mxu0 0.0
  %731 = vmatpush1.msra.mxu0 %v526
  %732 = vmatprep.subr.mxu0 0.0
  %733 = vmatpush1.msra.mxu0 %v527
  %734 = vmatprep.subr.mxu0 0.0
  %735 = vmatpush1.msra.mxu0 %v528
  %736 = vmatprep.subr.mxu0 0.0
  %737 = vmatpush1.msra.mxu0 %v529
  %738 = vmatprep.subr.mxu0 0.0
  %739 = vmatpush1.msra.mxu0 %v530
  %740 = vmatprep.subr.mxu0 0.0
  %741 = vmatpush1.msra.mxu0 %v531
  %742 = vmatprep.subr.mxu0 0.0
  %743 = vmatpush1.msra.mxu0 %v532
  %744 = vmatprep.subr.mxu0 0.0
  %745 = vmatpush1.msra.mxu0 %v533
  %746 = vmatprep.subr.mxu0 0.0
  %747 = vmatpush1.msra.mxu0 %v534
  %748 = vmatprep.mubr.f32.mxu0 %v455
  %749 = vmatmul.mubr.f32.gmra.mrb[0].mxu0 %v342
  %v750 = vpop.f32.mrb[0].mxu0
  %v751 = vadd.f32 %v606, %v750
  %v752 = vpop.f32.mrb[0].mxu0
  %753 = vmatprep.mubr.f32.mxu0 %v456
  %754 = vmatmul.mubr.f32.gmra.mrb[0].mxu0 %v343
  %v755 = vpop.f32.mrb[0].mxu0
  %v756 = vadd.f32 %v611, %v755
  %v757 = vpop.f32.mrb[0].mxu0
  %758 = vmatprep.mubr.f32.mxu0 %v457
  %759 = vmatmul.mubr.f32.gmra.mrb[0].mxu0 %v344
  %v760 = vpop.f32.mrb[0].mxu0
  %v761 = vadd.f32 %v616, %v760
  %v762 = vpop.f32.mrb[0].mxu0
  %763 = vmatprep.mubr.f32.mxu0 %v458
  %764 = vmatmul.mubr.f32.gmra.mrb[0].mxu0 %v345
  %v765 = vpop.f32.mrb[0].mxu0
  %v766 = vadd.f32 %v621, %v765
  %v767 = vpop.f32.mrb[0].mxu0
  %768 = vmatprep.mubr.f32.mxu0 %v459
  %769 = vmatmul.mubr.f32.gmra.mrb[0].mxu0 %v346
  %v770 = vpop.f32.mrb[0].mxu0
  %v771 = vadd.f32 %v626, %v770
  %v772 = vpop.f32.mrb[0].mxu0
  %773 = vmatprep.mubr.f32.mxu0 %v460
  %774 = vmatmul.mubr.f32.gmra.mrb[0].mxu0 %v347
  %v775 = vpop.f32.mrb[0].mxu0
  %v776 = vadd.f32 %v631, %v775
  %v777 = vpop.f32.mrb[0].mxu0
  %778 = vmatprep.mubr.f32.mxu0 %v461
  %779 = vmatmul.mubr.f32.gmra.mrb[0].mxu0 %v348
  %v780 = vpop.f32.mrb[0].mxu0
  %v781 = vadd.f32 %v636, %v780
  %v782 = vpop.f32.mrb[0].mxu0
  %783 = vmatprep.mubr.f32.mxu0 %v462
  %784 = vmatmul.mubr.f32.gmra.mrb[0].mxu0 %v349
  %v785 = vpop.f32.mrb[0].mxu0
  %v786 = vadd.f32 %v641, %v785
  %v787 = vpop.f32.mrb[0].mxu0
  %788 = vmatprep.mubr.f32.mxu0 %v463
  %789 = vmatmul.mubr.f32.gmra.mrb[0].mxu0 %v350
  %v790 = vpop.f32.mrb[0].mxu0
  %v791 = vadd.f32 %v646, %v790
  %v792 = vpop.f32.mrb[0].mxu0
  %793 = vmatprep.mubr.f32.mxu0 %v464
  %794 = vmatmul.mubr.f32.gmra.mrb[0].mxu0 %v351
  %v795 = vpop.f32.mrb[0].mxu0
  %v796 = vadd.f32 %v651, %v795
  %v797 = vpop.f32.mrb[0].mxu0
  %798 = vmatprep.mubr.f32.mxu0 %v465
  %799 = vmatmul.mubr.f32.gmra.mrb[0].mxu0 %v352
  %v800 = vpop.f32.mrb[0].mxu0
  %v801 = vadd.f32 %v656, %v800
  %v802 = vpop.f32.mrb[0].mxu0
  %803 = vmatprep.mubr.f32.mxu0 %v466
  %804 = vmatmul.mubr.f32.gmra.mrb[0].mxu0 %v353
  %v805 = vpop.f32.mrb[0].mxu0
  %v806 = vadd.f32 %v661, %v805
  %v807 = vpop.f32.mrb[0].mxu0
  %808 = vmatprep.mubr.f32.mxu0 %v467
  %809 = vmatmul.mubr.f32.gmra.mrb[0].mxu0 %v354
  %v810 = vpop.f32.mrb[0].mxu0
  %v811 = vadd.f32 %v666, %v810
  %v812 = vpop.f32.mrb[0].mxu0
  %813 = vmatprep.mubr.f32.mxu0 %v468
  %814 = vmatmul.mubr.f32.gmra.mrb[0].mxu0 %v355
  %v815 = vpop.f32.mrb[0].mxu0
  %v816 = vadd.f32 %v671, %v815
  %v817 = vpop.f32.mrb[0].mxu0
  %818 = vmatprep.mubr.f32.mxu0 %v469
  %819 = vmatmul.mubr.f32.gmra.mrb[0].mxu0 %v356
  %v820 = vpop.f32.mrb[0].mxu0
  %v821 = vadd.f32 %v676, %v820
  %v822 = vpop.f32.mrb[0].mxu0
  %823 = vmatprep.mubr.f32.mxu0 %v470
  %824 = vmatmul.mubr.f32.gmra.mrb[0].mxu0 %v357
  %v825 = vpop.f32.mrb[0].mxu0
  %v826 = vadd.f32 %v681, %v825
  %v827 = vpop.f32.mrb[0].mxu0
  %828 = vdwg.mxu0
  %v829 = vmax.f32 %v751, 0.0
  %v830 = vmax.f32 %v756, 0.0
  %v831 = vmax.f32 %v761, 0.0
  %v832 = vmax.f32 %v766, 0.0
  %v833 = vmax.f32 %v771, 0.0
  %v834 = vmax.f32 %v776, 0.0
  %v835 = vmax.f32 %v781, 0.0
  %v836 = vmax.f32 %v786, 0.0
  %v837 = vmax.f32 %v791, 0.0
  %v838 = vmax.f32 %v796, 0.0
  %v839 = vmax.f32 %v801, 0.0
  %v840 = vmax.f32 %v806, 0.0
  %v841 = vmax.f32 %v811, 0.0
  %v842 = vmax.f32 %v816, 0.0
  %v843 = vmax.f32 %v821, 0.0
  %v844 = vmax.f32 %v826, 0.0
  %v845 = vlaneseq
  %v846 = vshrl.u32 %v845, 7
  %v847 = vadd.s32 %v846, 8
  %v848 = vadd.s32 %v846, 16
  %v849 = vadd.s32 %v846, 24
  %v850 = vadd.s32 %v846, 32
  %v851 = vadd.s32 %v846, 40
  %v852 = vadd.s32 %v846, 48
  %v853 = vadd.s32 %v846, 56
  %v854 = vadd.s32 %v846, 64
  %v855 = vadd.s32 %v846, 72
  %v856 = vadd.s32 %v846, 80
  %v857 = vadd.s32 %v846, 88
  %v858 = vadd.s32 %v846, 96
  %v859 = vadd.s32 %v846, 104
  %v860 = vadd.s32 %v846, 112
  %v861 = vadd.s32 %v846, 120
  %v862 = vand.u32 %v846, 15
  %v863 = vand.u32 %v847, 15
  %v864 = vand.u32 %v848, 15
  %v865 = vand.u32 %v849, 15
  %v866 = vand.u32 %v850, 15
  %v867 = vand.u32 %v851, 15
  %v868 = vand.u32 %v852, 15
  %v869 = vand.u32 %v853, 15
  %v870 = vand.u32 %v854, 15
  %v871 = vand.u32 %v855, 15
  %v872 = vand.u32 %v856, 15
  %v873 = vand.u32 %v857, 15
  %v874 = vand.u32 %v858, 15
  %v875 = vand.u32 %v859, 15
  %v876 = vand.u32 %v860, 15
  %v877 = vand.u32 %v861, 15
  %vm878 = vcmp.lt.s32.totalorder %v862, 13
  %vm879 = vcmp.lt.s32.totalorder %v863, 13
  %vm880 = vcmp.lt.s32.totalorder %v864, 13
  %vm881 = vcmp.lt.s32.totalorder %v865, 13
  %vm882 = vcmp.lt.s32.totalorder %v866, 13
  %vm883 = vcmp.lt.s32.totalorder %v867, 13
  %vm884 = vcmp.lt.s32.totalorder %v868, 13
  %vm885 = vcmp.lt.s32.totalorder %v869, 13
  %vm886 = vcmp.lt.s32.totalorder %v870, 13
  %vm887 = vcmp.lt.s32.totalorder %v871, 13
  %vm888 = vcmp.lt.s32.totalorder %v872, 13
  %vm889 = vcmp.lt.s32.totalorder %v873, 13
  %vm890 = vcmp.lt.s32.totalorder %v874, 13
  %vm891 = vcmp.lt.s32.totalorder %v875, 13
  %vm892 = vcmp.lt.s32.totalorder %v876, 13
  %vm893 = vcmp.lt.s32.totalorder %v877, 13
  %v894 = vsel %vm878, %v829, 0.0
  %v895 = vsel %vm879, %v830, 0.0
  %v896 = vsel %vm880, %v831, 0.0
  %v897 = vsel %vm881, %v832, 0.0
  %v898 = vsel %vm882, %v833, 0.0
  %v899 = vsel %vm883, %v834, 0.0
  %v900 = vsel %vm884, %v835, 0.0
  %v901 = vsel %vm885, %v836, 0.0
  %v902 = vsel %vm886, %v837, 0.0
  %v903 = vsel %vm887, %v838, 0.0
  %v904 = vsel %vm888, %v839, 0.0
  %v905 = vsel %vm889, %v840, 0.0
  %v906 = vsel %vm890, %v841, 0.0
  %v907 = vsel %vm891, %v842, 0.0
  %v908 = vsel %vm892, %v843, 0.0
  %v909 = vsel %vm893, %v844, 0.0
  %vm910 = vcmask 261120
  %v911 = vsel %vm910, %v894, -inf
  %v912 = vsel %vm910, %v895, -inf
  %v913 = vmax.f32 %v911, %v912
  %v914 = vrot.slane %v913, 4
  %v915 = vmax.f32 %v913, %v914
  %v916 = vrot.slane %v915, 2
  %v917 = vmax.f32 %v915, %v916
  %v918 = vrot.slane %v917, 1
  %v919 = vmax.f32 %v917, %v918
  %v920 = vsel %vm910, %v896, -inf
  %v921 = vsel %vm910, %v897, -inf
  %v922 = vmax.f32 %v920, %v921
  %v923 = vrot.slane %v922, 4
  %v924 = vmax.f32 %v922, %v923
  %v925 = vrot.slane %v924, 2
  %v926 = vmax.f32 %v924, %v925
  %v927 = vrot.slane %v926, 1
  %v928 = vmax.f32 %v926, %v927
  %v929 = vsel %vm910, %v898, -inf
  %v930 = vsel %vm910, %v899, -inf
  %v931 = vmax.f32 %v929, %v930
  %v932 = vrot.slane %v931, 4
  %v933 = vmax.f32 %v931, %v932
  %v934 = vrot.slane %v933, 2
  %v935 = vmax.f32 %v933, %v934
  %v936 = vrot.slane %v935, 1
  %v937 = vmax.f32 %v935, %v936
  %v938 = vsel %vm910, %v900, -inf
  %v939 = vsel %vm910, %v901, -inf
  %v940 = vmax.f32 %v938, %v939
  %v941 = vrot.slane %v940, 4
  %v942 = vmax.f32 %v940, %v941
  %v943 = vrot.slane %v942, 2
  %v944 = vmax.f32 %v942, %v943
  %v945 = vrot.slane %v944, 1
  %v946 = vmax.f32 %v944, %v945
  %v947 = vsel %vm910, %v902, -inf
  %v948 = vsel %vm910, %v903, -inf
  %v949 = vmax.f32 %v947, %v948
  %v950 = vrot.slane %v949, 4
  %v951 = vmax.f32 %v949, %v950
  %v952 = vrot.slane %v951, 2
  %v953 = vmax.f32 %v951, %v952
  %v954 = vrot.slane %v953, 1
  %v955 = vmax.f32 %v953, %v954
  %v956 = vsel %vm910, %v904, -inf
  %v957 = vsel %vm910, %v905, -inf
  %v958 = vmax.f32 %v956, %v957
  %v959 = vrot.slane %v958, 4
  %v960 = vmax.f32 %v958, %v959
  %v961 = vrot.slane %v960, 2
  %v962 = vmax.f32 %v960, %v961
  %v963 = vrot.slane %v962, 1
  %v964 = vmax.f32 %v962, %v963
  %v965 = vsel %vm910, %v906, -inf
  %v966 = vsel %vm910, %v907, -inf
  %v967 = vmax.f32 %v965, %v966
  %v968 = vrot.slane %v967, 4
  %v969 = vmax.f32 %v967, %v968
  %v970 = vrot.slane %v969, 2
  %v971 = vmax.f32 %v969, %v970
  %v972 = vrot.slane %v971, 1
  %v973 = vmax.f32 %v971, %v972
  %v974 = vsel %vm910, %v908, -inf
  %v975 = vsel %vm910, %v909, -inf
  %v976 = vmax.f32 %v974, %v975
  %v977 = vrot.slane %v976, 4
  %v978 = vmax.f32 %v976, %v977
  %v979 = vrot.slane %v978, 2
  %v980 = vmax.f32 %v978, %v979
  %v981 = vrot.slane %v980, 1
  %v982 = vmax.f32 %v980, %v981
  %vm983 = vcmask 1040384
  %v984 = vsel %vm983, %v919, %v928
  %vm985 = vcmask 1041408
  %v986 = vsel %vm985, %v984, %v937
  %vm987 = vcmask 1042432
  %v988 = vsel %vm987, %v986, %v946
  %vm989 = vcmask 1043456
  %v990 = vsel %vm989, %v988, %v955
  %vm991 = vcmask 1044480
  %v992 = vsel %vm991, %v990, %v964
  %vm993 = vcmask 1045504
  %v994 = vsel %vm993, %v992, %v973
  %vm995 = vcmask 1046528
  %v996 = vsel %vm995, %v994, %v982
  %v997 = vld [vmem:[%s2] sm:$0xff]
  %v998 = vld [vmem:[%s2 + $0x30] sm:$0xff]
  %v999 = vld [vmem:[%s2 + $0x60] sm:$0xff]
  %v1000 = vld [vmem:[%s2 + $0x90] sm:$0xff]
  %v1001 = vld [vmem:[%s2 + $0x8] sm:$0xff]
  %v1002 = vld [vmem:[%s2 + $0x38] sm:$0xff]
  %v1003 = vld [vmem:[%s2 + $0x68] sm:$0xff]
  %v1004 = vld [vmem:[%s2 + $0x98] sm:$0xff]
  %v1005 = vld [vmem:[%s2 + $0x10] sm:$0xff]
  %v1006 = vld [vmem:[%s2 + $0x18] sm:$0xff]
  %v1007 = vld [vmem:[%s2 + $0x40] sm:$0xff]
  %v1008 = vld [vmem:[%s2 + $0x48] sm:$0xff]
  %v1009 = vld [vmem:[%s2 + $0x70] sm:$0xff]
  %v1010 = vld [vmem:[%s2 + $0x78] sm:$0xff]
  %v1011 = vld [vmem:[%s2 + $0xa0] sm:$0xff]
  %v1012 = vld [vmem:[%s2 + $0xa8] sm:$0xff]
  %v1013 = vld [vmem:[%s2 + $0x20] sm:$0xff]
  %v1014 = vld [vmem:[%s2 + $0x50] sm:$0xff]
  %v1015 = vld [vmem:[%s2 + $0x80] sm:$0xff]
  %v1016 = vld [vmem:[%s2 + $0xb0] sm:$0xff]
  %v1017 = vld [vmem:[%s2 + $0x28] sm:$0xff]
  %v1018 = vld [vmem:[%s2 + $0x58] sm:$0xff]
  %v1019 = vld [vmem:[%s2 + $0x88] sm:$0xff]
  %v1020 = vld [vmem:[%s2 + $0xb8] sm:$0xff]
  %v1021 = vlaneseq
  %v1022 = vshrl.u32 %v1021, 7
  %v1023 = vsub.s32 1, %v1022
  %v1024 = vrot.slane %v17, %v1023
  %v1026 = vsel %vm910, %v996, 0
  %1028 = vmatprep.subr.mxu0 0.0
  %1029 = vmatpush1.msra.mxu0 %v997
  %1030 = vmatprep.subr.mxu0 0.0
  %1031 = vmatpush1.msra.mxu0 %v998
  %1032 = vmatprep.subr.mxu0 0.0
  %1033 = vmatpush1.msra.mxu0 %v999
  %1034 = vmatprep.subr.mxu0 0.0
  %1035 = vmatpush1.msra.mxu0 %v1000
  %1036 = vmatprep.subr.mxu0 0.0
  %1037 = vmatpush1.msra.mxu0 0.0
  %1038 = vmatprep.subr.mxu0 0.0
  %1039 = vmatpush1.msra.mxu0 0.0
  %1040 = vmatprep.subr.mxu0 0.0
  %1041 = vmatpush1.msra.mxu0 0.0
  %1042 = vmatprep.subr.mxu0 0.0
  %1043 = vmatpush1.msra.mxu0 0.0
  %1044 = vmatprep.subr.mxu0 0.0
  %1045 = vmatpush1.msra.mxu0 0.0
  %1046 = vmatprep.subr.mxu0 0.0
  %1047 = vmatpush1.msra.mxu0 0.0
  %1048 = vmatprep.subr.mxu0 0.0
  %1049 = vmatpush1.msra.mxu0 0.0
  %1050 = vmatprep.subr.mxu0 0.0
  %1051 = vmatpush1.msra.mxu0 0.0
  %1052 = vmatprep.subr.mxu0 0.0
  %1053 = vmatpush1.msra.mxu0 0.0
  %1054 = vmatprep.subr.mxu0 0.0
  %1055 = vmatpush1.msra.mxu0 0.0
  %1056 = vmatprep.subr.mxu0 0.0
  %1057 = vmatpush1.msra.mxu0 0.0
  %1058 = vmatprep.subr.mxu0 0.0
  %1059 = vmatpush1.msra.mxu0 0.0
  %1060 = vmatprep.subr.mxu0 0.0
  %1061 = vmatpush1.msra.mxu0 0.0
  %1062 = vmatprep.subr.mxu0 0.0
  %1063 = vmatpush1.msra.mxu0 0.0
  %1064 = vmatprep.subr.mxu0 0.0
  %1065 = vmatpush1.msra.mxu0 0.0
  %1066 = vmatprep.subr.mxu0 0.0
  %1067 = vmatpush1.msra.mxu0 0.0
  %1068 = vmatprep.subr.mxu0 0.0
  %1069 = vmatpush1.msra.mxu0 0.0
  %1070 = vmatprep.subr.mxu0 0.0
  %1071 = vmatpush1.msra.mxu0 0.0
  %1072 = vmatprep.subr.mxu0 0.0
  %1073 = vmatpush1.msra.mxu0 0.0
  %1074 = vmatprep.subr.mxu0 0.0
  %1075 = vmatpush1.msra.mxu0 0.0
  %1076 = vmatprep.subr.mxu0 0.0
  %1077 = vmatpush1.msra.mxu0 0.0
  %1078 = vmatprep.subr.mxu0 0.0
  %1079 = vmatpush1.msra.mxu0 0.0
  %1080 = vmatprep.subr.mxu0 0.0
  %1081 = vmatpush1.msra.mxu0 0.0
  %1082 = vmatprep.subr.mxu0 0.0
  %1083 = vmatpush1.msra.mxu0 0.0
  %1084 = vmatprep.subr.mxu0 0.0
  %1085 = vmatpush1.msra.mxu0 0.0
  %1086 = vmatprep.subr.mxu0 0.0
  %1087 = vmatpush1.msra.mxu0 0.0
  %1088 = vmatprep.subr.mxu0 0.0
  %1089 = vmatpush1.msra.mxu0 0.0
  %1090 = vmatprep.subr.mxu0 0.0
  %1091 = vmatpush1.msra.mxu0 0.0
  %1092 = vmatprep.mubr.f32.mxu0 0.0
  %1093 = vmatmul.mubr.f32.gmra.mrb[0].mxu0 %v1026
  %v1094 = vpop.f32.mrb[0].mxu0
  %v1095 = vadd.f32 %v1024, %v1094
  %v1096 = vpop.f32.mrb[0].mxu0
  %1097 = vdwg.mxu0
  %v1099 = vsel %vm910, 0.0, 0
  %1101 = vmatprep.subr.mxu0 0.0
  %1102 = vmatpush1.msra.mxu0 %v1001
  %1103 = vmatprep.subr.mxu0 0.0
  %1104 = vmatpush1.msra.mxu0 %v1002
  %1105 = vmatprep.subr.mxu0 0.0
  %1106 = vmatpush1.msra.mxu0 %v1003
  %1107 = vmatprep.subr.mxu0 0.0
  %1108 = vmatpush1.msra.mxu0 %v1004
  %1109 = vmatprep.subr.mxu0 0.0
  %1110 = vmatpush1.msra.mxu0 0.0
  %1111 = vmatprep.subr.mxu0 0.0
  %1112 = vmatpush1.msra.mxu0 0.0
  %1113 = vmatprep.subr.mxu0 0.0
  %1114 = vmatpush1.msra.mxu0 0.0
  %1115 = vmatprep.subr.mxu0 0.0
  %1116 = vmatpush1.msra.mxu0 0.0
  %1117 = vmatprep.subr.mxu0 0.0
  %1118 = vmatpush1.msra.mxu0 0.0
  %1119 = vmatprep.subr.mxu0 0.0
  %1120 = vmatpush1.msra.mxu0 0.0
  %1121 = vmatprep.subr.mxu0 0.0
  %1122 = vmatpush1.msra.mxu0 0.0
  %1123 = vmatprep.subr.mxu0 0.0
  %1124 = vmatpush1.msra.mxu0 0.0
  %1125 = vmatprep.subr.mxu0 0.0
  %1126 = vmatpush1.msra.mxu0 0.0
  %1127 = vmatprep.subr.mxu0 0.0
  %1128 = vmatpush1.msra.mxu0 0.0
  %1129 = vmatprep.subr.mxu0 0.0
  %1130 = vmatpush1.msra.mxu0 0.0
  %1131 = vmatprep.subr.mxu0 0.0
  %1132 = vmatpush1.msra.mxu0 0.0
  %1133 = vmatprep.subr.mxu0 0.0
  %1134 = vmatpush1.msra.mxu0 0.0
  %1135 = vmatprep.subr.mxu0 0.0
  %1136 = vmatpush1.msra.mxu0 0.0
  %1137 = vmatprep.subr.mxu0 0.0
  %1138 = vmatpush1.msra.mxu0 0.0
  %1139 = vmatprep.subr.mxu0 0.0
  %1140 = vmatpush1.msra.mxu0 0.0
  %1141 = vmatprep.subr.mxu0 0.0
  %1142 = vmatpush1.msra.mxu0 0.0
  %1143 = vmatprep.subr.mxu0 0.0
  %1144 = vmatpush1.msra.mxu0 0.0
  %1145 = vmatprep.subr.mxu0 0.0
  %1146 = vmatpush1.msra.mxu0 0.0
  %1147 = vmatprep.subr.mxu0 0.0
  %1148 = vmatpush1.msra.mxu0 0.0
  %1149 = vmatprep.subr.mxu0 0.0
  %1150 = vmatpush1.msra.mxu0 0.0
  %1151 = vmatprep.subr.mxu0 0.0
  %1152 = vmatpush1.msra.mxu0 0.0
  %1153 = vmatprep.subr.mxu0 0.0
  %1154 = vmatpush1.msra.mxu0 0.0
  %1155 = vmatprep.subr.mxu0 0.0
  %1156 = vmatpush1.msra.mxu0 0.0
  %1157 = vmatprep.subr.mxu0 0.0
  %1158 = vmatpush1.msra.mxu0 0.0
  %1159 = vmatprep.subr.mxu0 0.0
  %1160 = vmatpush1.msra.mxu0 0.0
  %1161 = vmatprep.subr.mxu0 0.0
  %1162 = vmatpush1.msra.mxu0 0.0
  %1163 = vmatprep.subr.mxu0 0.0
  %1164 = vmatpush1.msra.mxu0 0.0
  %1165 = vmatprep.mubr.f32.mxu0 0.0
  %1166 = vmatmul.mubr.f32.gmra.mrb[0].mxu0 %v1099
  %v1167 = vpop.f32.mrb[0].mxu0
  %v1168 = vadd.f32 0.0, %v1167
  %v1169 = vpop.f32.mrb[0].mxu0
  %1170 = vdwg.mxu0
  %v1171 = vadd.f32 %v1095, %v1168
  %v1172 = vxor.u32 %v1171, 2147483648
  %v1173 = vmul.f32 %v1172, 1.442695
  %v1174 = vpow.pop %v1173
  %v1175 = vadd.f32 %v1174, 1.0
  %v1176 = vrcp.pop %v1175
  %v1177 = vmul.f32 1.0, %v1176
  %v1178 = vmul.f32 %v1177, 2.0
  %v1179 = vsub.f32 %v1178, 1.0
  %v1180 = vmul.f32 %v1177, 0.0
  %1182 = vrot.lane.b32.xlu0 %v1179, 64
  %v1183 = vpop.permute.xlu0 %1182
  %v1185 = vmul.f32 %v1177, %v1183
  %1187 = vrot.lane.b32.xlu0 %v1185, 32
  %v1188 = vpop.permute.xlu0 %1187
  %v1190 = vadd.f32 %v1180, %v1188
  %v1191 = vtanh.pop %v1190
  %1193 = vrot.lane.b32.xlu0 %v1191, 64
  %v1194 = vpop.permute.xlu0 %1193
  %v1196 = vmul.f32 %v1177, %v1194
  %1198 = vrot.lane.b32.xlu0 %v1196, 32
  %v1199 = vpop.permute.xlu0 %1198
  %v1200 = vsel %vm910, %v1199, 0
  %1202 = vmatprep.subr.mxu0 0.0
  %1203 = vmatpush1.msra.mxu0 %v1001
  %1204 = vmatprep.subr.mxu0 0.0
  %1205 = vmatpush1.msra.mxu0 %v1002
  %1206 = vmatprep.subr.mxu0 0.0
  %1207 = vmatpush1.msra.mxu0 %v1003
  %1208 = vmatprep.subr.mxu0 0.0
  %1209 = vmatpush1.msra.mxu0 %v1004
  %1210 = vmatprep.subr.mxu0 0.0
  %1211 = vmatpush1.msra.mxu0 0.0
  %1212 = vmatprep.subr.mxu0 0.0
  %1213 = vmatpush1.msra.mxu0 0.0
  %1214 = vmatprep.subr.mxu0 0.0
  %1215 = vmatpush1.msra.mxu0 0.0
  %1216 = vmatprep.subr.mxu0 0.0
  %1217 = vmatpush1.msra.mxu0 0.0
  %1218 = vmatprep.subr.mxu0 0.0
  %1219 = vmatpush1.msra.mxu0 0.0
  %1220 = vmatprep.subr.mxu0 0.0
  %1221 = vmatpush1.msra.mxu0 0.0
  %1222 = vmatprep.subr.mxu0 0.0
  %1223 = vmatpush1.msra.mxu0 0.0
  %1224 = vmatprep.subr.mxu0 0.0
  %1225 = vmatpush1.msra.mxu0 0.0
  %1226 = vmatprep.subr.mxu0 0.0
  %1227 = vmatpush1.msra.mxu0 0.0
  %1228 = vmatprep.subr.mxu0 0.0
  %1229 = vmatpush1.msra.mxu0 0.0
  %1230 = vmatprep.subr.mxu0 0.0
  %1231 = vmatpush1.msra.mxu0 0.0
  %1232 = vmatprep.subr.mxu0 0.0
  %1233 = vmatpush1.msra.mxu0 0.0
  %1234 = vmatprep.subr.mxu0 0.0
  %1235 = vmatpush1.msra.mxu0 0.0
  %1236 = vmatprep.subr.mxu0 0.0
  %1237 = vmatpush1.msra.mxu0 0.0
  %1238 = vmatprep.subr.mxu0 0.0
  %1239 = vmatpush1.msra.mxu0 0.0
  %1240 = vmatprep.subr.mxu0 0.0
  %1241 = vmatpush1.msra.mxu0 0.0
  %1242 = vmatprep.subr.mxu0 0.0
  %1243 = vmatpush1.msra.mxu0 0.0
  %1244 = vmatprep.subr.mxu0 0.0
  %1245 = vmatpush1.msra.mxu0 0.0
  %1246 = vmatprep.subr.mxu0 0.0
  %1247 = vmatpush1.msra.mxu0 0.0
  %1248 = vmatprep.subr.mxu0 0.0
  %1249 = vmatpush1.msra.mxu0 0.0
  %1250 = vmatprep.subr.mxu0 0.0
  %1251 = vmatpush1.msra.mxu0 0.0
  %1252 = vmatprep.subr.mxu0 0.0
  %1253 = vmatpush1.msra.mxu0 0.0
  %1254 = vmatprep.subr.mxu0 0.0
  %1255 = vmatpush1.msra.mxu0 0.0
  %1256 = vmatprep.subr.mxu0 0.0
  %1257 = vmatpush1.msra.mxu0 0.0
  %1258 = vmatprep.subr.mxu0 0.0
  %1259 = vmatpush1.msra.mxu0 0.0
  %1260 = vmatprep.subr.mxu0 0.0
  %1261 = vmatpush1.msra.mxu0 0.0
  %1262 = vmatprep.subr.mxu0 0.0
  %1263 = vmatpush1.msra.mxu0 0.0
  %1264 = vmatprep.subr.mxu0 0.0
  %1265 = vmatpush1.msra.mxu0 0.0
  %1266 = vmatprep.mubr.f32.mxu0 0.0
  %1267 = vmatmul.mubr.f32.gmra.mrb[0].mxu0 %v1200
  %v1268 = vpop.f32.mrb[0].mxu0
  %v1269 = vadd.f32 0.0, %v1268
  %v1270 = vpop.f32.mrb[0].mxu0
  %1271 = vdwg.mxu0
  %v1272 = vadd.f32 %v1095, %v1269
  %v1273 = vxor.u32 %v1272, 2147483648
  %v1274 = vmul.f32 %v1273, 1.442695
  %v1275 = vpow.pop %v1274
  %v1276 = vadd.f32 %v1275, 1.0
  %v1277 = vrcp.pop %v1276
  %v1278 = vmul.f32 1.0, %v1277
  %v1279 = vmul.f32 %v1278, 2.0
  %v1280 = vsub.f32 %v1279, 1.0
  %v1281 = vmul.f32 %v1278, %v1190
  %1283 = vrot.lane.b32.xlu0 %v1280, 64
  %v1284 = vpop.permute.xlu0 %1283
  %v1286 = vmul.f32 %v1278, %v1284
  %1288 = vrot.lane.b32.xlu0 %v1286, 32
  %v1289 = vpop.permute.xlu0 %1288
  %v1291 = vadd.f32 %v1281, %v1289
  %v1292 = vtanh.pop %v1291
  %1294 = vrot.lane.b32.xlu0 %v1292, 64
  %v1295 = vpop.permute.xlu0 %1294
  %v1297 = vmul.f32 %v1278, %v1295
  %1299 = vrot.lane.b32.xlu0 %v1297, 32
  %v1300 = vpop.permute.xlu0 %1299
  %v1301 = vsel %vm910, %v1300, 0
  %1303 = vmatprep.subr.mxu0 0.0
  %1304 = vmatpush1.msra.mxu0 %v1001
  %1305 = vmatprep.subr.mxu0 0.0
  %1306 = vmatpush1.msra.mxu0 %v1002
  %1307 = vmatprep.subr.mxu0 0.0
  %1308 = vmatpush1.msra.mxu0 %v1003
  %1309 = vmatprep.subr.mxu0 0.0
  %1310 = vmatpush1.msra.mxu0 %v1004
  %1311 = vmatprep.subr.mxu0 0.0
  %1312 = vmatpush1.msra.mxu0 0.0
  %1313 = vmatprep.subr.mxu0 0.0
  %1314 = vmatpush1.msra.mxu0 0.0
  %1315 = vmatprep.subr.mxu0 0.0
  %1316 = vmatpush1.msra.mxu0 0.0
  %1317 = vmatprep.subr.mxu0 0.0
  %1318 = vmatpush1.msra.mxu0 0.0
  %1319 = vmatprep.subr.mxu0 0.0
  %1320 = vmatpush1.msra.mxu0 0.0
  %1321 = vmatprep.subr.mxu0 0.0
  %1322 = vmatpush1.msra.mxu0 0.0
  %1323 = vmatprep.subr.mxu0 0.0
  %1324 = vmatpush1.msra.mxu0 0.0
  %1325 = vmatprep.subr.mxu0 0.0
  %1326 = vmatpush1.msra.mxu0 0.0
  %1327 = vmatprep.subr.mxu0 0.0
  %1328 = vmatpush1.msra.mxu0 0.0
  %1329 = vmatprep.subr.mxu0 0.0
  %1330 = vmatpush1.msra.mxu0 0.0
  %1331 = vmatprep.subr.mxu0 0.0
  %1332 = vmatpush1.msra.mxu0 0.0
  %1333 = vmatprep.subr.mxu0 0.0
  %1334 = vmatpush1.msra.mxu0 0.0
  %1335 = vmatprep.subr.mxu0 0.0
  %1336 = vmatpush1.msra.mxu0 0.0
  %1337 = vmatprep.subr.mxu0 0.0
  %1338 = vmatpush1.msra.mxu0 0.0
  %1339 = vmatprep.subr.mxu0 0.0
  %1340 = vmatpush1.msra.mxu0 0.0
  %1341 = vmatprep.subr.mxu0 0.0
  %1342 = vmatpush1.msra.mxu0 0.0
  %1343 = vmatprep.subr.mxu0 0.0
  %1344 = vmatpush1.msra.mxu0 0.0
  %1345 = vmatprep.subr.mxu0 0.0
  %1346 = vmatpush1.msra.mxu0 0.0
  %1347 = vmatprep.subr.mxu0 0.0
  %1348 = vmatpush1.msra.mxu0 0.0
  %1349 = vmatprep.subr.mxu0 0.0
  %1350 = vmatpush1.msra.mxu0 0.0
  %1351 = vmatprep.subr.mxu0 0.0
  %1352 = vmatpush1.msra.mxu0 0.0
  %1353 = vmatprep.subr.mxu0 0.0
  %1354 = vmatpush1.msra.mxu0 0.0
  %1355 = vmatprep.subr.mxu0 0.0
  %1356 = vmatpush1.msra.mxu0 0.0
  %1357 = vmatprep.subr.mxu0 0.0
  %1358 = vmatpush1.msra.mxu0 0.0
  %1359 = vmatprep.subr.mxu0 0.0
  %1360 = vmatpush1.msra.mxu0 0.0
  %1361 = vmatprep.subr.mxu0 0.0
  %1362 = vmatpush1.msra.mxu0 0.0
  %1363 = vmatprep.subr.mxu0 0.0
  %1364 = vmatpush1.msra.mxu0 0.0
  %1365 = vmatprep.subr.mxu0 0.0
  %1366 = vmatpush1.msra.mxu0 0.0
  %1367 = vmatprep.mubr.f32.mxu0 0.0
  %1368 = vmatmul.mubr.f32.gmra.mrb[0].mxu0 %v1301
  %v1369 = vpop.f32.mrb[0].mxu0
  %v1370 = vadd.f32 0.0, %v1369
  %v1371 = vpop.f32.mrb[0].mxu0
  %1372 = vdwg.mxu0
  %v1373 = vadd.f32 %v1095, %v1370
  %v1374 = vxor.u32 %v1373, 2147483648
  %v1375 = vmul.f32 %v1374, 1.442695
  %v1376 = vpow.pop %v1375
  %v1377 = vadd.f32 %v1376, 1.0
  %v1378 = vrcp.pop %v1377
  %v1379 = vmul.f32 1.0, %v1378
  %v1380 = vmul.f32 %v1379, 2.0
  %v1381 = vsub.f32 %v1380, 1.0
  %v1382 = vmul.f32 %v1379, %v1291
  %1384 = vrot.lane.b32.xlu0 %v1381, 64
  %v1385 = vpop.permute.xlu0 %1384
  %v1387 = vmul.f32 %v1379, %v1385
  %1389 = vrot.lane.b32.xlu0 %v1387, 32
  %v1390 = vpop.permute.xlu0 %1389
  %v1392 = vadd.f32 %v1382, %v1390
  %v1393 = vtanh.pop %v1392
  %1395 = vrot.lane.b32.xlu0 %v1393, 64
  %v1396 = vpop.permute.xlu0 %1395
  %v1398 = vmul.f32 %v1379, %v1396
  %1400 = vrot.lane.b32.xlu0 %v1398, 32
  %v1401 = vpop.permute.xlu0 %1400
  %v1402 = vsel %vm910, %v1401, 0
  %1404 = vmatprep.subr.mxu0 0.0
  %1405 = vmatpush1.msra.mxu0 %v1001
  %1406 = vmatprep.subr.mxu0 0.0
  %1407 = vmatpush1.msra.mxu0 %v1002
  %1408 = vmatprep.subr.mxu0 0.0
  %1409 = vmatpush1.msra.mxu0 %v1003
  %1410 = vmatprep.subr.mxu0 0.0
  %1411 = vmatpush1.msra.mxu0 %v1004
  %1412 = vmatprep.subr.mxu0 0.0
  %1413 = vmatpush1.msra.mxu0 0.0
  %1414 = vmatprep.subr.mxu0 0.0
  %1415 = vmatpush1.msra.mxu0 0.0
  %1416 = vmatprep.subr.mxu0 0.0
  %1417 = vmatpush1.msra.mxu0 0.0
  %1418 = vmatprep.subr.mxu0 0.0
  %1419 = vmatpush1.msra.mxu0 0.0
  %1420 = vmatprep.subr.mxu0 0.0
  %1421 = vmatpush1.msra.mxu0 0.0
  %1422 = vmatprep.subr.mxu0 0.0
  %1423 = vmatpush1.msra.mxu0 0.0
  %1424 = vmatprep.subr.mxu0 0.0
  %1425 = vmatpush1.msra.mxu0 0.0
  %1426 = vmatprep.subr.mxu0 0.0
  %1427 = vmatpush1.msra.mxu0 0.0
  %1428 = vmatprep.subr.mxu0 0.0
  %1429 = vmatpush1.msra.mxu0 0.0
  %1430 = vmatprep.subr.mxu0 0.0
  %1431 = vmatpush1.msra.mxu0 0.0
  %1432 = vmatprep.subr.mxu0 0.0
  %1433 = vmatpush1.msra.mxu0 0.0
  %1434 = vmatprep.subr.mxu0 0.0
  %1435 = vmatpush1.msra.mxu0 0.0
  %1436 = vmatprep.subr.mxu0 0.0
  %1437 = vmatpush1.msra.mxu0 0.0
  %1438 = vmatprep.subr.mxu0 0.0
  %1439 = vmatpush1.msra.mxu0 0.0
  %1440 = vmatprep.subr.mxu0 0.0
  %1441 = vmatpush1.msra.mxu0 0.0
  %1442 = vmatprep.subr.mxu0 0.0
  %1443 = vmatpush1.msra.mxu0 0.0
  %1444 = vmatprep.subr.mxu0 0.0
  %1445 = vmatpush1.msra.mxu0 0.0
  %1446 = vmatprep.subr.mxu0 0.0
  %1447 = vmatpush1.msra.mxu0 0.0
  %1448 = vmatprep.subr.mxu0 0.0
  %1449 = vmatpush1.msra.mxu0 0.0
  %1450 = vmatprep.subr.mxu0 0.0
  %1451 = vmatpush1.msra.mxu0 0.0
  %1452 = vmatprep.subr.mxu0 0.0
  %1453 = vmatpush1.msra.mxu0 0.0
  %1454 = vmatprep.subr.mxu0 0.0
  %1455 = vmatpush1.msra.mxu0 0.0
  %1456 = vmatprep.subr.mxu0 0.0
  %1457 = vmatpush1.msra.mxu0 0.0
  %1458 = vmatprep.subr.mxu0 0.0
  %1459 = vmatpush1.msra.mxu0 0.0
  %1460 = vmatprep.subr.mxu0 0.0
  %1461 = vmatpush1.msra.mxu0 0.0
  %1462 = vmatprep.subr.mxu0 0.0
  %1463 = vmatpush1.msra.mxu0 0.0
  %1464 = vmatprep.subr.mxu0 0.0
  %1465 = vmatpush1.msra.mxu0 0.0
  %1466 = vmatprep.subr.mxu0 0.0
  %1467 = vmatpush1.msra.mxu0 0.0
  %1468 = vmatprep.mubr.f32.mxu0 0.0
  %1469 = vmatmul.mubr.f32.gmra.mrb[0].mxu0 %v1402
  %v1470 = vpop.f32.mrb[0].mxu0
  %v1471 = vadd.f32 0.0, %v1470
  %v1472 = vpop.f32.mrb[0].mxu0
  %1473 = vdwg.mxu0
  %v1474 = vadd.f32 %v1095, %v1471
  %v1475 = vxor.u32 %v1474, 2147483648
  %v1476 = vmul.f32 %v1475, 1.442695
  %v1477 = vpow.pop %v1476
  %v1478 = vadd.f32 %v1477, 1.0
  %v1479 = vrcp.pop %v1478
  %v1480 = vmul.f32 1.0, %v1479
  %v1481 = vmul.f32 %v1480, 2.0
  %v1482 = vsub.f32 %v1481, 1.0
  %v1483 = vmul.f32 %v1480, %v1392
  %1485 = vrot.lane.b32.xlu0 %v1482, 64
  %v1486 = vpop.permute.xlu0 %1485
  %v1488 = vmul.f32 %v1480, %v1486
  %1490 = vrot.lane.b32.xlu0 %v1488, 32
  %v1491 = vpop.permute.xlu0 %1490
  %v1493 = vadd.f32 %v1483, %v1491
  %v1494 = vtanh.pop %v1493
  %1496 = vrot.lane.b32.xlu0 %v1494, 64
  %v1497 = vpop.permute.xlu0 %1496
  %v1499 = vmul.f32 %v1480, %v1497
  %1501 = vrot.lane.b32.xlu0 %v1499, 32
  %v1502 = vpop.permute.xlu0 %1501
  %v1503 = vsel %vm910, %v1502, 0
  %1505 = vmatprep.subr.mxu0 0.0
  %1506 = vmatpush1.msra.mxu0 %v1001
  %1507 = vmatprep.subr.mxu0 0.0
  %1508 = vmatpush1.msra.mxu0 %v1002
  %1509 = vmatprep.subr.mxu0 0.0
  %1510 = vmatpush1.msra.mxu0 %v1003
  %1511 = vmatprep.subr.mxu0 0.0
  %1512 = vmatpush1.msra.mxu0 %v1004
  %1513 = vmatprep.subr.mxu0 0.0
  %1514 = vmatpush1.msra.mxu0 0.0
  %1515 = vmatprep.subr.mxu0 0.0
  %1516 = vmatpush1.msra.mxu0 0.0
  %1517 = vmatprep.subr.mxu0 0.0
  %1518 = vmatpush1.msra.mxu0 0.0
  %1519 = vmatprep.subr.mxu0 0.0
  %1520 = vmatpush1.msra.mxu0 0.0
  %1521 = vmatprep.subr.mxu0 0.0
  %1522 = vmatpush1.msra.mxu0 0.0
  %1523 = vmatprep.subr.mxu0 0.0
  %1524 = vmatpush1.msra.mxu0 0.0
  %1525 = vmatprep.subr.mxu0 0.0
  %1526 = vmatpush1.msra.mxu0 0.0
  %1527 = vmatprep.subr.mxu0 0.0
  %1528 = vmatpush1.msra.mxu0 0.0
  %1529 = vmatprep.subr.mxu0 0.0
  %1530 = vmatpush1.msra.mxu0 0.0
  %1531 = vmatprep.subr.mxu0 0.0
  %1532 = vmatpush1.msra.mxu0 0.0
  %1533 = vmatprep.subr.mxu0 0.0
  %1534 = vmatpush1.msra.mxu0 0.0
  %1535 = vmatprep.subr.mxu0 0.0
  %1536 = vmatpush1.msra.mxu0 0.0
  %1537 = vmatprep.subr.mxu0 0.0
  %1538 = vmatpush1.msra.mxu0 0.0
  %1539 = vmatprep.subr.mxu0 0.0
  %1540 = vmatpush1.msra.mxu0 0.0
  %1541 = vmatprep.subr.mxu0 0.0
  %1542 = vmatpush1.msra.mxu0 0.0
  %1543 = vmatprep.subr.mxu0 0.0
  %1544 = vmatpush1.msra.mxu0 0.0
  %1545 = vmatprep.subr.mxu0 0.0
  %1546 = vmatpush1.msra.mxu0 0.0
  %1547 = vmatprep.subr.mxu0 0.0
  %1548 = vmatpush1.msra.mxu0 0.0
  %1549 = vmatprep.subr.mxu0 0.0
  %1550 = vmatpush1.msra.mxu0 0.0
  %1551 = vmatprep.subr.mxu0 0.0
  %1552 = vmatpush1.msra.mxu0 0.0
  %1553 = vmatprep.subr.mxu0 0.0
  %1554 = vmatpush1.msra.mxu0 0.0
  %1555 = vmatprep.subr.mxu0 0.0
  %1556 = vmatpush1.msra.mxu0 0.0
  %1557 = vmatprep.subr.mxu0 0.0
  %1558 = vmatpush1.msra.mxu0 0.0
  %1559 = vmatprep.subr.mxu0 0.0
  %1560 = vmatpush1.msra.mxu0 0.0
  %1561 = vmatprep.subr.mxu0 0.0
  %1562 = vmatpush1.msra.mxu0 0.0
  %1563 = vmatprep.subr.mxu0 0.0
  %1564 = vmatpush1.msra.mxu0 0.0
  %1565 = vmatprep.subr.mxu0 0.0
  %1566 = vmatpush1.msra.mxu0 0.0
  %1567 = vmatprep.subr.mxu0 0.0
  %1568 = vmatpush1.msra.mxu0 0.0
  %1569 = vmatprep.mubr.f32.mxu0 0.0
  %1570 = vmatmul.mubr.f32.gmra.mrb[0].mxu0 %v1503
  %v1571 = vpop.f32.mrb[0].mxu0
  %v1572 = vadd.f32 0.0, %v1571
  %v1573 = vpop.f32.mrb[0].mxu0
  %1574 = vdwg.mxu0
  %v1575 = vadd.f32 %v1095, %v1572
  %v1576 = vxor.u32 %v1575, 2147483648
  %v1577 = vmul.f32 %v1576, 1.442695
  %v1578 = vpow.pop %v1577
  %v1579 = vadd.f32 %v1578, 1.0
  %v1580 = vrcp.pop %v1579
  %v1581 = vmul.f32 1.0, %v1580
  %v1582 = vmul.f32 %v1581, 2.0
  %v1583 = vsub.f32 %v1582, 1.0
  %v1584 = vmul.f32 %v1581, %v1493
  %1586 = vrot.lane.b32.xlu0 %v1583, 64
  %v1587 = vpop.permute.xlu0 %1586
  %v1589 = vmul.f32 %v1581, %v1587
  %1591 = vrot.lane.b32.xlu0 %v1589, 32
  %v1592 = vpop.permute.xlu0 %1591
  %v1594 = vadd.f32 %v1584, %v1592
  %v1595 = vtanh.pop %v1594
  %1597 = vrot.lane.b32.xlu0 %v1595, 64
  %v1598 = vpop.permute.xlu0 %1597
  %v1600 = vmul.f32 %v1581, %v1598
  %1602 = vrot.lane.b32.xlu0 %v1600, 32
  %v1603 = vpop.permute.xlu0 %1602
  %v1604 = vsel %vm910, %v1603, 0
  %1606 = vmatprep.subr.mxu0 0.0
  %1607 = vmatpush1.msra.mxu0 %v1001
  %1608 = vmatprep.subr.mxu0 0.0
  %1609 = vmatpush1.msra.mxu0 %v1002
  %1610 = vmatprep.subr.mxu0 0.0
  %1611 = vmatpush1.msra.mxu0 %v1003
  %1612 = vmatprep.subr.mxu0 0.0
  %1613 = vmatpush1.msra.mxu0 %v1004
  %1614 = vmatprep.subr.mxu0 0.0
  %1615 = vmatpush1.msra.mxu0 0.0
  %1616 = vmatprep.subr.mxu0 0.0
  %1617 = vmatpush1.msra.mxu0 0.0
  %1618 = vmatprep.subr.mxu0 0.0
  %1619 = vmatpush1.msra.mxu0 0.0
  %1620 = vmatprep.subr.mxu0 0.0
  %1621 = vmatpush1.msra.mxu0 0.0
  %1622 = vmatprep.subr.mxu0 0.0
  %1623 = vmatpush1.msra.mxu0 0.0
  %1624 = vmatprep.subr.mxu0 0.0
  %1625 = vmatpush1.msra.mxu0 0.0
  %1626 = vmatprep.subr.mxu0 0.0
  %1627 = vmatpush1.msra.mxu0 0.0
  %1628 = vmatprep.subr.mxu0 0.0
  %1629 = vmatpush1.msra.mxu0 0.0
  %1630 = vmatprep.subr.mxu0 0.0
  %1631 = vmatpush1.msra.mxu0 0.0
  %1632 = vmatprep.subr.mxu0 0.0
  %1633 = vmatpush1.msra.mxu0 0.0
  %1634 = vmatprep.subr.mxu0 0.0
  %1635 = vmatpush1.msra.mxu0 0.0
  %1636 = vmatprep.subr.mxu0 0.0
  %1637 = vmatpush1.msra.mxu0 0.0
  %1638 = vmatprep.subr.mxu0 0.0
  %1639 = vmatpush1.msra.mxu0 0.0
  %1640 = vmatprep.subr.mxu0 0.0
  %1641 = vmatpush1.msra.mxu0 0.0
  %1642 = vmatprep.subr.mxu0 0.0
  %1643 = vmatpush1.msra.mxu0 0.0
  %1644 = vmatprep.subr.mxu0 0.0
  %1645 = vmatpush1.msra.mxu0 0.0
  %1646 = vmatprep.subr.mxu0 0.0
  %1647 = vmatpush1.msra.mxu0 0.0
  %1648 = vmatprep.subr.mxu0 0.0
  %1649 = vmatpush1.msra.mxu0 0.0
  %1650 = vmatprep.subr.mxu0 0.0
  %1651 = vmatpush1.msra.mxu0 0.0
  %1652 = vmatprep.subr.mxu0 0.0
  %1653 = vmatpush1.msra.mxu0 0.0
  %1654 = vmatprep.subr.mxu0 0.0
  %1655 = vmatpush1.msra.mxu0 0.0
  %1656 = vmatprep.subr.mxu0 0.0
  %1657 = vmatpush1.msra.mxu0 0.0
  %1658 = vmatprep.subr.mxu0 0.0
  %1659 = vmatpush1.msra.mxu0 0.0
  %1660 = vmatprep.subr.mxu0 0.0
  %1661 = vmatpush1.msra.mxu0 0.0
  %1662 = vmatprep.subr.mxu0 0.0
  %1663 = vmatpush1.msra.mxu0 0.0
  %1664 = vmatprep.subr.mxu0 0.0
  %1665 = vmatpush1.msra.mxu0 0.0
  %1666 = vmatprep.subr.mxu0 0.0
  %1667 = vmatpush1.msra.mxu0 0.0
  %1668 = vmatprep.subr.mxu0 0.0
  %1669 = vmatpush1.msra.mxu0 0.0
  %1670 = vmatprep.mubr.f32.mxu0 0.0
  %1671 = vmatmul.mubr.f32.gmra.mrb[0].mxu0 %v1604
  %v1672 = vpop.f32.mrb[0].mxu0
  %v1673 = vadd.f32 0.0, %v1672
  %v1674 = vpop.f32.mrb[0].mxu0
  %1675 = vdwg.mxu0
  %v1676 = vadd.f32 %v1095, %v1673
  %v1677 = vxor.u32 %v1676, 2147483648
  %v1678 = vmul.f32 %v1677, 1.442695
  %v1679 = vpow.pop %v1678
  %v1680 = vadd.f32 %v1679, 1.0
  %v1681 = vrcp.pop %v1680
  %v1682 = vmul.f32 1.0, %v1681
  %v1683 = vmul.f32 %v1682, 2.0
  %v1684 = vsub.f32 %v1683, 1.0
  %v1685 = vmul.f32 %v1682, %v1594
  %1687 = vrot.lane.b32.xlu0 %v1684, 64
  %v1688 = vpop.permute.xlu0 %1687
  %v1690 = vmul.f32 %v1682, %v1688
  %1692 = vrot.lane.b32.xlu0 %v1690, 32
  %v1693 = vpop.permute.xlu0 %1692
  %v1695 = vadd.f32 %v1685, %v1693
  %v1696 = vtanh.pop %v1695
  %1698 = vrot.lane.b32.xlu0 %v1696, 64
  %v1699 = vpop.permute.xlu0 %1698
  %v1701 = vmul.f32 %v1682, %v1699
  %1703 = vrot.lane.b32.xlu0 %v1701, 32
  %v1704 = vpop.permute.xlu0 %1703
  %v1705 = vsel %vm910, %v1704, 0
  %1707 = vmatprep.subr.mxu0 0.0
  %1708 = vmatpush1.msra.mxu0 %v1001
  %1709 = vmatprep.subr.mxu0 0.0
  %1710 = vmatpush1.msra.mxu0 %v1002
  %1711 = vmatprep.subr.mxu0 0.0
  %1712 = vmatpush1.msra.mxu0 %v1003
  %1713 = vmatprep.subr.mxu0 0.0
  %1714 = vmatpush1.msra.mxu0 %v1004
  %1715 = vmatprep.subr.mxu0 0.0
  %1716 = vmatpush1.msra.mxu0 0.0
  %1717 = vmatprep.subr.mxu0 0.0
  %1718 = vmatpush1.msra.mxu0 0.0
  %1719 = vmatprep.subr.mxu0 0.0
  %1720 = vmatpush1.msra.mxu0 0.0
  %1721 = vmatprep.subr.mxu0 0.0
  %1722 = vmatpush1.msra.mxu0 0.0
  %1723 = vmatprep.subr.mxu0 0.0
  %1724 = vmatpush1.msra.mxu0 0.0
  %1725 = vmatprep.subr.mxu0 0.0
  %1726 = vmatpush1.msra.mxu0 0.0
  %1727 = vmatprep.subr.mxu0 0.0
  %1728 = vmatpush1.msra.mxu0 0.0
  %1729 = vmatprep.subr.mxu0 0.0
  %1730 = vmatpush1.msra.mxu0 0.0
  %1731 = vmatprep.subr.mxu0 0.0
  %1732 = vmatpush1.msra.mxu0 0.0
  %1733 = vmatprep.subr.mxu0 0.0
  %1734 = vmatpush1.msra.mxu0 0.0
  %1735 = vmatprep.subr.mxu0 0.0
  %1736 = vmatpush1.msra.mxu0 0.0
  %1737 = vmatprep.subr.mxu0 0.0
  %1738 = vmatpush1.msra.mxu0 0.0
  %1739 = vmatprep.subr.mxu0 0.0
  %1740 = vmatpush1.msra.mxu0 0.0
  %1741 = vmatprep.subr.mxu0 0.0
  %1742 = vmatpush1.msra.mxu0 0.0
  %1743 = vmatprep.subr.mxu0 0.0
  %1744 = vmatpush1.msra.mxu0 0.0
  %1745 = vmatprep.subr.mxu0 0.0
  %1746 = vmatpush1.msra.mxu0 0.0
  %1747 = vmatprep.subr.mxu0 0.0
  %1748 = vmatpush1.msra.mxu0 0.0
  %1749 = vmatprep.subr.mxu0 0.0
  %1750 = vmatpush1.msra.mxu0 0.0
  %1751 = vmatprep.subr.mxu0 0.0
  %1752 = vmatpush1.msra.mxu0 0.0
  %1753 = vmatprep.subr.mxu0 0.0
  %1754 = vmatpush1.msra.mxu0 0.0
  %1755 = vmatprep.subr.mxu0 0.0
  %1756 = vmatpush1.msra.mxu0 0.0
  %1757 = vmatprep.subr.mxu0 0.0
  %1758 = vmatpush1.msra.mxu0 0.0
  %1759 = vmatprep.subr.mxu0 0.0
  %1760 = vmatpush1.msra.mxu0 0.0
  %1761 = vmatprep.subr.mxu0 0.0
  %1762 = vmatpush1.msra.mxu0 0.0
  %1763 = vmatprep.subr.mxu0 0.0
  %1764 = vmatpush1.msra.mxu0 0.0
  %1765 = vmatprep.subr.mxu0 0.0
  %1766 = vmatpush1.msra.mxu0 0.0
  %1767 = vmatprep.subr.mxu0 0.0
  %1768 = vmatpush1.msra.mxu0 0.0
  %1769 = vmatprep.subr.mxu0 0.0
  %1770 = vmatpush1.msra.mxu0 0.0
  %1771 = vmatprep.mubr.f32.mxu0 0.0
  %1772 = vmatmul.mubr.f32.gmra.mrb[0].mxu0 %v1705
  %v1773 = vpop.f32.mrb[0].mxu0
  %v1774 = vadd.f32 0.0, %v1773
  %v1775 = vpop.f32.mrb[0].mxu0
  %1776 = vdwg.mxu0
  %v1777 = vadd.f32 %v1095, %v1774
  %v1778 = vxor.u32 %v1777, 2147483648
  %v1779 = vmul.f32 %v1778, 1.442695
  %v1780 = vpow.pop %v1779
  %v1781 = vadd.f32 %v1780, 1.0
  %v1782 = vrcp.pop %v1781
  %v1783 = vmul.f32 1.0, %v1782
  %v1784 = vmul.f32 %v1783, 2.0
  %v1785 = vsub.f32 %v1784, 1.0
  %v1786 = vmul.f32 %v1783, %v1695
  %1788 = vrot.lane.b32.xlu0 %v1785, 64
  %v1789 = vpop.permute.xlu0 %1788
  %v1791 = vmul.f32 %v1783, %v1789
  %1793 = vrot.lane.b32.xlu0 %v1791, 32
  %v1794 = vpop.permute.xlu0 %1793
  %v1796 = vadd.f32 %v1786, %v1794
  %v1797 = vtanh.pop %v1796
  %1799 = vrot.lane.b32.xlu0 %v1797, 64
  %v1800 = vpop.permute.xlu0 %1799
  %v1802 = vmul.f32 %v1783, %v1800
  %1804 = vrot.lane.b32.xlu0 %v1802, 32
  %v1805 = vpop.permute.xlu0 %1804
  %v1806 = vsel %vm910, %v1805, 0
  %1808 = vmatprep.subr.mxu0 0.0
  %1809 = vmatpush1.msra.mxu0 %v1001
  %1810 = vmatprep.subr.mxu0 0.0
  %1811 = vmatpush1.msra.mxu0 %v1002
  %1812 = vmatprep.subr.mxu0 0.0
  %1813 = vmatpush1.msra.mxu0 %v1003
  %1814 = vmatprep.subr.mxu0 0.0
  %1815 = vmatpush1.msra.mxu0 %v1004
  %1816 = vmatprep.subr.mxu0 0.0
  %1817 = vmatpush1.msra.mxu0 0.0
  %1818 = vmatprep.subr.mxu0 0.0
  %1819 = vmatpush1.msra.mxu0 0.0
  %1820 = vmatprep.subr.mxu0 0.0
  %1821 = vmatpush1.msra.mxu0 0.0
  %1822 = vmatprep.subr.mxu0 0.0
  %1823 = vmatpush1.msra.mxu0 0.0
  %1824 = vmatprep.subr.mxu0 0.0
  %1825 = vmatpush1.msra.mxu0 0.0
  %1826 = vmatprep.subr.mxu0 0.0
  %1827 = vmatpush1.msra.mxu0 0.0
  %1828 = vmatprep.subr.mxu0 0.0
  %1829 = vmatpush1.msra.mxu0 0.0
  %1830 = vmatprep.subr.mxu0 0.0
  %1831 = vmatpush1.msra.mxu0 0.0
  %1832 = vmatprep.subr.mxu0 0.0
  %1833 = vmatpush1.msra.mxu0 0.0
  %1834 = vmatprep.subr.mxu0 0.0
  %1835 = vmatpush1.msra.mxu0 0.0
  %1836 = vmatprep.subr.mxu0 0.0
  %1837 = vmatpush1.msra.mxu0 0.0
  %1838 = vmatprep.subr.mxu0 0.0
  %1839 = vmatpush1.msra.mxu0 0.0
  %1840 = vmatprep.subr.mxu0 0.0
  %1841 = vmatpush1.msra.mxu0 0.0
  %1842 = vmatprep.subr.mxu0 0.0
  %1843 = vmatpush1.msra.mxu0 0.0
  %1844 = vmatprep.subr.mxu0 0.0
  %1845 = vmatpush1.msra.mxu0 0.0
  %1846 = vmatprep.subr.mxu0 0.0
  %1847 = vmatpush1.msra.mxu0 0.0
  %1848 = vmatprep.subr.mxu0 0.0
  %1849 = vmatpush1.msra.mxu0 0.0
  %1850 = vmatprep.subr.mxu0 0.0
  %1851 = vmatpush1.msra.mxu0 0.0
  %1852 = vmatprep.subr.mxu0 0.0
  %1853 = vmatpush1.msra.mxu0 0.0
  %1854 = vmatprep.subr.mxu0 0.0
  %1855 = vmatpush1.msra.mxu0 0.0
  %1856 = vmatprep.subr.mxu0 0.0
  %1857 = vmatpush1.msra.mxu0 0.0
  %1858 = vmatprep.subr.mxu0 0.0
  %1859 = vmatpush1.msra.mxu0 0.0
  %1860 = vmatprep.subr.mxu0 0.0
  %1861 = vmatpush1.msra.mxu0 0.0
  %1862 = vmatprep.subr.mxu0 0.0
  %1863 = vmatpush1.msra.mxu0 0.0
  %1864 = vmatprep.subr.mxu0 0.0
  %1865 = vmatpush1.msra.mxu0 0.0
  %1866 = vmatprep.subr.mxu0 0.0
  %1867 = vmatpush1.msra.mxu0 0.0
  %1868 = vmatprep.subr.mxu0 0.0
  %1869 = vmatpush1.msra.mxu0 0.0
  %1870 = vmatprep.subr.mxu0 0.0
  %1871 = vmatpush1.msra.mxu0 0.0
  %1872 = vmatprep.mubr.f32.mxu0 0.0
  %1873 = vmatmul.mubr.f32.gmra.mrb[0].mxu0 %v1806
  %v1874 = vpop.f32.mrb[0].mxu0
  %v1875 = vadd.f32 0.0, %v1874
  %v1876 = vpop.f32.mrb[0].mxu0
  %1877 = vdwg.mxu0
  %v1878 = vadd.f32 %v1095, %v1875
  %v1879 = vxor.u32 %v1878, 2147483648
  %v1880 = vmul.f32 %v1879, 1.442695
  %v1881 = vpow.pop %v1880
  %v1882 = vadd.f32 %v1881, 1.0
  %v1883 = vrcp.pop %v1882
  %v1884 = vmul.f32 1.0, %v1883
  %v1885 = vmul.f32 %v1884, 2.0
  %v1886 = vsub.f32 %v1885, 1.0
  %v1887 = vmul.f32 %v1884, %v1796
  %1889 = vrot.lane.b32.xlu0 %v1886, 64
  %v1890 = vpop.permute.xlu0 %1889
  %v1892 = vmul.f32 %v1884, %v1890
  %1894 = vrot.lane.b32.xlu0 %v1892, 32
  %v1895 = vpop.permute.xlu0 %1894
  %v1897 = vadd.f32 %v1887, %v1895
  %v1898 = vtanh.pop %v1897
  %1900 = vrot.lane.b32.xlu0 %v1898, 64
  %v1901 = vpop.permute.xlu0 %1900
  %v1903 = vmul.f32 %v1884, %v1901
  %1905 = vrot.lane.b32.xlu0 %v1903, 32
  %v1906 = vpop.permute.xlu0 %1905
  %v1907 = vsel %vm910, %v1906, 0
  %1909 = vmatprep.subr.mxu0 0.0
  %1910 = vmatpush1.msra.mxu0 %v1001
  %1911 = vmatprep.subr.mxu0 0.0
  %1912 = vmatpush1.msra.mxu0 %v1002
  %1913 = vmatprep.subr.mxu0 0.0
  %1914 = vmatpush1.msra.mxu0 %v1003
  %1915 = vmatprep.subr.mxu0 0.0
  %1916 = vmatpush1.msra.mxu0 %v1004
  %1917 = vmatprep.subr.mxu0 0.0
  %1918 = vmatpush1.msra.mxu0 0.0
  %1919 = vmatprep.subr.mxu0 0.0
  %1920 = vmatpush1.msra.mxu0 0.0
  %1921 = vmatprep.subr.mxu0 0.0
  %1922 = vmatpush1.msra.mxu0 0.0
  %1923 = vmatprep.subr.mxu0 0.0
  %1924 = vmatpush1.msra.mxu0 0.0
  %1925 = vmatprep.subr.mxu0 0.0
  %1926 = vmatpush1.msra.mxu0 0.0
  %1927 = vmatprep.subr.mxu0 0.0
  %1928 = vmatpush1.msra.mxu0 0.0
  %1929 = vmatprep.subr.mxu0 0.0
  %1930 = vmatpush1.msra.mxu0 0.0
  %1931 = vmatprep.subr.mxu0 0.0
  %1932 = vmatpush1.msra.mxu0 0.0
  %1933 = vmatprep.subr.mxu0 0.0
  %1934 = vmatpush1.msra.mxu0 0.0
  %1935 = vmatprep.subr.mxu0 0.0
  %1936 = vmatpush1.msra.mxu0 0.0
  %1937 = vmatprep.subr.mxu0 0.0
  %1938 = vmatpush1.msra.mxu0 0.0
  %1939 = vmatprep.subr.mxu0 0.0
  %1940 = vmatpush1.msra.mxu0 0.0
  %1941 = vmatprep.subr.mxu0 0.0
  %1942 = vmatpush1.msra.mxu0 0.0
  %1943 = vmatprep.subr.mxu0 0.0
  %1944 = vmatpush1.msra.mxu0 0.0
  %1945 = vmatprep.subr.mxu0 0.0
  %1946 = vmatpush1.msra.mxu0 0.0
  %1947 = vmatprep.subr.mxu0 0.0
  %1948 = vmatpush1.msra.mxu0 0.0
  %1949 = vmatprep.subr.mxu0 0.0
  %1950 = vmatpush1.msra.mxu0 0.0
  %1951 = vmatprep.subr.mxu0 0.0
  %1952 = vmatpush1.msra.mxu0 0.0
  %1953 = vmatprep.subr.mxu0 0.0
  %1954 = vmatpush1.msra.mxu0 0.0
  %1955 = vmatprep.subr.mxu0 0.0
  %1956 = vmatpush1.msra.mxu0 0.0
  %1957 = vmatprep.subr.mxu0 0.0
  %1958 = vmatpush1.msra.mxu0 0.0
  %1959 = vmatprep.subr.mxu0 0.0
  %1960 = vmatpush1.msra.mxu0 0.0
  %1961 = vmatprep.subr.mxu0 0.0
  %1962 = vmatpush1.msra.mxu0 0.0
  %1963 = vmatprep.subr.mxu0 0.0
  %1964 = vmatpush1.msra.mxu0 0.0
  %1965 = vmatprep.subr.mxu0 0.0
  %1966 = vmatpush1.msra.mxu0 0.0
  %1967 = vmatprep.subr.mxu0 0.0
  %1968 = vmatpush1.msra.mxu0 0.0
  %1969 = vmatprep.subr.mxu0 0.0
  %1970 = vmatpush1.msra.mxu0 0.0
  %1971 = vmatprep.subr.mxu0 0.0
  %1972 = vmatpush1.msra.mxu0 0.0
  %1973 = vmatprep.mubr.f32.mxu0 0.0
  %1974 = vmatmul.mubr.f32.gmra.mrb[0].mxu0 %v1907
  %v1975 = vpop.f32.mrb[0].mxu0
  %v1976 = vadd.f32 0.0, %v1975
  %v1977 = vpop.f32.mrb[0].mxu0
  %1978 = vdwg.mxu0
  %v1979 = vadd.f32 %v1095, %v1976
  %v1980 = vxor.u32 %v1979, 2147483648
  %v1981 = vmul.f32 %v1980, 1.442695
  %v1982 = vpow.pop %v1981
  %v1983 = vadd.f32 %v1982, 1.0
  %v1984 = vrcp.pop %v1983
  %v1985 = vmul.f32 1.0, %v1984
  %v1986 = vmul.f32 %v1985, 2.0
  %v1987 = vsub.f32 %v1986, 1.0
  %v1988 = vmul.f32 %v1985, %v1897
  %1990 = vrot.lane.b32.xlu0 %v1987, 64
  %v1991 = vpop.permute.xlu0 %1990
  %v1993 = vmul.f32 %v1985, %v1991
  %1995 = vrot.lane.b32.xlu0 %v1993, 32
  %v1996 = vpop.permute.xlu0 %1995
  %v1998 = vadd.f32 %v1988, %v1996
  %v1999 = vtanh.pop %v1998
  %2001 = vrot.lane.b32.xlu0 %v1999, 64
  %v2002 = vpop.permute.xlu0 %2001
  %v2004 = vmul.f32 %v1985, %v2002
  %2006 = vrot.lane.b32.xlu0 %v2004, 32
  %v2007 = vpop.permute.xlu0 %2006
  %v2008 = vsel %vm910, %v2007, 0
  %2010 = vmatprep.subr.mxu0 0.0
  %2011 = vmatpush1.msra.mxu0 %v1001
  %2012 = vmatprep.subr.mxu0 0.0
  %2013 = vmatpush1.msra.mxu0 %v1002
  %2014 = vmatprep.subr.mxu0 0.0
  %2015 = vmatpush1.msra.mxu0 %v1003
  %2016 = vmatprep.subr.mxu0 0.0
  %2017 = vmatpush1.msra.mxu0 %v1004
  %2018 = vmatprep.subr.mxu0 0.0
  %2019 = vmatpush1.msra.mxu0 0.0
  %2020 = vmatprep.subr.mxu0 0.0
  %2021 = vmatpush1.msra.mxu0 0.0
  %2022 = vmatprep.subr.mxu0 0.0
  %2023 = vmatpush1.msra.mxu0 0.0
  %2024 = vmatprep.subr.mxu0 0.0
  %2025 = vmatpush1.msra.mxu0 0.0
  %2026 = vmatprep.subr.mxu0 0.0
  %2027 = vmatpush1.msra.mxu0 0.0
  %2028 = vmatprep.subr.mxu0 0.0
  %2029 = vmatpush1.msra.mxu0 0.0
  %2030 = vmatprep.subr.mxu0 0.0
  %2031 = vmatpush1.msra.mxu0 0.0
  %2032 = vmatprep.subr.mxu0 0.0
  %2033 = vmatpush1.msra.mxu0 0.0
  %2034 = vmatprep.subr.mxu0 0.0
  %2035 = vmatpush1.msra.mxu0 0.0
  %2036 = vmatprep.subr.mxu0 0.0
  %2037 = vmatpush1.msra.mxu0 0.0
  %2038 = vmatprep.subr.mxu0 0.0
  %2039 = vmatpush1.msra.mxu0 0.0
  %2040 = vmatprep.subr.mxu0 0.0
  %2041 = vmatpush1.msra.mxu0 0.0
  %2042 = vmatprep.subr.mxu0 0.0
  %2043 = vmatpush1.msra.mxu0 0.0
  %2044 = vmatprep.subr.mxu0 0.0
  %2045 = vmatpush1.msra.mxu0 0.0
  %2046 = vmatprep.subr.mxu0 0.0
  %2047 = vmatpush1.msra.mxu0 0.0
  %2048 = vmatprep.subr.mxu0 0.0
  %2049 = vmatpush1.msra.mxu0 0.0
  %2050 = vmatprep.subr.mxu0 0.0
  %2051 = vmatpush1.msra.mxu0 0.0
  %2052 = vmatprep.subr.mxu0 0.0
  %2053 = vmatpush1.msra.mxu0 0.0
  %2054 = vmatprep.subr.mxu0 0.0
  %2055 = vmatpush1.msra.mxu0 0.0
  %2056 = vmatprep.subr.mxu0 0.0
  %2057 = vmatpush1.msra.mxu0 0.0
  %2058 = vmatprep.subr.mxu0 0.0
  %2059 = vmatpush1.msra.mxu0 0.0
  %2060 = vmatprep.subr.mxu0 0.0
  %2061 = vmatpush1.msra.mxu0 0.0
  %2062 = vmatprep.subr.mxu0 0.0
  %2063 = vmatpush1.msra.mxu0 0.0
  %2064 = vmatprep.subr.mxu0 0.0
  %2065 = vmatpush1.msra.mxu0 0.0
  %2066 = vmatprep.subr.mxu0 0.0
  %2067 = vmatpush1.msra.mxu0 0.0
  %2068 = vmatprep.subr.mxu0 0.0
  %2069 = vmatpush1.msra.mxu0 0.0
  %2070 = vmatprep.subr.mxu0 0.0
  %2071 = vmatpush1.msra.mxu0 0.0
  %2072 = vmatprep.subr.mxu0 0.0
  %2073 = vmatpush1.msra.mxu0 0.0
  %2074 = vmatprep.mubr.f32.mxu0 0.0
  %2075 = vmatmul.mubr.f32.gmra.mrb[0].mxu0 %v2008
  %v2076 = vpop.f32.mrb[0].mxu0
  %v2077 = vadd.f32 0.0, %v2076
  %v2078 = vpop.f32.mrb[0].mxu0
  %2079 = vdwg.mxu0
  %v2080 = vadd.f32 %v1095, %v2077
  %v2081 = vxor.u32 %v2080, 2147483648
  %v2082 = vmul.f32 %v2081, 1.442695
  %v2083 = vpow.pop %v2082
  %v2084 = vadd.f32 %v2083, 1.0
  %v2085 = vrcp.pop %v2084
  %v2086 = vmul.f32 1.0, %v2085
  %v2087 = vmul.f32 %v2086, 2.0
  %v2088 = vsub.f32 %v2087, 1.0
  %v2089 = vmul.f32 %v2086, %v1998
  %2091 = vrot.lane.b32.xlu0 %v2088, 64
  %v2092 = vpop.permute.xlu0 %2091
  %v2094 = vmul.f32 %v2086, %v2092
  %2096 = vrot.lane.b32.xlu0 %v2094, 32
  %v2097 = vpop.permute.xlu0 %2096
  %v2099 = vadd.f32 %v2089, %v2097
  %v2100 = vtanh.pop %v2099
  %2102 = vrot.lane.b32.xlu0 %v2100, 64
  %v2103 = vpop.permute.xlu0 %2102
  %v2105 = vmul.f32 %v2086, %v2103
  %2107 = vrot.lane.b32.xlu0 %v2105, 32
  %v2108 = vpop.permute.xlu0 %2107
  %v2109 = vsel %vm910, %v2108, 0
  %2111 = vmatprep.subr.mxu0 0.0
  %2112 = vmatpush1.msra.mxu0 %v1001
  %2113 = vmatprep.subr.mxu0 0.0
  %2114 = vmatpush1.msra.mxu0 %v1002
  %2115 = vmatprep.subr.mxu0 0.0
  %2116 = vmatpush1.msra.mxu0 %v1003
  %2117 = vmatprep.subr.mxu0 0.0
  %2118 = vmatpush1.msra.mxu0 %v1004
  %2119 = vmatprep.subr.mxu0 0.0
  %2120 = vmatpush1.msra.mxu0 0.0
  %2121 = vmatprep.subr.mxu0 0.0
  %2122 = vmatpush1.msra.mxu0 0.0
  %2123 = vmatprep.subr.mxu0 0.0
  %2124 = vmatpush1.msra.mxu0 0.0
  %2125 = vmatprep.subr.mxu0 0.0
  %2126 = vmatpush1.msra.mxu0 0.0
  %2127 = vmatprep.subr.mxu0 0.0
  %2128 = vmatpush1.msra.mxu0 0.0
  %2129 = vmatprep.subr.mxu0 0.0
  %2130 = vmatpush1.msra.mxu0 0.0
  %2131 = vmatprep.subr.mxu0 0.0
  %2132 = vmatpush1.msra.mxu0 0.0
  %2133 = vmatprep.subr.mxu0 0.0
  %2134 = vmatpush1.msra.mxu0 0.0
  %2135 = vmatprep.subr.mxu0 0.0
  %2136 = vmatpush1.msra.mxu0 0.0
  %2137 = vmatprep.subr.mxu0 0.0
  %2138 = vmatpush1.msra.mxu0 0.0
  %2139 = vmatprep.subr.mxu0 0.0
  %2140 = vmatpush1.msra.mxu0 0.0
  %2141 = vmatprep.subr.mxu0 0.0
  %2142 = vmatpush1.msra.mxu0 0.0
  %2143 = vmatprep.subr.mxu0 0.0
  %2144 = vmatpush1.msra.mxu0 0.0
  %2145 = vmatprep.subr.mxu0 0.0
  %2146 = vmatpush1.msra.mxu0 0.0
  %2147 = vmatprep.subr.mxu0 0.0
  %2148 = vmatpush1.msra.mxu0 0.0
  %2149 = vmatprep.subr.mxu0 0.0
  %2150 = vmatpush1.msra.mxu0 0.0
  %2151 = vmatprep.subr.mxu0 0.0
  %2152 = vmatpush1.msra.mxu0 0.0
  %2153 = vmatprep.subr.mxu0 0.0
  %2154 = vmatpush1.msra.mxu0 0.0
  %2155 = vmatprep.subr.mxu0 0.0
  %2156 = vmatpush1.msra.mxu0 0.0
  %2157 = vmatprep.subr.mxu0 0.0
  %2158 = vmatpush1.msra.mxu0 0.0
  %2159 = vmatprep.subr.mxu0 0.0
  %2160 = vmatpush1.msra.mxu0 0.0
  %2161 = vmatprep.subr.mxu0 0.0
  %2162 = vmatpush1.msra.mxu0 0.0
  %2163 = vmatprep.subr.mxu0 0.0
  %2164 = vmatpush1.msra.mxu0 0.0
  %2165 = vmatprep.subr.mxu0 0.0
  %2166 = vmatpush1.msra.mxu0 0.0
  %2167 = vmatprep.subr.mxu0 0.0
  %2168 = vmatpush1.msra.mxu0 0.0
  %2169 = vmatprep.subr.mxu0 0.0
  %2170 = vmatpush1.msra.mxu0 0.0
  %2171 = vmatprep.subr.mxu0 0.0
  %2172 = vmatpush1.msra.mxu0 0.0
  %2173 = vmatprep.subr.mxu0 0.0
  %2174 = vmatpush1.msra.mxu0 0.0
  %2175 = vmatprep.mubr.f32.mxu0 0.0
  %2176 = vmatmul.mubr.f32.gmra.mrb[0].mxu0 %v2109
  %v2177 = vpop.f32.mrb[0].mxu0
  %v2178 = vadd.f32 0.0, %v2177
  %v2179 = vpop.f32.mrb[0].mxu0
  %2180 = vdwg.mxu0
  %v2181 = vadd.f32 %v1095, %v2178
  %v2182 = vxor.u32 %v2181, 2147483648
  %v2183 = vmul.f32 %v2182, 1.442695
  %v2184 = vpow.pop %v2183
  %v2185 = vadd.f32 %v2184, 1.0
  %v2186 = vrcp.pop %v2185
  %v2187 = vmul.f32 1.0, %v2186
  %v2188 = vmul.f32 %v2187, 2.0
  %v2189 = vsub.f32 %v2188, 1.0
  %v2190 = vmul.f32 %v2187, %v2099
  %2192 = vrot.lane.b32.xlu0 %v2189, 64
  %v2193 = vpop.permute.xlu0 %2192
  %v2195 = vmul.f32 %v2187, %v2193
  %2197 = vrot.lane.b32.xlu0 %v2195, 32
  %v2198 = vpop.permute.xlu0 %2197
  %v2200 = vadd.f32 %v2190, %v2198
  %v2201 = vtanh.pop %v2200
  %2203 = vrot.lane.b32.xlu0 %v2201, 64
  %v2204 = vpop.permute.xlu0 %2203
  %v2206 = vmul.f32 %v2187, %v2204
  %2208 = vrot.lane.b32.xlu0 %v2206, 32
  %v2209 = vpop.permute.xlu0 %2208
  %v2210 = vsel %vm910, %v2209, 0
  %2212 = vmatprep.subr.mxu0 0.0
  %2213 = vmatpush1.msra.mxu0 %v1001
  %2214 = vmatprep.subr.mxu0 0.0
  %2215 = vmatpush1.msra.mxu0 %v1002
  %2216 = vmatprep.subr.mxu0 0.0
  %2217 = vmatpush1.msra.mxu0 %v1003
  %2218 = vmatprep.subr.mxu0 0.0
  %2219 = vmatpush1.msra.mxu0 %v1004
  %2220 = vmatprep.subr.mxu0 0.0
  %2221 = vmatpush1.msra.mxu0 0.0
  %2222 = vmatprep.subr.mxu0 0.0
  %2223 = vmatpush1.msra.mxu0 0.0
  %2224 = vmatprep.subr.mxu0 0.0
  %2225 = vmatpush1.msra.mxu0 0.0
  %2226 = vmatprep.subr.mxu0 0.0
  %2227 = vmatpush1.msra.mxu0 0.0
  %2228 = vmatprep.subr.mxu0 0.0
  %2229 = vmatpush1.msra.mxu0 0.0
  %2230 = vmatprep.subr.mxu0 0.0
  %2231 = vmatpush1.msra.mxu0 0.0
  %2232 = vmatprep.subr.mxu0 0.0
  %2233 = vmatpush1.msra.mxu0 0.0
  %2234 = vmatprep.subr.mxu0 0.0
  %2235 = vmatpush1.msra.mxu0 0.0
  %2236 = vmatprep.subr.mxu0 0.0
  %2237 = vmatpush1.msra.mxu0 0.0
  %2238 = vmatprep.subr.mxu0 0.0
  %2239 = vmatpush1.msra.mxu0 0.0
  %2240 = vmatprep.subr.mxu0 0.0
  %2241 = vmatpush1.msra.mxu0 0.0
  %2242 = vmatprep.subr.mxu0 0.0
  %2243 = vmatpush1.msra.mxu0 0.0
  %2244 = vmatprep.subr.mxu0 0.0
  %2245 = vmatpush1.msra.mxu0 0.0
  %2246 = vmatprep.subr.mxu0 0.0
  %2247 = vmatpush1.msra.mxu0 0.0
  %2248 = vmatprep.subr.mxu0 0.0
  %2249 = vmatpush1.msra.mxu0 0.0
  %2250 = vmatprep.subr.mxu0 0.0
  %2251 = vmatpush1.msra.mxu0 0.0
  %2252 = vmatprep.subr.mxu0 0.0
  %2253 = vmatpush1.msra.mxu0 0.0
  %2254 = vmatprep.subr.mxu0 0.0
  %2255 = vmatpush1.msra.mxu0 0.0
  %2256 = vmatprep.subr.mxu0 0.0
  %2257 = vmatpush1.msra.mxu0 0.0
  %2258 = vmatprep.subr.mxu0 0.0
  %2259 = vmatpush1.msra.mxu0 0.0
  %2260 = vmatprep.subr.mxu0 0.0
  %2261 = vmatpush1.msra.mxu0 0.0
  %2262 = vmatprep.subr.mxu0 0.0
  %2263 = vmatpush1.msra.mxu0 0.0
  %2264 = vmatprep.subr.mxu0 0.0
  %2265 = vmatpush1.msra.mxu0 0.0
  %2266 = vmatprep.subr.mxu0 0.0
  %2267 = vmatpush1.msra.mxu0 0.0
  %2268 = vmatprep.subr.mxu0 0.0
  %2269 = vmatpush1.msra.mxu0 0.0
  %2270 = vmatprep.subr.mxu0 0.0
  %2271 = vmatpush1.msra.mxu0 0.0
  %2272 = vmatprep.subr.mxu0 0.0
  %2273 = vmatpush1.msra.mxu0 0.0
  %2274 = vmatprep.subr.mxu0 0.0
  %2275 = vmatpush1.msra.mxu0 0.0
  %2276 = vmatprep.mubr.f32.mxu0 0.0
  %2277 = vmatmul.mubr.f32.gmra.mrb[0].mxu0 %v2210
  %v2278 = vpop.f32.mrb[0].mxu0
  %v2279 = vadd.f32 0.0, %v2278
  %v2280 = vpop.f32.mrb[0].mxu0
  %2281 = vdwg.mxu0
  %v2282 = vadd.f32 %v1095, %v2279
  %v2283 = vxor.u32 %v2282, 2147483648
  %v2284 = vmul.f32 %v2283, 1.442695
  %v2285 = vpow.pop %v2284
  %v2286 = vadd.f32 %v2285, 1.0
  %v2287 = vrcp.pop %v2286
  %v2288 = vmul.f32 1.0, %v2287
  %v2289 = vmul.f32 %v2288, 2.0
  %v2290 = vsub.f32 %v2289, 1.0
  %v2291 = vmul.f32 %v2288, %v2200
  %2293 = vrot.lane.b32.xlu0 %v2290, 64
  %v2294 = vpop.permute.xlu0 %2293
  %v2296 = vmul.f32 %v2288, %v2294
  %2298 = vrot.lane.b32.xlu0 %v2296, 32
  %v2299 = vpop.permute.xlu0 %2298
  %v2301 = vadd.f32 %v2291, %v2299
  %v2302 = vtanh.pop %v2301
  %2304 = vrot.lane.b32.xlu0 %v2302, 64
  %v2305 = vpop.permute.xlu0 %2304
  %v2307 = vmul.f32 %v2288, %v2305
  %2309 = vrot.lane.b32.xlu0 %v2307, 32
  %v2310 = vpop.permute.xlu0 %2309
  %v2311 = vsel %vm910, %v2310, 0
  %2313 = vmatprep.subr.mxu0 0.0
  %2314 = vmatpush1.msra.mxu0 %v1001
  %2315 = vmatprep.subr.mxu0 0.0
  %2316 = vmatpush1.msra.mxu0 %v1002
  %2317 = vmatprep.subr.mxu0 0.0
  %2318 = vmatpush1.msra.mxu0 %v1003
  %2319 = vmatprep.subr.mxu0 0.0
  %2320 = vmatpush1.msra.mxu0 %v1004
  %2321 = vmatprep.subr.mxu0 0.0
  %2322 = vmatpush1.msra.mxu0 0.0
  %2323 = vmatprep.subr.mxu0 0.0
  %2324 = vmatpush1.msra.mxu0 0.0
  %2325 = vmatprep.subr.mxu0 0.0
  %2326 = vmatpush1.msra.mxu0 0.0
  %2327 = vmatprep.subr.mxu0 0.0
  %2328 = vmatpush1.msra.mxu0 0.0
  %2329 = vmatprep.subr.mxu0 0.0
  %2330 = vmatpush1.msra.mxu0 0.0
  %2331 = vmatprep.subr.mxu0 0.0
  %2332 = vmatpush1.msra.mxu0 0.0
  %2333 = vmatprep.subr.mxu0 0.0
  %2334 = vmatpush1.msra.mxu0 0.0
  %2335 = vmatprep.subr.mxu0 0.0
  %2336 = vmatpush1.msra.mxu0 0.0
  %2337 = vmatprep.subr.mxu0 0.0
  %2338 = vmatpush1.msra.mxu0 0.0
  %2339 = vmatprep.subr.mxu0 0.0
  %2340 = vmatpush1.msra.mxu0 0.0
  %2341 = vmatprep.subr.mxu0 0.0
  %2342 = vmatpush1.msra.mxu0 0.0
  %2343 = vmatprep.subr.mxu0 0.0
  %2344 = vmatpush1.msra.mxu0 0.0
  %2345 = vmatprep.subr.mxu0 0.0
  %2346 = vmatpush1.msra.mxu0 0.0
  %2347 = vmatprep.subr.mxu0 0.0
  %2348 = vmatpush1.msra.mxu0 0.0
  %2349 = vmatprep.subr.mxu0 0.0
  %2350 = vmatpush1.msra.mxu0 0.0
  %2351 = vmatprep.subr.mxu0 0.0
  %2352 = vmatpush1.msra.mxu0 0.0
  %2353 = vmatprep.subr.mxu0 0.0
  %2354 = vmatpush1.msra.mxu0 0.0
  %2355 = vmatprep.subr.mxu0 0.0
  %2356 = vmatpush1.msra.mxu0 0.0
  %2357 = vmatprep.subr.mxu0 0.0
  %2358 = vmatpush1.msra.mxu0 0.0
  %2359 = vmatprep.subr.mxu0 0.0
  %2360 = vmatpush1.msra.mxu0 0.0
  %2361 = vmatprep.subr.mxu0 0.0
  %2362 = vmatpush1.msra.mxu0 0.0
  %2363 = vmatprep.subr.mxu0 0.0
  %2364 = vmatpush1.msra.mxu0 0.0
  %2365 = vmatprep.subr.mxu0 0.0
  %2366 = vmatpush1.msra.mxu0 0.0
  %2367 = vmatprep.subr.mxu0 0.0
  %2368 = vmatpush1.msra.mxu0 0.0
  %2369 = vmatprep.subr.mxu0 0.0
  %2370 = vmatpush1.msra.mxu0 0.0
  %2371 = vmatprep.subr.mxu0 0.0
  %2372 = vmatpush1.msra.mxu0 0.0
  %2373 = vmatprep.subr.mxu0 0.0
  %2374 = vmatpush1.msra.mxu0 0.0
  %2375 = vmatprep.subr.mxu0 0.0
  %2376 = vmatpush1.msra.mxu0 0.0
  %2377 = vmatprep.mubr.f32.mxu0 0.0
  %2378 = vmatmul.mubr.f32.gmra.mrb[0].mxu0 %v2311
  %v2379 = vpop.f32.mrb[0].mxu0
  %v2380 = vadd.f32 0.0, %v2379
  %v2381 = vpop.f32.mrb[0].mxu0
  %2382 = vdwg.mxu0
  %v2383 = vadd.f32 %v1095, %v2380
  %v2384 = vxor.u32 %v2383, 2147483648
  %v2385 = vmul.f32 %v2384, 1.442695
  %v2386 = vpow.pop %v2385
  %v2387 = vadd.f32 %v2386, 1.0
  %v2388 = vrcp.pop %v2387
  %v2389 = vmul.f32 1.0, %v2388
  %v2390 = vmul.f32 %v2389, 2.0
  %v2391 = vsub.f32 %v2390, 1.0
  %v2392 = vmul.f32 %v2389, %v2301
  %2394 = vrot.lane.b32.xlu0 %v2391, 64
  %v2395 = vpop.permute.xlu0 %2394
  %v2397 = vmul.f32 %v2389, %v2395
  %2399 = vrot.lane.b32.xlu0 %v2397, 32
  %v2400 = vpop.permute.xlu0 %2399
  %v2402 = vadd.f32 %v2392, %v2400
  %v2403 = vtanh.pop %v2402
  %2405 = vrot.lane.b32.xlu0 %v2403, 64
  %v2406 = vpop.permute.xlu0 %2405
  %v2408 = vmul.f32 %v2389, %v2406
  %2410 = vrot.lane.b32.xlu0 %v2408, 32
  %v2411 = vpop.permute.xlu0 %2410
  %v2412 = vsel %vm910, %v2411, 0
  %2414 = vmatprep.subr.mxu0 0.0
  %2415 = vmatpush1.msra.mxu0 %v1001
  %2416 = vmatprep.subr.mxu0 0.0
  %2417 = vmatpush1.msra.mxu0 %v1002
  %2418 = vmatprep.subr.mxu0 0.0
  %2419 = vmatpush1.msra.mxu0 %v1003
  %2420 = vmatprep.subr.mxu0 0.0
  %2421 = vmatpush1.msra.mxu0 %v1004
  %2422 = vmatprep.subr.mxu0 0.0
  %2423 = vmatpush1.msra.mxu0 0.0
  %2424 = vmatprep.subr.mxu0 0.0
  %2425 = vmatpush1.msra.mxu0 0.0
  %2426 = vmatprep.subr.mxu0 0.0
  %2427 = vmatpush1.msra.mxu0 0.0
  %2428 = vmatprep.subr.mxu0 0.0
  %2429 = vmatpush1.msra.mxu0 0.0
  %2430 = vmatprep.subr.mxu0 0.0
  %2431 = vmatpush1.msra.mxu0 0.0
  %2432 = vmatprep.subr.mxu0 0.0
  %2433 = vmatpush1.msra.mxu0 0.0
  %2434 = vmatprep.subr.mxu0 0.0
  %2435 = vmatpush1.msra.mxu0 0.0
  %2436 = vmatprep.subr.mxu0 0.0
  %2437 = vmatpush1.msra.mxu0 0.0
  %2438 = vmatprep.subr.mxu0 0.0
  %2439 = vmatpush1.msra.mxu0 0.0
  %2440 = vmatprep.subr.mxu0 0.0
  %2441 = vmatpush1.msra.mxu0 0.0
  %2442 = vmatprep.subr.mxu0 0.0
  %2443 = vmatpush1.msra.mxu0 0.0
  %2444 = vmatprep.subr.mxu0 0.0
  %2445 = vmatpush1.msra.mxu0 0.0
  %2446 = vmatprep.subr.mxu0 0.0
  %2447 = vmatpush1.msra.mxu0 0.0
  %2448 = vmatprep.subr.mxu0 0.0
  %2449 = vmatpush1.msra.mxu0 0.0
  %2450 = vmatprep.subr.mxu0 0.0
  %2451 = vmatpush1.msra.mxu0 0.0
  %2452 = vmatprep.subr.mxu0 0.0
  %2453 = vmatpush1.msra.mxu0 0.0
  %2454 = vmatprep.subr.mxu0 0.0
  %2455 = vmatpush1.msra.mxu0 0.0
  %2456 = vmatprep.subr.mxu0 0.0
  %2457 = vmatpush1.msra.mxu0 0.0
  %2458 = vmatprep.subr.mxu0 0.0
  %2459 = vmatpush1.msra.mxu0 0.0
  %2460 = vmatprep.subr.mxu0 0.0
  %2461 = vmatpush1.msra.mxu0 0.0
  %2462 = vmatprep.subr.mxu0 0.0
  %2463 = vmatpush1.msra.mxu0 0.0
  %2464 = vmatprep.subr.mxu0 0.0
  %2465 = vmatpush1.msra.mxu0 0.0
  %2466 = vmatprep.subr.mxu0 0.0
  %2467 = vmatpush1.msra.mxu0 0.0
  %2468 = vmatprep.subr.mxu0 0.0
  %2469 = vmatpush1.msra.mxu0 0.0
  %2470 = vmatprep.subr.mxu0 0.0
  %2471 = vmatpush1.msra.mxu0 0.0
  %2472 = vmatprep.subr.mxu0 0.0
  %2473 = vmatpush1.msra.mxu0 0.0
  %2474 = vmatprep.subr.mxu0 0.0
  %2475 = vmatpush1.msra.mxu0 0.0
  %2476 = vmatprep.subr.mxu0 0.0
  %2477 = vmatpush1.msra.mxu0 0.0
  %2478 = vmatprep.mubr.f32.mxu0 0.0
  %2479 = vmatmul.mubr.f32.gmra.mrb[0].mxu0 %v2412
  %v2480 = vpop.f32.mrb[0].mxu0
  %v2481 = vadd.f32 0.0, %v2480
  %v2482 = vpop.f32.mrb[0].mxu0
  %2483 = vdwg.mxu0
  %v2484 = vadd.f32 %v1095, %v2481
  %v2485 = vxor.u32 %v2484, 2147483648
  %v2486 = vmul.f32 %v2485, 1.442695
  %v2487 = vpow.pop %v2486
  %v2488 = vadd.f32 %v2487, 1.0
  %v2489 = vrcp.pop %v2488
  %v2490 = vmul.f32 1.0, %v2489
  %v2491 = vmul.f32 %v2490, 2.0
  %v2492 = vsub.f32 %v2491, 1.0
  %v2493 = vmul.f32 %v2490, %v2402
  %2495 = vrot.lane.b32.xlu0 %v2492, 64
  %v2496 = vpop.permute.xlu0 %2495
  %v2498 = vmul.f32 %v2490, %v2496
  %2500 = vrot.lane.b32.xlu0 %v2498, 32
  %v2501 = vpop.permute.xlu0 %2500
  %v2503 = vadd.f32 %v2493, %v2501
  %v2504 = vtanh.pop %v2503
  %2506 = vrot.lane.b32.xlu0 %v2504, 64
  %v2507 = vpop.permute.xlu0 %2506
  %v2509 = vmul.f32 %v2490, %v2507
  %2511 = vrot.lane.b32.xlu0 %v2509, 32
  %v2512 = vpop.permute.xlu0 %2511
  %v2513 = vsel %vm910, %v2512, 0
  %2515 = vmatprep.subr.mxu0 0.0
  %2516 = vmatpush1.msra.mxu0 %v1001
  %2517 = vmatprep.subr.mxu0 0.0
  %2518 = vmatpush1.msra.mxu0 %v1002
  %2519 = vmatprep.subr.mxu0 0.0
  %2520 = vmatpush1.msra.mxu0 %v1003
  %2521 = vmatprep.subr.mxu0 0.0
  %2522 = vmatpush1.msra.mxu0 %v1004
  %2523 = vmatprep.subr.mxu0 0.0
  %2524 = vmatpush1.msra.mxu0 0.0
  %2525 = vmatprep.subr.mxu0 0.0
  %2526 = vmatpush1.msra.mxu0 0.0
  %2527 = vmatprep.subr.mxu0 0.0
  %2528 = vmatpush1.msra.mxu0 0.0
  %2529 = vmatprep.subr.mxu0 0.0
  %2530 = vmatpush1.msra.mxu0 0.0
  %2531 = vmatprep.subr.mxu0 0.0
  %2532 = vmatpush1.msra.mxu0 0.0
  %2533 = vmatprep.subr.mxu0 0.0
  %2534 = vmatpush1.msra.mxu0 0.0
  %2535 = vmatprep.subr.mxu0 0.0
  %2536 = vmatpush1.msra.mxu0 0.0
  %2537 = vmatprep.subr.mxu0 0.0
  %2538 = vmatpush1.msra.mxu0 0.0
  %2539 = vmatprep.subr.mxu0 0.0
  %2540 = vmatpush1.msra.mxu0 0.0
  %2541 = vmatprep.subr.mxu0 0.0
  %2542 = vmatpush1.msra.mxu0 0.0
  %2543 = vmatprep.subr.mxu0 0.0
  %2544 = vmatpush1.msra.mxu0 0.0
  %2545 = vmatprep.subr.mxu0 0.0
  %2546 = vmatpush1.msra.mxu0 0.0
  %2547 = vmatprep.subr.mxu0 0.0
  %2548 = vmatpush1.msra.mxu0 0.0
  %2549 = vmatprep.subr.mxu0 0.0
  %2550 = vmatpush1.msra.mxu0 0.0
  %2551 = vmatprep.subr.mxu0 0.0
  %2552 = vmatpush1.msra.mxu0 0.0
  %2553 = vmatprep.subr.mxu0 0.0
  %2554 = vmatpush1.msra.mxu0 0.0
  %2555 = vmatprep.subr.mxu0 0.0
  %2556 = vmatpush1.msra.mxu0 0.0
  %2557 = vmatprep.subr.mxu0 0.0
  %2558 = vmatpush1.msra.mxu0 0.0
  %2559 = vmatprep.subr.mxu0 0.0
  %2560 = vmatpush1.msra.mxu0 0.0
  %2561 = vmatprep.subr.mxu0 0.0
  %2562 = vmatpush1.msra.mxu0 0.0
  %2563 = vmatprep.subr.mxu0 0.0
  %2564 = vmatpush1.msra.mxu0 0.0
  %2565 = vmatprep.subr.mxu0 0.0
  %2566 = vmatpush1.msra.mxu0 0.0
  %2567 = vmatprep.subr.mxu0 0.0
  %2568 = vmatpush1.msra.mxu0 0.0
  %2569 = vmatprep.subr.mxu0 0.0
  %2570 = vmatpush1.msra.mxu0 0.0
  %2571 = vmatprep.subr.mxu0 0.0
  %2572 = vmatpush1.msra.mxu0 0.0
  %2573 = vmatprep.subr.mxu0 0.0
  %2574 = vmatpush1.msra.mxu0 0.0
  %2575 = vmatprep.subr.mxu0 0.0
  %2576 = vmatpush1.msra.mxu0 0.0
  %2577 = vmatprep.subr.mxu0 0.0
  %2578 = vmatpush1.msra.mxu0 0.0
  %2579 = vmatprep.mubr.f32.mxu0 0.0
  %2580 = vmatmul.mubr.f32.gmra.mrb[0].mxu0 %v2513
  %v2581 = vpop.f32.mrb[0].mxu0
  %v2582 = vadd.f32 0.0, %v2581
  %v2583 = vpop.f32.mrb[0].mxu0
  %2584 = vdwg.mxu0
  %v2585 = vadd.f32 %v1095, %v2582
  %v2586 = vxor.u32 %v2585, 2147483648
  %v2587 = vmul.f32 %v2586, 1.442695
  %v2588 = vpow.pop %v2587
  %v2589 = vadd.f32 %v2588, 1.0
  %v2590 = vrcp.pop %v2589
  %v2591 = vmul.f32 1.0, %v2590
  %v2592 = vmul.f32 %v2591, 2.0
  %v2593 = vsub.f32 %v2592, 1.0
  %v2594 = vmul.f32 %v2591, %v2503
  %2596 = vrot.lane.b32.xlu0 %v2593, 64
  %v2597 = vpop.permute.xlu0 %2596
  %v2599 = vmul.f32 %v2591, %v2597
  %2601 = vrot.lane.b32.xlu0 %v2599, 32
  %v2602 = vpop.permute.xlu0 %2601
  %v2604 = vadd.f32 %v2594, %v2602
  %v2605 = vtanh.pop %v2604
  %2607 = vrot.lane.b32.xlu0 %v2605, 64
  %v2608 = vpop.permute.xlu0 %2607
  %v2610 = vmul.f32 %v2591, %v2608
  %2612 = vrot.lane.b32.xlu0 %v2610, 32
  %v2613 = vpop.permute.xlu0 %2612
  %v2614 = vsel %vm910, %v2613, 0
  %2616 = vmatprep.subr.mxu0 0.0
  %2617 = vmatpush1.msra.mxu0 %v1001
  %2618 = vmatprep.subr.mxu0 0.0
  %2619 = vmatpush1.msra.mxu0 %v1002
  %2620 = vmatprep.subr.mxu0 0.0
  %2621 = vmatpush1.msra.mxu0 %v1003
  %2622 = vmatprep.subr.mxu0 0.0
  %2623 = vmatpush1.msra.mxu0 %v1004
  %2624 = vmatprep.subr.mxu0 0.0
  %2625 = vmatpush1.msra.mxu0 0.0
  %2626 = vmatprep.subr.mxu0 0.0
  %2627 = vmatpush1.msra.mxu0 0.0
  %2628 = vmatprep.subr.mxu0 0.0
  %2629 = vmatpush1.msra.mxu0 0.0
  %2630 = vmatprep.subr.mxu0 0.0
  %2631 = vmatpush1.msra.mxu0 0.0
  %2632 = vmatprep.subr.mxu0 0.0
  %2633 = vmatpush1.msra.mxu0 0.0
  %2634 = vmatprep.subr.mxu0 0.0
  %2635 = vmatpush1.msra.mxu0 0.0
  %2636 = vmatprep.subr.mxu0 0.0
  %2637 = vmatpush1.msra.mxu0 0.0
  %2638 = vmatprep.subr.mxu0 0.0
  %2639 = vmatpush1.msra.mxu0 0.0
  %2640 = vmatprep.subr.mxu0 0.0
  %2641 = vmatpush1.msra.mxu0 0.0
  %2642 = vmatprep.subr.mxu0 0.0
  %2643 = vmatpush1.msra.mxu0 0.0
  %2644 = vmatprep.subr.mxu0 0.0
  %2645 = vmatpush1.msra.mxu0 0.0
  %2646 = vmatprep.subr.mxu0 0.0
  %2647 = vmatpush1.msra.mxu0 0.0
  %2648 = vmatprep.subr.mxu0 0.0
  %2649 = vmatpush1.msra.mxu0 0.0
  %2650 = vmatprep.subr.mxu0 0.0
  %2651 = vmatpush1.msra.mxu0 0.0
  %2652 = vmatprep.subr.mxu0 0.0
  %2653 = vmatpush1.msra.mxu0 0.0
  %2654 = vmatprep.subr.mxu0 0.0
  %2655 = vmatpush1.msra.mxu0 0.0
  %2656 = vmatprep.subr.mxu0 0.0
  %2657 = vmatpush1.msra.mxu0 0.0
  %2658 = vmatprep.subr.mxu0 0.0
  %2659 = vmatpush1.msra.mxu0 0.0
  %2660 = vmatprep.subr.mxu0 0.0
  %2661 = vmatpush1.msra.mxu0 0.0
  %2662 = vmatprep.subr.mxu0 0.0
  %2663 = vmatpush1.msra.mxu0 0.0
  %2664 = vmatprep.subr.mxu0 0.0
  %2665 = vmatpush1.msra.mxu0 0.0
  %2666 = vmatprep.subr.mxu0 0.0
  %2667 = vmatpush1.msra.mxu0 0.0
  %2668 = vmatprep.subr.mxu0 0.0
  %2669 = vmatpush1.msra.mxu0 0.0
  %2670 = vmatprep.subr.mxu0 0.0
  %2671 = vmatpush1.msra.mxu0 0.0
  %2672 = vmatprep.subr.mxu0 0.0
  %2673 = vmatpush1.msra.mxu0 0.0
  %2674 = vmatprep.subr.mxu0 0.0
  %2675 = vmatpush1.msra.mxu0 0.0
  %2676 = vmatprep.subr.mxu0 0.0
  %2677 = vmatpush1.msra.mxu0 0.0
  %2678 = vmatprep.subr.mxu0 0.0
  %2679 = vmatpush1.msra.mxu0 0.0
  %2680 = vmatprep.mubr.f32.mxu0 0.0
  %2681 = vmatmul.mubr.f32.gmra.mrb[0].mxu0 %v2614
  %v2682 = vpop.f32.mrb[0].mxu0
  %v2683 = vadd.f32 0.0, %v2682
  %v2684 = vpop.f32.mrb[0].mxu0
  %2685 = vdwg.mxu0
  %v2686 = vadd.f32 %v1095, %v2683
  %v2687 = vxor.u32 %v2686, 2147483648
  %v2688 = vmul.f32 %v2687, 1.442695
  %v2689 = vpow.pop %v2688
  %v2690 = vadd.f32 %v2689, 1.0
  %v2691 = vrcp.pop %v2690
  %v2692 = vmul.f32 1.0, %v2691
  %v2693 = vmul.f32 %v2692, 2.0
  %v2694 = vsub.f32 %v2693, 1.0
  %v2695 = vmul.f32 %v2692, %v2604
  %2697 = vrot.lane.b32.xlu0 %v2694, 64
  %v2698 = vpop.permute.xlu0 %2697
  %v2700 = vmul.f32 %v2692, %v2698
  %2702 = vrot.lane.b32.xlu0 %v2700, 32
  %v2703 = vpop.permute.xlu0 %2702
  %v2705 = vadd.f32 %v2695, %v2703
  %v2706 = vtanh.pop %v2705
  %2708 = vrot.lane.b32.xlu0 %v2706, 64
  %v2709 = vpop.permute.xlu0 %2708
  %v2711 = vmul.f32 %v2692, %v2709
  %2713 = vrot.lane.b32.xlu0 %v2711, 32
  %v2714 = vpop.permute.xlu0 %2713
  %v2715 = vsel %vm910, %v2714, 0
  %2717 = vmatprep.subr.mxu0 %v1006
  %2718 = vmatpush1.msra.mxu0 %v1005
  %2719 = vmatprep.subr.mxu0 %v1008
  %2720 = vmatpush1.msra.mxu0 %v1007
  %2721 = vmatprep.subr.mxu0 %v1010
  %2722 = vmatpush1.msra.mxu0 %v1009
  %2723 = vmatprep.subr.mxu0 %v1012
  %2724 = vmatpush1.msra.mxu0 %v1011
  %2725 = vmatprep.subr.mxu0 0.0
  %2726 = vmatpush1.msra.mxu0 0.0
  %2727 = vmatprep.subr.mxu0 0.0
  %2728 = vmatpush1.msra.mxu0 0.0
  %2729 = vmatprep.subr.mxu0 0.0
  %2730 = vmatpush1.msra.mxu0 0.0
  %2731 = vmatprep.subr.mxu0 0.0
  %2732 = vmatpush1.msra.mxu0 0.0
  %2733 = vmatprep.subr.mxu0 0.0
  %2734 = vmatpush1.msra.mxu0 0.0
  %2735 = vmatprep.subr.mxu0 0.0
  %2736 = vmatpush1.msra.mxu0 0.0
  %2737 = vmatprep.subr.mxu0 0.0
  %2738 = vmatpush1.msra.mxu0 0.0
  %2739 = vmatprep.subr.mxu0 0.0
  %2740 = vmatpush1.msra.mxu0 0.0
  %2741 = vmatprep.subr.mxu0 0.0
  %2742 = vmatpush1.msra.mxu0 0.0
  %2743 = vmatprep.subr.mxu0 0.0
  %2744 = vmatpush1.msra.mxu0 0.0
  %2745 = vmatprep.subr.mxu0 0.0
  %2746 = vmatpush1.msra.mxu0 0.0
  %2747 = vmatprep.subr.mxu0 0.0
  %2748 = vmatpush1.msra.mxu0 0.0
  %2749 = vmatprep.subr.mxu0 0.0
  %2750 = vmatpush1.msra.mxu0 0.0
  %2751 = vmatprep.subr.mxu0 0.0
  %2752 = vmatpush1.msra.mxu0 0.0
  %2753 = vmatprep.subr.mxu0 0.0
  %2754 = vmatpush1.msra.mxu0 0.0
  %2755 = vmatprep.subr.mxu0 0.0
  %2756 = vmatpush1.msra.mxu0 0.0
  %2757 = vmatprep.subr.mxu0 0.0
  %2758 = vmatpush1.msra.mxu0 0.0
  %2759 = vmatprep.subr.mxu0 0.0
  %2760 = vmatpush1.msra.mxu0 0.0
  %2761 = vmatprep.subr.mxu0 0.0
  %2762 = vmatpush1.msra.mxu0 0.0
  %2763 = vmatprep.subr.mxu0 0.0
  %2764 = vmatpush1.msra.mxu0 0.0
  %2765 = vmatprep.subr.mxu0 0.0
  %2766 = vmatpush1.msra.mxu0 0.0
  %2767 = vmatprep.subr.mxu0 0.0
  %2768 = vmatpush1.msra.mxu0 0.0
  %2769 = vmatprep.subr.mxu0 0.0
  %2770 = vmatpush1.msra.mxu0 0.0
  %2771 = vmatprep.subr.mxu0 0.0
  %2772 = vmatpush1.msra.mxu0 0.0
  %2773 = vmatprep.subr.mxu0 0.0
  %2774 = vmatpush1.msra.mxu0 0.0
  %2775 = vmatprep.subr.mxu0 0.0
  %2776 = vmatpush1.msra.mxu0 0.0
  %2777 = vmatprep.subr.mxu0 0.0
  %2778 = vmatpush1.msra.mxu0 0.0
  %2779 = vmatprep.subr.mxu0 0.0
  %2780 = vmatpush1.msra.mxu0 0.0
  %2781 = vmatprep.mubr.f32.mxu0 0.0
  %2782 = vmatmul.mubr.f32.gmra.mrb[0].mxu0 %v1200
  %v2783 = vpop.f32.mrb[0].mxu0
  %v2784 = vadd.f32 0.0, %v2783
  %v2785 = vpop.f32.mrb[0].mxu0
  %v2786 = vadd.f32 0.0, %v2785
  %2787 = vmatprep.mubr.f32.mxu0 0.0
  %2788 = vmatmul.mubr.f32.gmra.mrb[0].mxu0 %v1301
  %v2789 = vpop.f32.mrb[0].mxu0
  %v2790 = vadd.f32 0.0, %v2789
  %v2791 = vpop.f32.mrb[0].mxu0
  %v2792 = vadd.f32 0.0, %v2791
  %2793 = vmatprep.mubr.f32.mxu0 0.0
  %2794 = vmatmul.mubr.f32.gmra.mrb[0].mxu0 %v1402
  %v2795 = vpop.f32.mrb[0].mxu0
  %v2796 = vadd.f32 0.0, %v2795
  %v2797 = vpop.f32.mrb[0].mxu0
  %v2798 = vadd.f32 0.0, %v2797
  %2799 = vmatprep.mubr.f32.mxu0 0.0
  %2800 = vmatmul.mubr.f32.gmra.mrb[0].mxu0 %v1503
  %v2801 = vpop.f32.mrb[0].mxu0
  %v2802 = vadd.f32 0.0, %v2801
  %v2803 = vpop.f32.mrb[0].mxu0
  %v2804 = vadd.f32 0.0, %v2803
  %2805 = vmatprep.mubr.f32.mxu0 0.0
  %2806 = vmatmul.mubr.f32.gmra.mrb[0].mxu0 %v1604
  %v2807 = vpop.f32.mrb[0].mxu0
  %v2808 = vadd.f32 0.0, %v2807
  %v2809 = vpop.f32.mrb[0].mxu0
  %v2810 = vadd.f32 0.0, %v2809
  %2811 = vmatprep.mubr.f32.mxu0 0.0
  %2812 = vmatmul.mubr.f32.gmra.mrb[0].mxu0 %v1705
  %v2813 = vpop.f32.mrb[0].mxu0
  %v2814 = vadd.f32 0.0, %v2813
  %v2815 = vpop.f32.mrb[0].mxu0
  %v2816 = vadd.f32 0.0, %v2815
  %2817 = vmatprep.mubr.f32.mxu0 0.0
  %2818 = vmatmul.mubr.f32.gmra.mrb[0].mxu0 %v1806
  %v2819 = vpop.f32.mrb[0].mxu0
  %v2820 = vadd.f32 0.0, %v2819
  %v2821 = vpop.f32.mrb[0].mxu0
  %v2822 = vadd.f32 0.0, %v2821
  %2823 = vmatprep.mubr.f32.mxu0 0.0
  %2824 = vmatmul.mubr.f32.gmra.mrb[0].mxu0 %v1907
  %v2825 = vpop.f32.mrb[0].mxu0
  %v2826 = vadd.f32 0.0, %v2825
  %v2827 = vpop.f32.mrb[0].mxu0
  %v2828 = vadd.f32 0.0, %v2827
  %2829 = vmatprep.mubr.f32.mxu0 0.0
  %2830 = vmatmul.mubr.f32.gmra.mrb[0].mxu0 %v2008
  %v2831 = vpop.f32.mrb[0].mxu0
  %v2832 = vadd.f32 0.0, %v2831
  %v2833 = vpop.f32.mrb[0].mxu0
  %v2834 = vadd.f32 0.0, %v2833
  %2835 = vmatprep.mubr.f32.mxu0 0.0
  %2836 = vmatmul.mubr.f32.gmra.mrb[0].mxu0 %v2109
  %v2837 = vpop.f32.mrb[0].mxu0
  %v2838 = vadd.f32 0.0, %v2837
  %v2839 = vpop.f32.mrb[0].mxu0
  %v2840 = vadd.f32 0.0, %v2839
  %2841 = vmatprep.mubr.f32.mxu0 0.0
  %2842 = vmatmul.mubr.f32.gmra.mrb[0].mxu0 %v2210
  %v2843 = vpop.f32.mrb[0].mxu0
  %v2844 = vadd.f32 0.0, %v2843
  %v2845 = vpop.f32.mrb[0].mxu0
  %v2846 = vadd.f32 0.0, %v2845
  %2847 = vmatprep.mubr.f32.mxu0 0.0
  %2848 = vmatmul.mubr.f32.gmra.mrb[0].mxu0 %v2311
  %v2849 = vpop.f32.mrb[0].mxu0
  %v2850 = vadd.f32 0.0, %v2849
  %v2851 = vpop.f32.mrb[0].mxu0
  %v2852 = vadd.f32 0.0, %v2851
  %2853 = vmatprep.mubr.f32.mxu0 0.0
  %2854 = vmatmul.mubr.f32.gmra.mrb[0].mxu0 %v2412
  %v2855 = vpop.f32.mrb[0].mxu0
  %v2856 = vadd.f32 0.0, %v2855
  %v2857 = vpop.f32.mrb[0].mxu0
  %v2858 = vadd.f32 0.0, %v2857
  %2859 = vmatprep.mubr.f32.mxu0 0.0
  %2860 = vmatmul.mubr.f32.gmra.mrb[0].mxu0 %v2513
  %v2861 = vpop.f32.mrb[0].mxu0
  %v2862 = vadd.f32 0.0, %v2861
  %v2863 = vpop.f32.mrb[0].mxu0
  %v2864 = vadd.f32 0.0, %v2863
  %2865 = vmatprep.mubr.f32.mxu0 0.0
  %2866 = vmatmul.mubr.f32.gmra.mrb[0].mxu0 %v2614
  %v2867 = vpop.f32.mrb[0].mxu0
  %v2868 = vadd.f32 0.0, %v2867
  %v2869 = vpop.f32.mrb[0].mxu0
  %v2870 = vadd.f32 0.0, %v2869
  %2871 = vmatprep.mubr.f32.mxu0 0.0
  %2872 = vmatmul.mubr.f32.gmra.mrb[0].mxu0 %v2715
  %v2873 = vpop.f32.mrb[0].mxu0
  %v2874 = vadd.f32 0.0, %v2873
  %v2875 = vpop.f32.mrb[0].mxu0
  %v2876 = vadd.f32 0.0, %v2875
  %2877 = vdwg.mxu0
  %v2878 = vadd.f32 %v2784, %v2876
  %v2879 = vlaneseq
  %v2880 = vshrl.u32 %v2879, 7
  %v2881 = vsub.s32 2, %v2880
  %v2882 = vrot.slane %v17, %v2881
  %v2883 = vadd.f32 %v2878, %v2882
  %2884 = vmatprep.subr.mxu0 0.0
  %2885 = vmatpush1.msra.mxu0 %v1013
  %2886 = vmatprep.subr.mxu0 0.0
  %2887 = vmatpush1.msra.mxu0 %v1014
  %2888 = vmatprep.subr.mxu0 0.0
  %2889 = vmatpush1.msra.mxu0 %v1015
  %2890 = vmatprep.subr.mxu0 0.0
  %2891 = vmatpush1.msra.mxu0 %v1016
  %2892 = vmatprep.subr.mxu0 0.0
  %2893 = vmatpush1.msra.mxu0 0.0
  %2894 = vmatprep.subr.mxu0 0.0
  %2895 = vmatpush1.msra.mxu0 0.0
  %2896 = vmatprep.subr.mxu0 0.0
  %2897 = vmatpush1.msra.mxu0 0.0
  %2898 = vmatprep.subr.mxu0 0.0
  %2899 = vmatpush1.msra.mxu0 0.0
  %2900 = vmatprep.subr.mxu0 0.0
  %2901 = vmatpush1.msra.mxu0 0.0
  %2902 = vmatprep.subr.mxu0 0.0
  %2903 = vmatpush1.msra.mxu0 0.0
  %2904 = vmatprep.subr.mxu0 0.0
  %2905 = vmatpush1.msra.mxu0 0.0
  %2906 = vmatprep.subr.mxu0 0.0
  %2907 = vmatpush1.msra.mxu0 0.0
  %2908 = vmatprep.subr.mxu0 0.0
  %2909 = vmatpush1.msra.mxu0 0.0
  %2910 = vmatprep.subr.mxu0 0.0
  %2911 = vmatpush1.msra.mxu0 0.0
  %2912 = vmatprep.subr.mxu0 0.0
  %2913 = vmatpush1.msra.mxu0 0.0
  %2914 = vmatprep.subr.mxu0 0.0
  %2915 = vmatpush1.msra.mxu0 0.0
  %2916 = vmatprep.subr.mxu0 0.0
  %2917 = vmatpush1.msra.mxu0 0.0
  %2918 = vmatprep.subr.mxu0 0.0
  %2919 = vmatpush1.msra.mxu0 0.0
  %2920 = vmatprep.subr.mxu0 0.0
  %2921 = vmatpush1.msra.mxu0 0.0
  %2922 = vmatprep.subr.mxu0 0.0
  %2923 = vmatpush1.msra.mxu0 0.0
  %2924 = vmatprep.subr.mxu0 0.0
  %2925 = vmatpush1.msra.mxu0 0.0
  %2926 = vmatprep.subr.mxu0 0.0
  %2927 = vmatpush1.msra.mxu0 0.0
  %2928 = vmatprep.subr.mxu0 0.0
  %2929 = vmatpush1.msra.mxu0 0.0
  %2930 = vmatprep.subr.mxu0 0.0
  %2931 = vmatpush1.msra.mxu0 0.0
  %2932 = vmatprep.subr.mxu0 0.0
  %2933 = vmatpush1.msra.mxu0 0.0
  %2934 = vmatprep.subr.mxu0 0.0
  %2935 = vmatpush1.msra.mxu0 0.0
  %2936 = vmatprep.subr.mxu0 0.0
  %2937 = vmatpush1.msra.mxu0 0.0
  %2938 = vmatprep.subr.mxu0 0.0
  %2939 = vmatpush1.msra.mxu0 0.0
  %2940 = vmatprep.subr.mxu0 0.0
  %2941 = vmatpush1.msra.mxu0 0.0
  %2942 = vmatprep.subr.mxu0 0.0
  %2943 = vmatpush1.msra.mxu0 0.0
  %2944 = vmatprep.subr.mxu0 0.0
  %2945 = vmatpush1.msra.mxu0 0.0
  %2946 = vmatprep.subr.mxu0 0.0
  %2947 = vmatpush1.msra.mxu0 0.0
  %2948 = vmatprep.mubr.f32.mxu0 0.0
  %2949 = vmatmul.mubr.f32.gmra.mrb[0].mxu0 %v1099
  %v2950 = vpop.f32.mrb[0].mxu0
  %v2951 = vadd.f32 0.0, %v2950
  %v2952 = vpop.f32.mrb[0].mxu0
  %2953 = vdwg.mxu0
  %v2954 = vadd.f32 %v2883, %v2951
  %v2955 = vxor.u32 %v2954, 2147483648
  %v2956 = vmul.f32 %v2955, 1.442695
  %v2957 = vpow.pop %v2956
  %v2958 = vadd.f32 %v2957, 1.0
  %v2959 = vrcp.pop %v2958
  %v2960 = vmul.f32 1.0, %v2959
  %v2961 = vmul.f32 %v2960, 2.0
  %v2962 = vsub.f32 %v2961, 1.0
  %v2963 = vmul.f32 %v2960, 0.0
  %2965 = vrot.lane.b32.xlu0 %v2962, 64
  %v2966 = vpop.permute.xlu0 %2965
  %v2968 = vmul.f32 %v2960, %v2966
  %2970 = vrot.lane.b32.xlu0 %v2968, 32
  %v2971 = vpop.permute.xlu0 %2970
  %v2973 = vadd.f32 %v2963, %v2971
  %v2974 = vtanh.pop %v2973
  %2976 = vrot.lane.b32.xlu0 %v2974, 64
  %v2977 = vpop.permute.xlu0 %2976
  %v2979 = vmul.f32 %v2960, %v2977
  %v2980 = vadd.f32 %v2790, %v2870
  %v2981 = vadd.f32 %v2980, %v2882
  %2983 = vrot.lane.b32.xlu0 %v2979, 32
  %v2984 = vpop.permute.xlu0 %2983
  %v2985 = vsel %vm910, %v2984, 0
  %2987 = vmatprep.subr.mxu0 0.0
  %2988 = vmatpush1.msra.mxu0 %v1013
  %2989 = vmatprep.subr.mxu0 0.0
  %2990 = vmatpush1.msra.mxu0 %v1014
  %2991 = vmatprep.subr.mxu0 0.0
  %2992 = vmatpush1.msra.mxu0 %v1015
  %2993 = vmatprep.subr.mxu0 0.0
  %2994 = vmatpush1.msra.mxu0 %v1016
  %2995 = vmatprep.subr.mxu0 0.0
  %2996 = vmatpush1.msra.mxu0 0.0
  %2997 = vmatprep.subr.mxu0 0.0
  %2998 = vmatpush1.msra.mxu0 0.0
  %2999 = vmatprep.subr.mxu0 0.0
  %3000 = vmatpush1.msra.mxu0 0.0
  %3001 = vmatprep.subr.mxu0 0.0
  %3002 = vmatpush1.msra.mxu0 0.0
  %3003 = vmatprep.subr.mxu0 0.0
  %3004 = vmatpush1.msra.mxu0 0.0
  %3005 = vmatprep.subr.mxu0 0.0
  %3006 = vmatpush1.msra.mxu0 0.0
  %3007 = vmatprep.subr.mxu0 0.0
  %3008 = vmatpush1.msra.mxu0 0.0
  %3009 = vmatprep.subr.mxu0 0.0
  %3010 = vmatpush1.msra.mxu0 0.0
  %3011 = vmatprep.subr.mxu0 0.0
  %3012 = vmatpush1.msra.mxu0 0.0
  %3013 = vmatprep.subr.mxu0 0.0
  %3014 = vmatpush1.msra.mxu0 0.0
  %3015 = vmatprep.subr.mxu0 0.0
  %3016 = vmatpush1.msra.mxu0 0.0
  %3017 = vmatprep.subr.mxu0 0.0
  %3018 = vmatpush1.msra.mxu0 0.0
  %3019 = vmatprep.subr.mxu0 0.0
  %3020 = vmatpush1.msra.mxu0 0.0
  %3021 = vmatprep.subr.mxu0 0.0
  %3022 = vmatpush1.msra.mxu0 0.0
  %3023 = vmatprep.subr.mxu0 0.0
  %3024 = vmatpush1.msra.mxu0 0.0
  %3025 = vmatprep.subr.mxu0 0.0
  %3026 = vmatpush1.msra.mxu0 0.0
  %3027 = vmatprep.subr.mxu0 0.0
  %3028 = vmatpush1.msra.mxu0 0.0
  %3029 = vmatprep.subr.mxu0 0.0
  %3030 = vmatpush1.msra.mxu0 0.0
  %3031 = vmatprep.subr.mxu0 0.0
  %3032 = vmatpush1.msra.mxu0 0.0
  %3033 = vmatprep.subr.mxu0 0.0
  %3034 = vmatpush1.msra.mxu0 0.0
  %3035 = vmatprep.subr.mxu0 0.0
  %3036 = vmatpush1.msra.mxu0 0.0
  %3037 = vmatprep.subr.mxu0 0.0
  %3038 = vmatpush1.msra.mxu0 0.0
  %3039 = vmatprep.subr.mxu0 0.0
  %3040 = vmatpush1.msra.mxu0 0.0
  %3041 = vmatprep.subr.mxu0 0.0
  %3042 = vmatpush1.msra.mxu0 0.0
  %3043 = vmatprep.subr.mxu0 0.0
  %3044 = vmatpush1.msra.mxu0 0.0
  %3045 = vmatprep.subr.mxu0 0.0
  %3046 = vmatpush1.msra.mxu0 0.0
  %3047 = vmatprep.subr.mxu0 0.0
  %3048 = vmatpush1.msra.mxu0 0.0
  %3049 = vmatprep.subr.mxu0 0.0
  %3050 = vmatpush1.msra.mxu0 0.0
  %3051 = vmatprep.mubr.f32.mxu0 0.0
  %3052 = vmatmul.mubr.f32.gmra.mrb[0].mxu0 %v2985
  %v3053 = vpop.f32.mrb[0].mxu0
  %v3054 = vadd.f32 0.0, %v3053
  %v3055 = vpop.f32.mrb[0].mxu0
  %3056 = vdwg.mxu0
  %v3057 = vadd.f32 %v2981, %v3054
  %v3058 = vxor.u32 %v3057, 2147483648
  %v3059 = vmul.f32 %v3058, 1.442695
  %v3060 = vpow.pop %v3059
  %v3061 = vadd.f32 %v3060, 1.0
  %v3062 = vrcp.pop %v3061
  %v3063 = vmul.f32 1.0, %v3062
  %v3064 = vmul.f32 %v3063, 2.0
  %v3065 = vsub.f32 %v3064, 1.0
  %v3066 = vmul.f32 %v3063, %v2973
  %3068 = vrot.lane.b32.xlu0 %v3065, 64
  %v3069 = vpop.permute.xlu0 %3068
  %v3071 = vmul.f32 %v3063, %v3069
  %3073 = vrot.lane.b32.xlu0 %v3071, 32
  %v3074 = vpop.permute.xlu0 %3073
  %v3076 = vadd.f32 %v3066, %v3074
  %v3077 = vtanh.pop %v3076
  %3079 = vrot.lane.b32.xlu0 %v3077, 64
  %v3080 = vpop.permute.xlu0 %3079
  %v3082 = vmul.f32 %v3063, %v3080
  %v3083 = vadd.f32 %v2796, %v2864
  %v3084 = vadd.f32 %v3083, %v2882
  %3086 = vrot.lane.b32.xlu0 %v3082, 32
  %v3087 = vpop.permute.xlu0 %3086
  %v3088 = vsel %vm910, %v3087, 0
  %3090 = vmatprep.subr.mxu0 0.0
  %3091 = vmatpush1.msra.mxu0 %v1013
  %3092 = vmatprep.subr.mxu0 0.0
  %3093 = vmatpush1.msra.mxu0 %v1014
  %3094 = vmatprep.subr.mxu0 0.0
  %3095 = vmatpush1.msra.mxu0 %v1015
  %3096 = vmatprep.subr.mxu0 0.0
  %3097 = vmatpush1.msra.mxu0 %v1016
  %3098 = vmatprep.subr.mxu0 0.0
  %3099 = vmatpush1.msra.mxu0 0.0
  %3100 = vmatprep.subr.mxu0 0.0
  %3101 = vmatpush1.msra.mxu0 0.0
  %3102 = vmatprep.subr.mxu0 0.0
  %3103 = vmatpush1.msra.mxu0 0.0
  %3104 = vmatprep.subr.mxu0 0.0
  %3105 = vmatpush1.msra.mxu0 0.0
  %3106 = vmatprep.subr.mxu0 0.0
  %3107 = vmatpush1.msra.mxu0 0.0
  %3108 = vmatprep.subr.mxu0 0.0
  %3109 = vmatpush1.msra.mxu0 0.0
  %3110 = vmatprep.subr.mxu0 0.0
  %3111 = vmatpush1.msra.mxu0 0.0
  %3112 = vmatprep.subr.mxu0 0.0
  %3113 = vmatpush1.msra.mxu0 0.0
  %3114 = vmatprep.subr.mxu0 0.0
  %3115 = vmatpush1.msra.mxu0 0.0
  %3116 = vmatprep.subr.mxu0 0.0
  %3117 = vmatpush1.msra.mxu0 0.0
  %3118 = vmatprep.subr.mxu0 0.0
  %3119 = vmatpush1.msra.mxu0 0.0
  %3120 = vmatprep.subr.mxu0 0.0
  %3121 = vmatpush1.msra.mxu0 0.0
  %3122 = vmatprep.subr.mxu0 0.0
  %3123 = vmatpush1.msra.mxu0 0.0
  %3124 = vmatprep.subr.mxu0 0.0
  %3125 = vmatpush1.msra.mxu0 0.0
  %3126 = vmatprep.subr.mxu0 0.0
  %3127 = vmatpush1.msra.mxu0 0.0
  %3128 = vmatprep.subr.mxu0 0.0
  %3129 = vmatpush1.msra.mxu0 0.0
  %3130 = vmatprep.subr.mxu0 0.0
  %3131 = vmatpush1.msra.mxu0 0.0
  %3132 = vmatprep.subr.mxu0 0.0
  %3133 = vmatpush1.msra.mxu0 0.0
  %3134 = vmatprep.subr.mxu0 0.0
  %3135 = vmatpush1.msra.mxu0 0.0
  %3136 = vmatprep.subr.mxu0 0.0
  %3137 = vmatpush1.msra.mxu0 0.0
  %3138 = vmatprep.subr.mxu0 0.0
  %3139 = vmatpush1.msra.mxu0 0.0
  %3140 = vmatprep.subr.mxu0 0.0
  %3141 = vmatpush1.msra.mxu0 0.0
  %3142 = vmatprep.subr.mxu0 0.0
  %3143 = vmatpush1.msra.mxu0 0.0
  %3144 = vmatprep.subr.mxu0 0.0
  %3145 = vmatpush1.msra.mxu0 0.0
  %3146 = vmatprep.subr.mxu0 0.0
  %3147 = vmatpush1.msra.mxu0 0.0
  %3148 = vmatprep.subr.mxu0 0.0
  %3149 = vmatpush1.msra.mxu0 0.0
  %3150 = vmatprep.subr.mxu0 0.0
  %3151 = vmatpush1.msra.mxu0 0.0
  %3152 = vmatprep.subr.mxu0 0.0
  %3153 = vmatpush1.msra.mxu0 0.0
  %3154 = vmatprep.mubr.f32.mxu0 0.0
  %3155 = vmatmul.mubr.f32.gmra.mrb[0].mxu0 %v3088
  %v3156 = vpop.f32.mrb[0].mxu0
  %v3157 = vadd.f32 0.0, %v3156
  %v3158 = vpop.f32.mrb[0].mxu0
  %3159 = vdwg.mxu0
  %v3160 = vadd.f32 %v3084, %v3157
  %v3161 = vxor.u32 %v3160, 2147483648
  %v3162 = vmul.f32 %v3161, 1.442695
  %v3163 = vpow.pop %v3162
  %v3164 = vadd.f32 %v3163, 1.0
  %v3165 = vrcp.pop %v3164
  %v3166 = vmul.f32 1.0, %v3165
  %v3167 = vmul.f32 %v3166, 2.0
  %v3168 = vsub.f32 %v3167, 1.0
  %v3169 = vmul.f32 %v3166, %v3076
  %3171 = vrot.lane.b32.xlu0 %v3168, 64
  %v3172 = vpop.permute.xlu0 %3171
  %v3174 = vmul.f32 %v3166, %v3172
  %3176 = vrot.lane.b32.xlu0 %v3174, 32
  %v3177 = vpop.permute.xlu0 %3176
  %v3179 = vadd.f32 %v3169, %v3177
  %v3180 = vtanh.pop %v3179
  %3182 = vrot.lane.b32.xlu0 %v3180, 64
  %v3183 = vpop.permute.xlu0 %3182
  %v3185 = vmul.f32 %v3166, %v3183
  %v3186 = vadd.f32 %v2802, %v2858
  %v3187 = vadd.f32 %v3186, %v2882
  %3189 = vrot.lane.b32.xlu0 %v3185, 32
  %v3190 = vpop.permute.xlu0 %3189
  %v3191 = vsel %vm910, %v3190, 0
  %3193 = vmatprep.subr.mxu0 0.0
  %3194 = vmatpush1.msra.mxu0 %v1013
  %3195 = vmatprep.subr.mxu0 0.0
  %3196 = vmatpush1.msra.mxu0 %v1014
  %3197 = vmatprep.subr.mxu0 0.0
  %3198 = vmatpush1.msra.mxu0 %v1015
  %3199 = vmatprep.subr.mxu0 0.0
  %3200 = vmatpush1.msra.mxu0 %v1016
  %3201 = vmatprep.subr.mxu0 0.0
  %3202 = vmatpush1.msra.mxu0 0.0
  %3203 = vmatprep.subr.mxu0 0.0
  %3204 = vmatpush1.msra.mxu0 0.0
  %3205 = vmatprep.subr.mxu0 0.0
  %3206 = vmatpush1.msra.mxu0 0.0
  %3207 = vmatprep.subr.mxu0 0.0
  %3208 = vmatpush1.msra.mxu0 0.0
  %3209 = vmatprep.subr.mxu0 0.0
  %3210 = vmatpush1.msra.mxu0 0.0
  %3211 = vmatprep.subr.mxu0 0.0
  %3212 = vmatpush1.msra.mxu0 0.0
  %3213 = vmatprep.subr.mxu0 0.0
  %3214 = vmatpush1.msra.mxu0 0.0
  %3215 = vmatprep.subr.mxu0 0.0
  %3216 = vmatpush1.msra.mxu0 0.0
  %3217 = vmatprep.subr.mxu0 0.0
  %3218 = vmatpush1.msra.mxu0 0.0
  %3219 = vmatprep.subr.mxu0 0.0
  %3220 = vmatpush1.msra.mxu0 0.0
  %3221 = vmatprep.subr.mxu0 0.0
  %3222 = vmatpush1.msra.mxu0 0.0
  %3223 = vmatprep.subr.mxu0 0.0
  %3224 = vmatpush1.msra.mxu0 0.0
  %3225 = vmatprep.subr.mxu0 0.0
  %3226 = vmatpush1.msra.mxu0 0.0
  %3227 = vmatprep.subr.mxu0 0.0
  %3228 = vmatpush1.msra.mxu0 0.0
  %3229 = vmatprep.subr.mxu0 0.0
  %3230 = vmatpush1.msra.mxu0 0.0
  %3231 = vmatprep.subr.mxu0 0.0
  %3232 = vmatpush1.msra.mxu0 0.0
  %3233 = vmatprep.subr.mxu0 0.0
  %3234 = vmatpush1.msra.mxu0 0.0
  %3235 = vmatprep.subr.mxu0 0.0
  %3236 = vmatpush1.msra.mxu0 0.0
  %3237 = vmatprep.subr.mxu0 0.0
  %3238 = vmatpush1.msra.mxu0 0.0
  %3239 = vmatprep.subr.mxu0 0.0
  %3240 = vmatpush1.msra.mxu0 0.0
  %3241 = vmatprep.subr.mxu0 0.0
  %3242 = vmatpush1.msra.mxu0 0.0
  %3243 = vmatprep.subr.mxu0 0.0
  %3244 = vmatpush1.msra.mxu0 0.0
  %3245 = vmatprep.subr.mxu0 0.0
  %3246 = vmatpush1.msra.mxu0 0.0
  %3247 = vmatprep.subr.mxu0 0.0
  %3248 = vmatpush1.msra.mxu0 0.0
  %3249 = vmatprep.subr.mxu0 0.0
  %3250 = vmatpush1.msra.mxu0 0.0
  %3251 = vmatprep.subr.mxu0 0.0
  %3252 = vmatpush1.msra.mxu0 0.0
  %3253 = vmatprep.subr.mxu0 0.0
  %3254 = vmatpush1.msra.mxu0 0.0
  %3255 = vmatprep.subr.mxu0 0.0
  %3256 = vmatpush1.msra.mxu0 0.0
  %3257 = vmatprep.mubr.f32.mxu0 0.0
  %3258 = vmatmul.mubr.f32.gmra.mrb[0].mxu0 %v3191
  %v3259 = vpop.f32.mrb[0].mxu0
  %v3260 = vadd.f32 0.0, %v3259
  %v3261 = vpop.f32.mrb[0].mxu0
  %3262 = vdwg.mxu0
  %v3263 = vadd.f32 %v3187, %v3260
  %v3264 = vxor.u32 %v3263, 2147483648
  %v3265 = vmul.f32 %v3264, 1.442695
  %v3266 = vpow.pop %v3265
  %v3267 = vadd.f32 %v3266, 1.0
  %v3268 = vrcp.pop %v3267
  %v3269 = vmul.f32 1.0, %v3268
  %v3270 = vmul.f32 %v3269, 2.0
  %v3271 = vsub.f32 %v3270, 1.0
  %v3272 = vmul.f32 %v3269, %v3179
  %3274 = vrot.lane.b32.xlu0 %v3271, 64
  %v3275 = vpop.permute.xlu0 %3274
  %v3277 = vmul.f32 %v3269, %v3275
  %3279 = vrot.lane.b32.xlu0 %v3277, 32
  %v3280 = vpop.permute.xlu0 %3279
  %v3282 = vadd.f32 %v3272, %v3280
  %v3283 = vtanh.pop %v3282
  %3285 = vrot.lane.b32.xlu0 %v3283, 64
  %v3286 = vpop.permute.xlu0 %3285
  %v3288 = vmul.f32 %v3269, %v3286
  %v3289 = vadd.f32 %v2808, %v2852
  %v3290 = vadd.f32 %v3289, %v2882
  %3292 = vrot.lane.b32.xlu0 %v3288, 32
  %v3293 = vpop.permute.xlu0 %3292
  %v3294 = vsel %vm910, %v3293, 0
  %3296 = vmatprep.subr.mxu0 0.0
  %3297 = vmatpush1.msra.mxu0 %v1013
  %3298 = vmatprep.subr.mxu0 0.0
  %3299 = vmatpush1.msra.mxu0 %v1014
  %3300 = vmatprep.subr.mxu0 0.0
  %3301 = vmatpush1.msra.mxu0 %v1015
  %3302 = vmatprep.subr.mxu0 0.0
  %3303 = vmatpush1.msra.mxu0 %v1016
  %3304 = vmatprep.subr.mxu0 0.0
  %3305 = vmatpush1.msra.mxu0 0.0
  %3306 = vmatprep.subr.mxu0 0.0
  %3307 = vmatpush1.msra.mxu0 0.0
  %3308 = vmatprep.subr.mxu0 0.0
  %3309 = vmatpush1.msra.mxu0 0.0
  %3310 = vmatprep.subr.mxu0 0.0
  %3311 = vmatpush1.msra.mxu0 0.0
  %3312 = vmatprep.subr.mxu0 0.0
  %3313 = vmatpush1.msra.mxu0 0.0
  %3314 = vmatprep.subr.mxu0 0.0
  %3315 = vmatpush1.msra.mxu0 0.0
  %3316 = vmatprep.subr.mxu0 0.0
  %3317 = vmatpush1.msra.mxu0 0.0
  %3318 = vmatprep.subr.mxu0 0.0
  %3319 = vmatpush1.msra.mxu0 0.0
  %3320 = vmatprep.subr.mxu0 0.0
  %3321 = vmatpush1.msra.mxu0 0.0
  %3322 = vmatprep.subr.mxu0 0.0
  %3323 = vmatpush1.msra.mxu0 0.0
  %3324 = vmatprep.subr.mxu0 0.0
  %3325 = vmatpush1.msra.mxu0 0.0
  %3326 = vmatprep.subr.mxu0 0.0
  %3327 = vmatpush1.msra.mxu0 0.0
  %3328 = vmatprep.subr.mxu0 0.0
  %3329 = vmatpush1.msra.mxu0 0.0
  %3330 = vmatprep.subr.mxu0 0.0
  %3331 = vmatpush1.msra.mxu0 0.0
  %3332 = vmatprep.subr.mxu0 0.0
  %3333 = vmatpush1.msra.mxu0 0.0
  %3334 = vmatprep.subr.mxu0 0.0
  %3335 = vmatpush1.msra.mxu0 0.0
  %3336 = vmatprep.subr.mxu0 0.0
  %3337 = vmatpush1.msra.mxu0 0.0
  %3338 = vmatprep.subr.mxu0 0.0
  %3339 = vmatpush1.msra.mxu0 0.0
  %3340 = vmatprep.subr.mxu0 0.0
  %3341 = vmatpush1.msra.mxu0 0.0
  %3342 = vmatprep.subr.mxu0 0.0
  %3343 = vmatpush1.msra.mxu0 0.0
  %3344 = vmatprep.subr.mxu0 0.0
  %3345 = vmatpush1.msra.mxu0 0.0
  %3346 = vmatprep.subr.mxu0 0.0
  %3347 = vmatpush1.msra.mxu0 0.0
  %3348 = vmatprep.subr.mxu0 0.0
  %3349 = vmatpush1.msra.mxu0 0.0
  %3350 = vmatprep.subr.mxu0 0.0
  %3351 = vmatpush1.msra.mxu0 0.0
  %3352 = vmatprep.subr.mxu0 0.0
  %3353 = vmatpush1.msra.mxu0 0.0
  %3354 = vmatprep.subr.mxu0 0.0
  %3355 = vmatpush1.msra.mxu0 0.0
  %3356 = vmatprep.subr.mxu0 0.0
  %3357 = vmatpush1.msra.mxu0 0.0
  %3358 = vmatprep.subr.mxu0 0.0
  %3359 = vmatpush1.msra.mxu0 0.0
  %3360 = vmatprep.mubr.f32.mxu0 0.0
  %3361 = vmatmul.mubr.f32.gmra.mrb[0].mxu0 %v3294
  %v3362 = vpop.f32.mrb[0].mxu0
  %v3363 = vadd.f32 0.0, %v3362
  %v3364 = vpop.f32.mrb[0].mxu0
  %3365 = vdwg.mxu0
  %v3366 = vadd.f32 %v3290, %v3363
  %v3367 = vxor.u32 %v3366, 2147483648
  %v3368 = vmul.f32 %v3367, 1.442695
  %v3369 = vpow.pop %v3368
  %v3370 = vadd.f32 %v3369, 1.0
  %v3371 = vrcp.pop %v3370
  %v3372 = vmul.f32 1.0, %v3371
  %v3373 = vmul.f32 %v3372, 2.0
  %v3374 = vsub.f32 %v3373, 1.0
  %v3375 = vmul.f32 %v3372, %v3282
  %3377 = vrot.lane.b32.xlu0 %v3374, 64
  %v3378 = vpop.permute.xlu0 %3377
  %v3380 = vmul.f32 %v3372, %v3378
  %3382 = vrot.lane.b32.xlu0 %v3380, 32
  %v3383 = vpop.permute.xlu0 %3382
  %v3385 = vadd.f32 %v3375, %v3383
  %v3386 = vtanh.pop %v3385
  %3388 = vrot.lane.b32.xlu0 %v3386, 64
  %v3389 = vpop.permute.xlu0 %3388
  %v3391 = vmul.f32 %v3372, %v3389
  %v3392 = vadd.f32 %v2814, %v2846
  %v3393 = vadd.f32 %v3392, %v2882
  %3395 = vrot.lane.b32.xlu0 %v3391, 32
  %v3396 = vpop.permute.xlu0 %3395
  %v3397 = vsel %vm910, %v3396, 0
  %3399 = vmatprep.subr.mxu0 0.0
  %3400 = vmatpush1.msra.mxu0 %v1013
  %3401 = vmatprep.subr.mxu0 0.0
  %3402 = vmatpush1.msra.mxu0 %v1014
  %3403 = vmatprep.subr.mxu0 0.0
  %3404 = vmatpush1.msra.mxu0 %v1015
  %3405 = vmatprep.subr.mxu0 0.0
  %3406 = vmatpush1.msra.mxu0 %v1016
  %3407 = vmatprep.subr.mxu0 0.0
  %3408 = vmatpush1.msra.mxu0 0.0
  %3409 = vmatprep.subr.mxu0 0.0
  %3410 = vmatpush1.msra.mxu0 0.0
  %3411 = vmatprep.subr.mxu0 0.0
  %3412 = vmatpush1.msra.mxu0 0.0
  %3413 = vmatprep.subr.mxu0 0.0
  %3414 = vmatpush1.msra.mxu0 0.0
  %3415 = vmatprep.subr.mxu0 0.0
  %3416 = vmatpush1.msra.mxu0 0.0
  %3417 = vmatprep.subr.mxu0 0.0
  %3418 = vmatpush1.msra.mxu0 0.0
  %3419 = vmatprep.subr.mxu0 0.0
  %3420 = vmatpush1.msra.mxu0 0.0
  %3421 = vmatprep.subr.mxu0 0.0
  %3422 = vmatpush1.msra.mxu0 0.0
  %3423 = vmatprep.subr.mxu0 0.0
  %3424 = vmatpush1.msra.mxu0 0.0
  %3425 = vmatprep.subr.mxu0 0.0
  %3426 = vmatpush1.msra.mxu0 0.0
  %3427 = vmatprep.subr.mxu0 0.0
  %3428 = vmatpush1.msra.mxu0 0.0
  %3429 = vmatprep.subr.mxu0 0.0
  %3430 = vmatpush1.msra.mxu0 0.0
  %3431 = vmatprep.subr.mxu0 0.0
  %3432 = vmatpush1.msra.mxu0 0.0
  %3433 = vmatprep.subr.mxu0 0.0
  %3434 = vmatpush1.msra.mxu0 0.0
  %3435 = vmatprep.subr.mxu0 0.0
  %3436 = vmatpush1.msra.mxu0 0.0
  %3437 = vmatprep.subr.mxu0 0.0
  %3438 = vmatpush1.msra.mxu0 0.0
  %3439 = vmatprep.subr.mxu0 0.0
  %3440 = vmatpush1.msra.mxu0 0.0
  %3441 = vmatprep.subr.mxu0 0.0
  %3442 = vmatpush1.msra.mxu0 0.0
  %3443 = vmatprep.subr.mxu0 0.0
  %3444 = vmatpush1.msra.mxu0 0.0
  %3445 = vmatprep.subr.mxu0 0.0
  %3446 = vmatpush1.msra.mxu0 0.0
  %3447 = vmatprep.subr.mxu0 0.0
  %3448 = vmatpush1.msra.mxu0 0.0
  %3449 = vmatprep.subr.mxu0 0.0
  %3450 = vmatpush1.msra.mxu0 0.0
  %3451 = vmatprep.subr.mxu0 0.0
  %3452 = vmatpush1.msra.mxu0 0.0
  %3453 = vmatprep.subr.mxu0 0.0
  %3454 = vmatpush1.msra.mxu0 0.0
  %3455 = vmatprep.subr.mxu0 0.0
  %3456 = vmatpush1.msra.mxu0 0.0
  %3457 = vmatprep.subr.mxu0 0.0
  %3458 = vmatpush1.msra.mxu0 0.0
  %3459 = vmatprep.subr.mxu0 0.0
  %3460 = vmatpush1.msra.mxu0 0.0
  %3461 = vmatprep.subr.mxu0 0.0
  %3462 = vmatpush1.msra.mxu0 0.0
  %3463 = vmatprep.mubr.f32.mxu0 0.0
  %3464 = vmatmul.mubr.f32.gmra.mrb[0].mxu0 %v3397
  %v3465 = vpop.f32.mrb[0].mxu0
  %v3466 = vadd.f32 0.0, %v3465
  %v3467 = vpop.f32.mrb[0].mxu0
  %3468 = vdwg.mxu0
  %v3469 = vadd.f32 %v3393, %v3466
  %v3470 = vxor.u32 %v3469, 2147483648
  %v3471 = vmul.f32 %v3470, 1.442695
  %v3472 = vpow.pop %v3471
  %v3473 = vadd.f32 %v3472, 1.0
  %v3474 = vrcp.pop %v3473
  %v3475 = vmul.f32 1.0, %v3474
  %v3476 = vmul.f32 %v3475, 2.0
  %v3477 = vsub.f32 %v3476, 1.0
  %v3478 = vmul.f32 %v3475, %v3385
  %3480 = vrot.lane.b32.xlu0 %v3477, 64
  %v3481 = vpop.permute.xlu0 %3480
  %v3483 = vmul.f32 %v3475, %v3481
  %3485 = vrot.lane.b32.xlu0 %v3483, 32
  %v3486 = vpop.permute.xlu0 %3485
  %v3488 = vadd.f32 %v3478, %v3486
  %v3489 = vtanh.pop %v3488
  %3491 = vrot.lane.b32.xlu0 %v3489, 64
  %v3492 = vpop.permute.xlu0 %3491
  %v3494 = vmul.f32 %v3475, %v3492
  %v3495 = vadd.f32 %v2820, %v2840
  %v3496 = vadd.f32 %v3495, %v2882
  %3498 = vrot.lane.b32.xlu0 %v3494, 32
  %v3499 = vpop.permute.xlu0 %3498
  %v3500 = vsel %vm910, %v3499, 0
  %3502 = vmatprep.subr.mxu0 0.0
  %3503 = vmatpush1.msra.mxu0 %v1013
  %3504 = vmatprep.subr.mxu0 0.0
  %3505 = vmatpush1.msra.mxu0 %v1014
  %3506 = vmatprep.subr.mxu0 0.0
  %3507 = vmatpush1.msra.mxu0 %v1015
  %3508 = vmatprep.subr.mxu0 0.0
  %3509 = vmatpush1.msra.mxu0 %v1016
  %3510 = vmatprep.subr.mxu0 0.0
  %3511 = vmatpush1.msra.mxu0 0.0
  %3512 = vmatprep.subr.mxu0 0.0
  %3513 = vmatpush1.msra.mxu0 0.0
  %3514 = vmatprep.subr.mxu0 0.0
  %3515 = vmatpush1.msra.mxu0 0.0
  %3516 = vmatprep.subr.mxu0 0.0
  %3517 = vmatpush1.msra.mxu0 0.0
  %3518 = vmatprep.subr.mxu0 0.0
  %3519 = vmatpush1.msra.mxu0 0.0
  %3520 = vmatprep.subr.mxu0 0.0
  %3521 = vmatpush1.msra.mxu0 0.0
  %3522 = vmatprep.subr.mxu0 0.0
  %3523 = vmatpush1.msra.mxu0 0.0
  %3524 = vmatprep.subr.mxu0 0.0
  %3525 = vmatpush1.msra.mxu0 0.0
  %3526 = vmatprep.subr.mxu0 0.0
  %3527 = vmatpush1.msra.mxu0 0.0
  %3528 = vmatprep.subr.mxu0 0.0
  %3529 = vmatpush1.msra.mxu0 0.0
  %3530 = vmatprep.subr.mxu0 0.0
  %3531 = vmatpush1.msra.mxu0 0.0
  %3532 = vmatprep.subr.mxu0 0.0
  %3533 = vmatpush1.msra.mxu0 0.0
  %3534 = vmatprep.subr.mxu0 0.0
  %3535 = vmatpush1.msra.mxu0 0.0
  %3536 = vmatprep.subr.mxu0 0.0
  %3537 = vmatpush1.msra.mxu0 0.0
  %3538 = vmatprep.subr.mxu0 0.0
  %3539 = vmatpush1.msra.mxu0 0.0
  %3540 = vmatprep.subr.mxu0 0.0
  %3541 = vmatpush1.msra.mxu0 0.0
  %3542 = vmatprep.subr.mxu0 0.0
  %3543 = vmatpush1.msra.mxu0 0.0
  %3544 = vmatprep.subr.mxu0 0.0
  %3545 = vmatpush1.msra.mxu0 0.0
  %3546 = vmatprep.subr.mxu0 0.0
  %3547 = vmatpush1.msra.mxu0 0.0
  %3548 = vmatprep.subr.mxu0 0.0
  %3549 = vmatpush1.msra.mxu0 0.0
  %3550 = vmatprep.subr.mxu0 0.0
  %3551 = vmatpush1.msra.mxu0 0.0
  %3552 = vmatprep.subr.mxu0 0.0
  %3553 = vmatpush1.msra.mxu0 0.0
  %3554 = vmatprep.subr.mxu0 0.0
  %3555 = vmatpush1.msra.mxu0 0.0
  %3556 = vmatprep.subr.mxu0 0.0
  %3557 = vmatpush1.msra.mxu0 0.0
  %3558 = vmatprep.subr.mxu0 0.0
  %3559 = vmatpush1.msra.mxu0 0.0
  %3560 = vmatprep.subr.mxu0 0.0
  %3561 = vmatpush1.msra.mxu0 0.0
  %3562 = vmatprep.subr.mxu0 0.0
  %3563 = vmatpush1.msra.mxu0 0.0
  %3564 = vmatprep.subr.mxu0 0.0
  %3565 = vmatpush1.msra.mxu0 0.0
  %3566 = vmatprep.mubr.f32.mxu0 0.0
  %3567 = vmatmul.mubr.f32.gmra.mrb[0].mxu0 %v3500
  %v3568 = vpop.f32.mrb[0].mxu0
  %v3569 = vadd.f32 0.0, %v3568
  %v3570 = vpop.f32.mrb[0].mxu0
  %3571 = vdwg.mxu0
  %v3572 = vadd.f32 %v3496, %v3569
  %v3573 = vxor.u32 %v3572, 2147483648
  %v3574 = vmul.f32 %v3573, 1.442695
  %v3575 = vpow.pop %v3574
  %v3576 = vadd.f32 %v3575, 1.0
  %v3577 = vrcp.pop %v3576
  %v3578 = vmul.f32 1.0, %v3577
  %v3579 = vmul.f32 %v3578, 2.0
  %v3580 = vsub.f32 %v3579, 1.0
  %v3581 = vmul.f32 %v3578, %v3488
  %3583 = vrot.lane.b32.xlu0 %v3580, 64
  %v3584 = vpop.permute.xlu0 %3583
  %v3586 = vmul.f32 %v3578, %v3584
  %3588 = vrot.lane.b32.xlu0 %v3586, 32
  %v3589 = vpop.permute.xlu0 %3588
  %v3591 = vadd.f32 %v3581, %v3589
  %v3592 = vtanh.pop %v3591
  %3594 = vrot.lane.b32.xlu0 %v3592, 64
  %v3595 = vpop.permute.xlu0 %3594
  %v3597 = vmul.f32 %v3578, %v3595
  %v3598 = vadd.f32 %v2826, %v2834
  %v3599 = vadd.f32 %v3598, %v2882
  %3601 = vrot.lane.b32.xlu0 %v3597, 32
  %v3602 = vpop.permute.xlu0 %3601
  %v3603 = vsel %vm910, %v3602, 0
  %3605 = vmatprep.subr.mxu0 0.0
  %3606 = vmatpush1.msra.mxu0 %v1013
  %3607 = vmatprep.subr.mxu0 0.0
  %3608 = vmatpush1.msra.mxu0 %v1014
  %3609 = vmatprep.subr.mxu0 0.0
  %3610 = vmatpush1.msra.mxu0 %v1015
  %3611 = vmatprep.subr.mxu0 0.0
  %3612 = vmatpush1.msra.mxu0 %v1016
  %3613 = vmatprep.subr.mxu0 0.0
  %3614 = vmatpush1.msra.mxu0 0.0
  %3615 = vmatprep.subr.mxu0 0.0
  %3616 = vmatpush1.msra.mxu0 0.0
  %3617 = vmatprep.subr.mxu0 0.0
  %3618 = vmatpush1.msra.mxu0 0.0
  %3619 = vmatprep.subr.mxu0 0.0
  %3620 = vmatpush1.msra.mxu0 0.0
  %3621 = vmatprep.subr.mxu0 0.0
  %3622 = vmatpush1.msra.mxu0 0.0
  %3623 = vmatprep.subr.mxu0 0.0
  %3624 = vmatpush1.msra.mxu0 0.0
  %3625 = vmatprep.subr.mxu0 0.0
  %3626 = vmatpush1.msra.mxu0 0.0
  %3627 = vmatprep.subr.mxu0 0.0
  %3628 = vmatpush1.msra.mxu0 0.0
  %3629 = vmatprep.subr.mxu0 0.0
  %3630 = vmatpush1.msra.mxu0 0.0
  %3631 = vmatprep.subr.mxu0 0.0
  %3632 = vmatpush1.msra.mxu0 0.0
  %3633 = vmatprep.subr.mxu0 0.0
  %3634 = vmatpush1.msra.mxu0 0.0
  %3635 = vmatprep.subr.mxu0 0.0
  %3636 = vmatpush1.msra.mxu0 0.0
  %3637 = vmatprep.subr.mxu0 0.0
  %3638 = vmatpush1.msra.mxu0 0.0
  %3639 = vmatprep.subr.mxu0 0.0
  %3640 = vmatpush1.msra.mxu0 0.0
  %3641 = vmatprep.subr.mxu0 0.0
  %3642 = vmatpush1.msra.mxu0 0.0
  %3643 = vmatprep.subr.mxu0 0.0
  %3644 = vmatpush1.msra.mxu0 0.0
  %3645 = vmatprep.subr.mxu0 0.0
  %3646 = vmatpush1.msra.mxu0 0.0
  %3647 = vmatprep.subr.mxu0 0.0
  %3648 = vmatpush1.msra.mxu0 0.0
  %3649 = vmatprep.subr.mxu0 0.0
  %3650 = vmatpush1.msra.mxu0 0.0
  %3651 = vmatprep.subr.mxu0 0.0
  %3652 = vmatpush1.msra.mxu0 0.0
  %3653 = vmatprep.subr.mxu0 0.0
  %3654 = vmatpush1.msra.mxu0 0.0
  %3655 = vmatprep.subr.mxu0 0.0
  %3656 = vmatpush1.msra.mxu0 0.0
  %3657 = vmatprep.subr.mxu0 0.0
  %3658 = vmatpush1.msra.mxu0 0.0
  %3659 = vmatprep.subr.mxu0 0.0
  %3660 = vmatpush1.msra.mxu0 0.0
  %3661 = vmatprep.subr.mxu0 0.0
  %3662 = vmatpush1.msra.mxu0 0.0
  %3663 = vmatprep.subr.mxu0 0.0
  %3664 = vmatpush1.msra.mxu0 0.0
  %3665 = vmatprep.subr.mxu0 0.0
  %3666 = vmatpush1.msra.mxu0 0.0
  %3667 = vmatprep.subr.mxu0 0.0
  %3668 = vmatpush1.msra.mxu0 0.0
  %3669 = vmatprep.mubr.f32.mxu0 0.0
  %3670 = vmatmul.mubr.f32.gmra.mrb[0].mxu0 %v3603
  %v3671 = vpop.f32.mrb[0].mxu0
  %v3672 = vadd.f32 0.0, %v3671
  %v3673 = vpop.f32.mrb[0].mxu0
  %3674 = vdwg.mxu0
  %v3675 = vadd.f32 %v3599, %v3672
  %v3676 = vxor.u32 %v3675, 2147483648
  %v3677 = vmul.f32 %v3676, 1.442695
  %v3678 = vpow.pop %v3677
  %v3679 = vadd.f32 %v3678, 1.0
  %v3680 = vrcp.pop %v3679
  %v3681 = vmul.f32 1.0, %v3680
  %v3682 = vmul.f32 %v3681, 2.0
  %v3683 = vsub.f32 %v3682, 1.0
  %v3684 = vmul.f32 %v3681, %v3591
  %3686 = vrot.lane.b32.xlu0 %v3683, 64
  %v3687 = vpop.permute.xlu0 %3686
  %v3689 = vmul.f32 %v3681, %v3687
  %3691 = vrot.lane.b32.xlu0 %v3689, 32
  %v3692 = vpop.permute.xlu0 %3691
  %v3694 = vadd.f32 %v3684, %v3692
  %v3695 = vtanh.pop %v3694
  %3697 = vrot.lane.b32.xlu0 %v3695, 64
  %v3698 = vpop.permute.xlu0 %3697
  %v3700 = vmul.f32 %v3681, %v3698
  %v3701 = vadd.f32 %v2832, %v2828
  %v3702 = vadd.f32 %v3701, %v2882
  %3704 = vrot.lane.b32.xlu0 %v3700, 32
  %v3705 = vpop.permute.xlu0 %3704
  %v3706 = vsel %vm910, %v3705, 0
  %3708 = vmatprep.subr.mxu0 0.0
  %3709 = vmatpush1.msra.mxu0 %v1013
  %3710 = vmatprep.subr.mxu0 0.0
  %3711 = vmatpush1.msra.mxu0 %v1014
  %3712 = vmatprep.subr.mxu0 0.0
  %3713 = vmatpush1.msra.mxu0 %v1015
  %3714 = vmatprep.subr.mxu0 0.0
  %3715 = vmatpush1.msra.mxu0 %v1016
  %3716 = vmatprep.subr.mxu0 0.0
  %3717 = vmatpush1.msra.mxu0 0.0
  %3718 = vmatprep.subr.mxu0 0.0
  %3719 = vmatpush1.msra.mxu0 0.0
  %3720 = vmatprep.subr.mxu0 0.0
  %3721 = vmatpush1.msra.mxu0 0.0
  %3722 = vmatprep.subr.mxu0 0.0
  %3723 = vmatpush1.msra.mxu0 0.0
  %3724 = vmatprep.subr.mxu0 0.0
  %3725 = vmatpush1.msra.mxu0 0.0
  %3726 = vmatprep.subr.mxu0 0.0
  %3727 = vmatpush1.msra.mxu0 0.0
  %3728 = vmatprep.subr.mxu0 0.0
  %3729 = vmatpush1.msra.mxu0 0.0
  %3730 = vmatprep.subr.mxu0 0.0
  %3731 = vmatpush1.msra.mxu0 0.0
  %3732 = vmatprep.subr.mxu0 0.0
  %3733 = vmatpush1.msra.mxu0 0.0
  %3734 = vmatprep.subr.mxu0 0.0
  %3735 = vmatpush1.msra.mxu0 0.0
  %3736 = vmatprep.subr.mxu0 0.0
  %3737 = vmatpush1.msra.mxu0 0.0
  %3738 = vmatprep.subr.mxu0 0.0
  %3739 = vmatpush1.msra.mxu0 0.0
  %3740 = vmatprep.subr.mxu0 0.0
  %3741 = vmatpush1.msra.mxu0 0.0
  %3742 = vmatprep.subr.mxu0 0.0
  %3743 = vmatpush1.msra.mxu0 0.0
  %3744 = vmatprep.subr.mxu0 0.0
  %3745 = vmatpush1.msra.mxu0 0.0
  %3746 = vmatprep.subr.mxu0 0.0
  %3747 = vmatpush1.msra.mxu0 0.0
  %3748 = vmatprep.subr.mxu0 0.0
  %3749 = vmatpush1.msra.mxu0 0.0
  %3750 = vmatprep.subr.mxu0 0.0
  %3751 = vmatpush1.msra.mxu0 0.0
  %3752 = vmatprep.subr.mxu0 0.0
  %3753 = vmatpush1.msra.mxu0 0.0
  %3754 = vmatprep.subr.mxu0 0.0
  %3755 = vmatpush1.msra.mxu0 0.0
  %3756 = vmatprep.subr.mxu0 0.0
  %3757 = vmatpush1.msra.mxu0 0.0
  %3758 = vmatprep.subr.mxu0 0.0
  %3759 = vmatpush1.msra.mxu0 0.0
  %3760 = vmatprep.subr.mxu0 0.0
  %3761 = vmatpush1.msra.mxu0 0.0
  %3762 = vmatprep.subr.mxu0 0.0
  %3763 = vmatpush1.msra.mxu0 0.0
  %3764 = vmatprep.subr.mxu0 0.0
  %3765 = vmatpush1.msra.mxu0 0.0
  %3766 = vmatprep.subr.mxu0 0.0
  %3767 = vmatpush1.msra.mxu0 0.0
  %3768 = vmatprep.subr.mxu0 0.0
  %3769 = vmatpush1.msra.mxu0 0.0
  %3770 = vmatprep.subr.mxu0 0.0
  %3771 = vmatpush1.msra.mxu0 0.0
  %3772 = vmatprep.mubr.f32.mxu0 0.0
  %3773 = vmatmul.mubr.f32.gmra.mrb[0].mxu0 %v3706
  %v3774 = vpop.f32.mrb[0].mxu0
  %v3775 = vadd.f32 0.0, %v3774
  %v3776 = vpop.f32.mrb[0].mxu0
  %3777 = vdwg.mxu0
  %v3778 = vadd.f32 %v3702, %v3775
  %v3779 = vxor.u32 %v3778, 2147483648
  %v3780 = vmul.f32 %v3779, 1.442695
  %v3781 = vpow.pop %v3780
  %v3782 = vadd.f32 %v3781, 1.0
  %v3783 = vrcp.pop %v3782
  %v3784 = vmul.f32 1.0, %v3783
  %v3785 = vmul.f32 %v3784, 2.0
  %v3786 = vsub.f32 %v3785, 1.0
  %v3787 = vmul.f32 %v3784, %v3694
  %3789 = vrot.lane.b32.xlu0 %v3786, 64
  %v3790 = vpop.permute.xlu0 %3789
  %v3792 = vmul.f32 %v3784, %v3790
  %3794 = vrot.lane.b32.xlu0 %v3792, 32
  %v3795 = vpop.permute.xlu0 %3794
  %v3797 = vadd.f32 %v3787, %v3795
  %v3798 = vtanh.pop %v3797
  %3800 = vrot.lane.b32.xlu0 %v3798, 64
  %v3801 = vpop.permute.xlu0 %3800
  %v3803 = vmul.f32 %v3784, %v3801
  %v3804 = vadd.f32 %v2838, %v2822
  %v3805 = vadd.f32 %v3804, %v2882
  %3807 = vrot.lane.b32.xlu0 %v3803, 32
  %v3808 = vpop.permute.xlu0 %3807
  %v3809 = vsel %vm910, %v3808, 0
  %3811 = vmatprep.subr.mxu0 0.0
  %3812 = vmatpush1.msra.mxu0 %v1013
  %3813 = vmatprep.subr.mxu0 0.0
  %3814 = vmatpush1.msra.mxu0 %v1014
  %3815 = vmatprep.subr.mxu0 0.0
  %3816 = vmatpush1.msra.mxu0 %v1015
  %3817 = vmatprep.subr.mxu0 0.0
  %3818 = vmatpush1.msra.mxu0 %v1016
  %3819 = vmatprep.subr.mxu0 0.0
  %3820 = vmatpush1.msra.mxu0 0.0
  %3821 = vmatprep.subr.mxu0 0.0
  %3822 = vmatpush1.msra.mxu0 0.0
  %3823 = vmatprep.subr.mxu0 0.0
  %3824 = vmatpush1.msra.mxu0 0.0
  %3825 = vmatprep.subr.mxu0 0.0
  %3826 = vmatpush1.msra.mxu0 0.0
  %3827 = vmatprep.subr.mxu0 0.0
  %3828 = vmatpush1.msra.mxu0 0.0
  %3829 = vmatprep.subr.mxu0 0.0
  %3830 = vmatpush1.msra.mxu0 0.0
  %3831 = vmatprep.subr.mxu0 0.0
  %3832 = vmatpush1.msra.mxu0 0.0
  %3833 = vmatprep.subr.mxu0 0.0
  %3834 = vmatpush1.msra.mxu0 0.0
  %3835 = vmatprep.subr.mxu0 0.0
  %3836 = vmatpush1.msra.mxu0 0.0
  %3837 = vmatprep.subr.mxu0 0.0
  %3838 = vmatpush1.msra.mxu0 0.0
  %3839 = vmatprep.subr.mxu0 0.0
  %3840 = vmatpush1.msra.mxu0 0.0
  %3841 = vmatprep.subr.mxu0 0.0
  %3842 = vmatpush1.msra.mxu0 0.0
  %3843 = vmatprep.subr.mxu0 0.0
  %3844 = vmatpush1.msra.mxu0 0.0
  %3845 = vmatprep.subr.mxu0 0.0
  %3846 = vmatpush1.msra.mxu0 0.0
  %3847 = vmatprep.subr.mxu0 0.0
  %3848 = vmatpush1.msra.mxu0 0.0
  %3849 = vmatprep.subr.mxu0 0.0
  %3850 = vmatpush1.msra.mxu0 0.0
  %3851 = vmatprep.subr.mxu0 0.0
  %3852 = vmatpush1.msra.mxu0 0.0
  %3853 = vmatprep.subr.mxu0 0.0
  %3854 = vmatpush1.msra.mxu0 0.0
  %3855 = vmatprep.subr.mxu0 0.0
  %3856 = vmatpush1.msra.mxu0 0.0
  %3857 = vmatprep.subr.mxu0 0.0
  %3858 = vmatpush1.msra.mxu0 0.0
  %3859 = vmatprep.subr.mxu0 0.0
  %3860 = vmatpush1.msra.mxu0 0.0
  %3861 = vmatprep.subr.mxu0 0.0
  %3862 = vmatpush1.msra.mxu0 0.0
  %3863 = vmatprep.subr.mxu0 0.0
  %3864 = vmatpush1.msra.mxu0 0.0
  %3865 = vmatprep.subr.mxu0 0.0
  %3866 = vmatpush1.msra.mxu0 0.0
  %3867 = vmatprep.subr.mxu0 0.0
  %3868 = vmatpush1.msra.mxu0 0.0
  %3869 = vmatprep.subr.mxu0 0.0
  %3870 = vmatpush1.msra.mxu0 0.0
  %3871 = vmatprep.subr.mxu0 0.0
  %3872 = vmatpush1.msra.mxu0 0.0
  %3873 = vmatprep.subr.mxu0 0.0
  %3874 = vmatpush1.msra.mxu0 0.0
  %3875 = vmatprep.mubr.f32.mxu0 0.0
  %3876 = vmatmul.mubr.f32.gmra.mrb[0].mxu0 %v3809
  %v3877 = vpop.f32.mrb[0].mxu0
  %v3878 = vadd.f32 0.0, %v3877
  %v3879 = vpop.f32.mrb[0].mxu0
  %3880 = vdwg.mxu0
  %v3881 = vadd.f32 %v3805, %v3878
  %v3882 = vxor.u32 %v3881, 2147483648
  %v3883 = vmul.f32 %v3882, 1.442695
  %v3884 = vpow.pop %v3883
  %v3885 = vadd.f32 %v3884, 1.0
  %v3886 = vrcp.pop %v3885
  %v3887 = vmul.f32 1.0, %v3886
  %v3888 = vmul.f32 %v3887, 2.0
  %v3889 = vsub.f32 %v3888, 1.0
  %v3890 = vmul.f32 %v3887, %v3797
  %3892 = vrot.lane.b32.xlu0 %v3889, 64
  %v3893 = vpop.permute.xlu0 %3892
  %v3895 = vmul.f32 %v3887, %v3893
  %3897 = vrot.lane.b32.xlu0 %v3895, 32
  %v3898 = vpop.permute.xlu0 %3897
  %v3900 = vadd.f32 %v3890, %v3898
  %v3901 = vtanh.pop %v3900
  %3903 = vrot.lane.b32.xlu0 %v3901, 64
  %v3904 = vpop.permute.xlu0 %3903
  %v3906 = vmul.f32 %v3887, %v3904
  %v3907 = vadd.f32 %v2844, %v2816
  %v3908 = vadd.f32 %v3907, %v2882
  %3910 = vrot.lane.b32.xlu0 %v3906, 32
  %v3911 = vpop.permute.xlu0 %3910
  %v3912 = vsel %vm910, %v3911, 0
  %3914 = vmatprep.subr.mxu0 0.0
  %3915 = vmatpush1.msra.mxu0 %v1013
  %3916 = vmatprep.subr.mxu0 0.0
  %3917 = vmatpush1.msra.mxu0 %v1014
  %3918 = vmatprep.subr.mxu0 0.0
  %3919 = vmatpush1.msra.mxu0 %v1015
  %3920 = vmatprep.subr.mxu0 0.0
  %3921 = vmatpush1.msra.mxu0 %v1016
  %3922 = vmatprep.subr.mxu0 0.0
  %3923 = vmatpush1.msra.mxu0 0.0
  %3924 = vmatprep.subr.mxu0 0.0
  %3925 = vmatpush1.msra.mxu0 0.0
  %3926 = vmatprep.subr.mxu0 0.0
  %3927 = vmatpush1.msra.mxu0 0.0
  %3928 = vmatprep.subr.mxu0 0.0
  %3929 = vmatpush1.msra.mxu0 0.0
  %3930 = vmatprep.subr.mxu0 0.0
  %3931 = vmatpush1.msra.mxu0 0.0
  %3932 = vmatprep.subr.mxu0 0.0
  %3933 = vmatpush1.msra.mxu0 0.0
  %3934 = vmatprep.subr.mxu0 0.0
  %3935 = vmatpush1.msra.mxu0 0.0
  %3936 = vmatprep.subr.mxu0 0.0
  %3937 = vmatpush1.msra.mxu0 0.0
  %3938 = vmatprep.subr.mxu0 0.0
  %3939 = vmatpush1.msra.mxu0 0.0
  %3940 = vmatprep.subr.mxu0 0.0
  %3941 = vmatpush1.msra.mxu0 0.0
  %3942 = vmatprep.subr.mxu0 0.0
  %3943 = vmatpush1.msra.mxu0 0.0
  %3944 = vmatprep.subr.mxu0 0.0
  %3945 = vmatpush1.msra.mxu0 0.0
  %3946 = vmatprep.subr.mxu0 0.0
  %3947 = vmatpush1.msra.mxu0 0.0
  %3948 = vmatprep.subr.mxu0 0.0
  %3949 = vmatpush1.msra.mxu0 0.0
  %3950 = vmatprep.subr.mxu0 0.0
  %3951 = vmatpush1.msra.mxu0 0.0
  %3952 = vmatprep.subr.mxu0 0.0
  %3953 = vmatpush1.msra.mxu0 0.0
  %3954 = vmatprep.subr.mxu0 0.0
  %3955 = vmatpush1.msra.mxu0 0.0
  %3956 = vmatprep.subr.mxu0 0.0
  %3957 = vmatpush1.msra.mxu0 0.0
  %3958 = vmatprep.subr.mxu0 0.0
  %3959 = vmatpush1.msra.mxu0 0.0
  %3960 = vmatprep.subr.mxu0 0.0
  %3961 = vmatpush1.msra.mxu0 0.0
  %3962 = vmatprep.subr.mxu0 0.0
  %3963 = vmatpush1.msra.mxu0 0.0
  %3964 = vmatprep.subr.mxu0 0.0
  %3965 = vmatpush1.msra.mxu0 0.0
  %3966 = vmatprep.subr.mxu0 0.0
  %3967 = vmatpush1.msra.mxu0 0.0
  %3968 = vmatprep.subr.mxu0 0.0
  %3969 = vmatpush1.msra.mxu0 0.0
  %3970 = vmatprep.subr.mxu0 0.0
  %3971 = vmatpush1.msra.mxu0 0.0
  %3972 = vmatprep.subr.mxu0 0.0
  %3973 = vmatpush1.msra.mxu0 0.0
  %3974 = vmatprep.subr.mxu0 0.0
  %3975 = vmatpush1.msra.mxu0 0.0
  %3976 = vmatprep.subr.mxu0 0.0
  %3977 = vmatpush1.msra.mxu0 0.0
  %3978 = vmatprep.mubr.f32.mxu0 0.0
  %3979 = vmatmul.mubr.f32.gmra.mrb[0].mxu0 %v3912
  %v3980 = vpop.f32.mrb[0].mxu0
  %v3981 = vadd.f32 0.0, %v3980
  %v3982 = vpop.f32.mrb[0].mxu0
  %3983 = vdwg.mxu0
  %v3984 = vadd.f32 %v3908, %v3981
  %v3985 = vxor.u32 %v3984, 2147483648
  %v3986 = vmul.f32 %v3985, 1.442695
  %v3987 = vpow.pop %v3986
  %v3988 = vadd.f32 %v3987, 1.0
  %v3989 = vrcp.pop %v3988
  %v3990 = vmul.f32 1.0, %v3989
  %v3991 = vmul.f32 %v3990, 2.0
  %v3992 = vsub.f32 %v3991, 1.0
  %v3993 = vmul.f32 %v3990, %v3900
  %3995 = vrot.lane.b32.xlu0 %v3992, 64
  %v3996 = vpop.permute.xlu0 %3995
  %v3998 = vmul.f32 %v3990, %v3996
  %4000 = vrot.lane.b32.xlu0 %v3998, 32
  %v4001 = vpop.permute.xlu0 %4000
  %v4003 = vadd.f32 %v3993, %v4001
  %v4004 = vtanh.pop %v4003
  %4006 = vrot.lane.b32.xlu0 %v4004, 64
  %v4007 = vpop.permute.xlu0 %4006
  %v4009 = vmul.f32 %v3990, %v4007
  %v4010 = vadd.f32 %v2850, %v2810
  %v4011 = vadd.f32 %v4010, %v2882
  %4013 = vrot.lane.b32.xlu0 %v4009, 32
  %v4014 = vpop.permute.xlu0 %4013
  %v4015 = vsel %vm910, %v4014, 0
  %4017 = vmatprep.subr.mxu0 0.0
  %4018 = vmatpush1.msra.mxu0 %v1013
  %4019 = vmatprep.subr.mxu0 0.0
  %4020 = vmatpush1.msra.mxu0 %v1014
  %4021 = vmatprep.subr.mxu0 0.0
  %4022 = vmatpush1.msra.mxu0 %v1015
  %4023 = vmatprep.subr.mxu0 0.0
  %4024 = vmatpush1.msra.mxu0 %v1016
  %4025 = vmatprep.subr.mxu0 0.0
  %4026 = vmatpush1.msra.mxu0 0.0
  %4027 = vmatprep.subr.mxu0 0.0
  %4028 = vmatpush1.msra.mxu0 0.0
  %4029 = vmatprep.subr.mxu0 0.0
  %4030 = vmatpush1.msra.mxu0 0.0
  %4031 = vmatprep.subr.mxu0 0.0
  %4032 = vmatpush1.msra.mxu0 0.0
  %4033 = vmatprep.subr.mxu0 0.0
  %4034 = vmatpush1.msra.mxu0 0.0
  %4035 = vmatprep.subr.mxu0 0.0
  %4036 = vmatpush1.msra.mxu0 0.0
  %4037 = vmatprep.subr.mxu0 0.0
  %4038 = vmatpush1.msra.mxu0 0.0
  %4039 = vmatprep.subr.mxu0 0.0
  %4040 = vmatpush1.msra.mxu0 0.0
  %4041 = vmatprep.subr.mxu0 0.0
  %4042 = vmatpush1.msra.mxu0 0.0
  %4043 = vmatprep.subr.mxu0 0.0
  %4044 = vmatpush1.msra.mxu0 0.0
  %4045 = vmatprep.subr.mxu0 0.0
  %4046 = vmatpush1.msra.mxu0 0.0
  %4047 = vmatprep.subr.mxu0 0.0
  %4048 = vmatpush1.msra.mxu0 0.0
  %4049 = vmatprep.subr.mxu0 0.0
  %4050 = vmatpush1.msra.mxu0 0.0
  %4051 = vmatprep.subr.mxu0 0.0
  %4052 = vmatpush1.msra.mxu0 0.0
  %4053 = vmatprep.subr.mxu0 0.0
  %4054 = vmatpush1.msra.mxu0 0.0
  %4055 = vmatprep.subr.mxu0 0.0
  %4056 = vmatpush1.msra.mxu0 0.0
  %4057 = vmatprep.subr.mxu0 0.0
  %4058 = vmatpush1.msra.mxu0 0.0
  %4059 = vmatprep.subr.mxu0 0.0
  %4060 = vmatpush1.msra.mxu0 0.0
  %4061 = vmatprep.subr.mxu0 0.0
  %4062 = vmatpush1.msra.mxu0 0.0
  %4063 = vmatprep.subr.mxu0 0.0
  %4064 = vmatpush1.msra.mxu0 0.0
  %4065 = vmatprep.subr.mxu0 0.0
  %4066 = vmatpush1.msra.mxu0 0.0
  %4067 = vmatprep.subr.mxu0 0.0
  %4068 = vmatpush1.msra.mxu0 0.0
  %4069 = vmatprep.subr.mxu0 0.0
  %4070 = vmatpush1.msra.mxu0 0.0
  %4071 = vmatprep.subr.mxu0 0.0
  %4072 = vmatpush1.msra.mxu0 0.0
  %4073 = vmatprep.subr.mxu0 0.0
  %4074 = vmatpush1.msra.mxu0 0.0
  %4075 = vmatprep.subr.mxu0 0.0
  %4076 = vmatpush1.msra.mxu0 0.0
  %4077 = vmatprep.subr.mxu0 0.0
  %4078 = vmatpush1.msra.mxu0 0.0
  %4079 = vmatprep.subr.mxu0 0.0
  %4080 = vmatpush1.msra.mxu0 0.0
  %4081 = vmatprep.mubr.f32.mxu0 0.0
  %4082 = vmatmul.mubr.f32.gmra.mrb[0].mxu0 %v4015
  %v4083 = vpop.f32.mrb[0].mxu0
  %v4084 = vadd.f32 0.0, %v4083
  %v4085 = vpop.f32.mrb[0].mxu0
  %4086 = vdwg.mxu0
  %v4087 = vadd.f32 %v4011, %v4084
  %v4088 = vxor.u32 %v4087, 2147483648
  %v4089 = vmul.f32 %v4088, 1.442695
  %v4090 = vpow.pop %v4089
  %v4091 = vadd.f32 %v4090, 1.0
  %v4092 = vrcp.pop %v4091
  %v4093 = vmul.f32 1.0, %v4092
  %v4094 = vmul.f32 %v4093, 2.0
  %v4095 = vsub.f32 %v4094, 1.0
  %v4096 = vmul.f32 %v4093, %v4003
  %4098 = vrot.lane.b32.xlu0 %v4095, 64
  %v4099 = vpop.permute.xlu0 %4098
  %v4101 = vmul.f32 %v4093, %v4099
  %4103 = vrot.lane.b32.xlu0 %v4101, 32
  %v4104 = vpop.permute.xlu0 %4103
  %v4106 = vadd.f32 %v4096, %v4104
  %v4107 = vtanh.pop %v4106
  %4109 = vrot.lane.b32.xlu0 %v4107, 64
  %v4110 = vpop.permute.xlu0 %4109
  %v4112 = vmul.f32 %v4093, %v4110
  %v4113 = vadd.f32 %v2856, %v2804
  %v4114 = vadd.f32 %v4113, %v2882
  %4116 = vrot.lane.b32.xlu0 %v4112, 32
  %v4117 = vpop.permute.xlu0 %4116
  %v4118 = vsel %vm910, %v4117, 0
  %4120 = vmatprep.subr.mxu0 0.0
  %4121 = vmatpush1.msra.mxu0 %v1013
  %4122 = vmatprep.subr.mxu0 0.0
  %4123 = vmatpush1.msra.mxu0 %v1014
  %4124 = vmatprep.subr.mxu0 0.0
  %4125 = vmatpush1.msra.mxu0 %v1015
  %4126 = vmatprep.subr.mxu0 0.0
  %4127 = vmatpush1.msra.mxu0 %v1016
  %4128 = vmatprep.subr.mxu0 0.0
  %4129 = vmatpush1.msra.mxu0 0.0
  %4130 = vmatprep.subr.mxu0 0.0
  %4131 = vmatpush1.msra.mxu0 0.0
  %4132 = vmatprep.subr.mxu0 0.0
  %4133 = vmatpush1.msra.mxu0 0.0
  %4134 = vmatprep.subr.mxu0 0.0
  %4135 = vmatpush1.msra.mxu0 0.0
  %4136 = vmatprep.subr.mxu0 0.0
  %4137 = vmatpush1.msra.mxu0 0.0
  %4138 = vmatprep.subr.mxu0 0.0
  %4139 = vmatpush1.msra.mxu0 0.0
  %4140 = vmatprep.subr.mxu0 0.0
  %4141 = vmatpush1.msra.mxu0 0.0
  %4142 = vmatprep.subr.mxu0 0.0
  %4143 = vmatpush1.msra.mxu0 0.0
  %4144 = vmatprep.subr.mxu0 0.0
  %4145 = vmatpush1.msra.mxu0 0.0
  %4146 = vmatprep.subr.mxu0 0.0
  %4147 = vmatpush1.msra.mxu0 0.0
  %4148 = vmatprep.subr.mxu0 0.0
  %4149 = vmatpush1.msra.mxu0 0.0
  %4150 = vmatprep.subr.mxu0 0.0
  %4151 = vmatpush1.msra.mxu0 0.0
  %4152 = vmatprep.subr.mxu0 0.0
  %4153 = vmatpush1.msra.mxu0 0.0
  %4154 = vmatprep.subr.mxu0 0.0
  %4155 = vmatpush1.msra.mxu0 0.0
  %4156 = vmatprep.subr.mxu0 0.0
  %4157 = vmatpush1.msra.mxu0 0.0
  %4158 = vmatprep.subr.mxu0 0.0
  %4159 = vmatpush1.msra.mxu0 0.0
  %4160 = vmatprep.subr.mxu0 0.0
  %4161 = vmatpush1.msra.mxu0 0.0
  %4162 = vmatprep.subr.mxu0 0.0
  %4163 = vmatpush1.msra.mxu0 0.0
  %4164 = vmatprep.subr.mxu0 0.0
  %4165 = vmatpush1.msra.mxu0 0.0
  %4166 = vmatprep.subr.mxu0 0.0
  %4167 = vmatpush1.msra.mxu0 0.0
  %4168 = vmatprep.subr.mxu0 0.0
  %4169 = vmatpush1.msra.mxu0 0.0
  %4170 = vmatprep.subr.mxu0 0.0
  %4171 = vmatpush1.msra.mxu0 0.0
  %4172 = vmatprep.subr.mxu0 0.0
  %4173 = vmatpush1.msra.mxu0 0.0
  %4174 = vmatprep.subr.mxu0 0.0
  %4175 = vmatpush1.msra.mxu0 0.0
  %4176 = vmatprep.subr.mxu0 0.0
  %4177 = vmatpush1.msra.mxu0 0.0
  %4178 = vmatprep.subr.mxu0 0.0
  %4179 = vmatpush1.msra.mxu0 0.0
  %4180 = vmatprep.subr.mxu0 0.0
  %4181 = vmatpush1.msra.mxu0 0.0
  %4182 = vmatprep.subr.mxu0 0.0
  %4183 = vmatpush1.msra.mxu0 0.0
  %4184 = vmatprep.mubr.f32.mxu0 0.0
  %4185 = vmatmul.mubr.f32.gmra.mrb[0].mxu0 %v4118
  %v4186 = vpop.f32.mrb[0].mxu0
  %v4187 = vadd.f32 0.0, %v4186
  %v4188 = vpop.f32.mrb[0].mxu0
  %4189 = vdwg.mxu0
  %v4190 = vadd.f32 %v4114, %v4187
  %v4191 = vxor.u32 %v4190, 2147483648
  %v4192 = vmul.f32 %v4191, 1.442695
  %v4193 = vpow.pop %v4192
  %v4194 = vadd.f32 %v4193, 1.0
  %v4195 = vrcp.pop %v4194
  %v4196 = vmul.f32 1.0, %v4195
  %v4197 = vmul.f32 %v4196, 2.0
  %v4198 = vsub.f32 %v4197, 1.0
  %v4199 = vmul.f32 %v4196, %v4106
  %4201 = vrot.lane.b32.xlu0 %v4198, 64
  %v4202 = vpop.permute.xlu0 %4201
  %v4204 = vmul.f32 %v4196, %v4202
  %4206 = vrot.lane.b32.xlu0 %v4204, 32
  %v4207 = vpop.permute.xlu0 %4206
  %v4209 = vadd.f32 %v4199, %v4207
  %v4210 = vtanh.pop %v4209
  %4212 = vrot.lane.b32.xlu0 %v4210, 64
  %v4213 = vpop.permute.xlu0 %4212
  %v4215 = vmul.f32 %v4196, %v4213
  %v4216 = vadd.f32 %v2862, %v2798
  %v4217 = vadd.f32 %v4216, %v2882
  %4219 = vrot.lane.b32.xlu0 %v4215, 32
  %v4220 = vpop.permute.xlu0 %4219
  %v4221 = vsel %vm910, %v4220, 0
  %4223 = vmatprep.subr.mxu0 0.0
  %4224 = vmatpush1.msra.mxu0 %v1013
  %4225 = vmatprep.subr.mxu0 0.0
  %4226 = vmatpush1.msra.mxu0 %v1014
  %4227 = vmatprep.subr.mxu0 0.0
  %4228 = vmatpush1.msra.mxu0 %v1015
  %4229 = vmatprep.subr.mxu0 0.0
  %4230 = vmatpush1.msra.mxu0 %v1016
  %4231 = vmatprep.subr.mxu0 0.0
  %4232 = vmatpush1.msra.mxu0 0.0
  %4233 = vmatprep.subr.mxu0 0.0
  %4234 = vmatpush1.msra.mxu0 0.0
  %4235 = vmatprep.subr.mxu0 0.0
  %4236 = vmatpush1.msra.mxu0 0.0
  %4237 = vmatprep.subr.mxu0 0.0
  %4238 = vmatpush1.msra.mxu0 0.0
  %4239 = vmatprep.subr.mxu0 0.0
  %4240 = vmatpush1.msra.mxu0 0.0
  %4241 = vmatprep.subr.mxu0 0.0
  %4242 = vmatpush1.msra.mxu0 0.0
  %4243 = vmatprep.subr.mxu0 0.0
  %4244 = vmatpush1.msra.mxu0 0.0
  %4245 = vmatprep.subr.mxu0 0.0
  %4246 = vmatpush1.msra.mxu0 0.0
  %4247 = vmatprep.subr.mxu0 0.0
  %4248 = vmatpush1.msra.mxu0 0.0
  %4249 = vmatprep.subr.mxu0 0.0
  %4250 = vmatpush1.msra.mxu0 0.0
  %4251 = vmatprep.subr.mxu0 0.0
  %4252 = vmatpush1.msra.mxu0 0.0
  %4253 = vmatprep.subr.mxu0 0.0
  %4254 = vmatpush1.msra.mxu0 0.0
  %4255 = vmatprep.subr.mxu0 0.0
  %4256 = vmatpush1.msra.mxu0 0.0
  %4257 = vmatprep.subr.mxu0 0.0
  %4258 = vmatpush1.msra.mxu0 0.0
  %4259 = vmatprep.subr.mxu0 0.0
  %4260 = vmatpush1.msra.mxu0 0.0
  %4261 = vmatprep.subr.mxu0 0.0
  %4262 = vmatpush1.msra.mxu0 0.0
  %4263 = vmatprep.subr.mxu0 0.0
  %4264 = vmatpush1.msra.mxu0 0.0
  %4265 = vmatprep.subr.mxu0 0.0
  %4266 = vmatpush1.msra.mxu0 0.0
  %4267 = vmatprep.subr.mxu0 0.0
  %4268 = vmatpush1.msra.mxu0 0.0
  %4269 = vmatprep.subr.mxu0 0.0
  %4270 = vmatpush1.msra.mxu0 0.0
  %4271 = vmatprep.subr.mxu0 0.0
  %4272 = vmatpush1.msra.mxu0 0.0
  %4273 = vmatprep.subr.mxu0 0.0
  %4274 = vmatpush1.msra.mxu0 0.0
  %4275 = vmatprep.subr.mxu0 0.0
  %4276 = vmatpush1.msra.mxu0 0.0
  %4277 = vmatprep.subr.mxu0 0.0
  %4278 = vmatpush1.msra.mxu0 0.0
  %4279 = vmatprep.subr.mxu0 0.0
  %4280 = vmatpush1.msra.mxu0 0.0
  %4281 = vmatprep.subr.mxu0 0.0
  %4282 = vmatpush1.msra.mxu0 0.0
  %4283 = vmatprep.subr.mxu0 0.0
  %4284 = vmatpush1.msra.mxu0 0.0
  %4285 = vmatprep.subr.mxu0 0.0
  %4286 = vmatpush1.msra.mxu0 0.0
  %4287 = vmatprep.mubr.f32.mxu0 0.0
  %4288 = vmatmul.mubr.f32.gmra.mrb[0].mxu0 %v4221
  %v4289 = vpop.f32.mrb[0].mxu0
  %v4290 = vadd.f32 0.0, %v4289
  %v4291 = vpop.f32.mrb[0].mxu0
  %4292 = vdwg.mxu0
  %v4293 = vadd.f32 %v4217, %v4290
  %v4294 = vxor.u32 %v4293, 2147483648
  %v4295 = vmul.f32 %v4294, 1.442695
  %v4296 = vpow.pop %v4295
  %v4297 = vadd.f32 %v4296, 1.0
  %v4298 = vrcp.pop %v4297
  %v4299 = vmul.f32 1.0, %v4298
  %v4300 = vmul.f32 %v4299, 2.0
  %v4301 = vsub.f32 %v4300, 1.0
  %v4302 = vmul.f32 %v4299, %v4209
  %4304 = vrot.lane.b32.xlu0 %v4301, 64
  %v4305 = vpop.permute.xlu0 %4304
  %v4307 = vmul.f32 %v4299, %v4305
  %4309 = vrot.lane.b32.xlu0 %v4307, 32
  %v4310 = vpop.permute.xlu0 %4309
  %v4312 = vadd.f32 %v4302, %v4310
  %v4313 = vtanh.pop %v4312
  %4315 = vrot.lane.b32.xlu0 %v4313, 64
  %v4316 = vpop.permute.xlu0 %4315
  %v4318 = vmul.f32 %v4299, %v4316
  %v4319 = vadd.f32 %v2868, %v2792
  %v4320 = vadd.f32 %v4319, %v2882
  %4322 = vrot.lane.b32.xlu0 %v4318, 32
  %v4323 = vpop.permute.xlu0 %4322
  %v4324 = vsel %vm910, %v4323, 0
  %4326 = vmatprep.subr.mxu0 0.0
  %4327 = vmatpush1.msra.mxu0 %v1013
  %4328 = vmatprep.subr.mxu0 0.0
  %4329 = vmatpush1.msra.mxu0 %v1014
  %4330 = vmatprep.subr.mxu0 0.0
  %4331 = vmatpush1.msra.mxu0 %v1015
  %4332 = vmatprep.subr.mxu0 0.0
  %4333 = vmatpush1.msra.mxu0 %v1016
  %4334 = vmatprep.subr.mxu0 0.0
  %4335 = vmatpush1.msra.mxu0 0.0
  %4336 = vmatprep.subr.mxu0 0.0
  %4337 = vmatpush1.msra.mxu0 0.0
  %4338 = vmatprep.subr.mxu0 0.0
  %4339 = vmatpush1.msra.mxu0 0.0
  %4340 = vmatprep.subr.mxu0 0.0
  %4341 = vmatpush1.msra.mxu0 0.0
  %4342 = vmatprep.subr.mxu0 0.0
  %4343 = vmatpush1.msra.mxu0 0.0
  %4344 = vmatprep.subr.mxu0 0.0
  %4345 = vmatpush1.msra.mxu0 0.0
  %4346 = vmatprep.subr.mxu0 0.0
  %4347 = vmatpush1.msra.mxu0 0.0
  %4348 = vmatprep.subr.mxu0 0.0
  %4349 = vmatpush1.msra.mxu0 0.0
  %4350 = vmatprep.subr.mxu0 0.0
  %4351 = vmatpush1.msra.mxu0 0.0
  %4352 = vmatprep.subr.mxu0 0.0
  %4353 = vmatpush1.msra.mxu0 0.0
  %4354 = vmatprep.subr.mxu0 0.0
  %4355 = vmatpush1.msra.mxu0 0.0
  %4356 = vmatprep.subr.mxu0 0.0
  %4357 = vmatpush1.msra.mxu0 0.0
  %4358 = vmatprep.subr.mxu0 0.0
  %4359 = vmatpush1.msra.mxu0 0.0
  %4360 = vmatprep.subr.mxu0 0.0
  %4361 = vmatpush1.msra.mxu0 0.0
  %4362 = vmatprep.subr.mxu0 0.0
  %4363 = vmatpush1.msra.mxu0 0.0
  %4364 = vmatprep.subr.mxu0 0.0
  %4365 = vmatpush1.msra.mxu0 0.0
  %4366 = vmatprep.subr.mxu0 0.0
  %4367 = vmatpush1.msra.mxu0 0.0
  %4368 = vmatprep.subr.mxu0 0.0
  %4369 = vmatpush1.msra.mxu0 0.0
  %4370 = vmatprep.subr.mxu0 0.0
  %4371 = vmatpush1.msra.mxu0 0.0
  %4372 = vmatprep.subr.mxu0 0.0
  %4373 = vmatpush1.msra.mxu0 0.0
  %4374 = vmatprep.subr.mxu0 0.0
  %4375 = vmatpush1.msra.mxu0 0.0
  %4376 = vmatprep.subr.mxu0 0.0
  %4377 = vmatpush1.msra.mxu0 0.0
  %4378 = vmatprep.subr.mxu0 0.0
  %4379 = vmatpush1.msra.mxu0 0.0
  %4380 = vmatprep.subr.mxu0 0.0
  %4381 = vmatpush1.msra.mxu0 0.0
  %4382 = vmatprep.subr.mxu0 0.0
  %4383 = vmatpush1.msra.mxu0 0.0
  %4384 = vmatprep.subr.mxu0 0.0
  %4385 = vmatpush1.msra.mxu0 0.0
  %4386 = vmatprep.subr.mxu0 0.0
  %4387 = vmatpush1.msra.mxu0 0.0
  %4388 = vmatprep.subr.mxu0 0.0
  %4389 = vmatpush1.msra.mxu0 0.0
  %4390 = vmatprep.mubr.f32.mxu0 0.0
  %4391 = vmatmul.mubr.f32.gmra.mrb[0].mxu0 %v4324
  %v4392 = vpop.f32.mrb[0].mxu0
  %v4393 = vadd.f32 0.0, %v4392
  %v4394 = vpop.f32.mrb[0].mxu0
  %4395 = vdwg.mxu0
  %v4396 = vadd.f32 %v4320, %v4393
  %v4397 = vxor.u32 %v4396, 2147483648
  %v4398 = vmul.f32 %v4397, 1.442695
  %v4399 = vpow.pop %v4398
  %v4400 = vadd.f32 %v4399, 1.0
  %v4401 = vrcp.pop %v4400
  %v4402 = vmul.f32 1.0, %v4401
  %v4403 = vmul.f32 %v4402, 2.0
  %v4404 = vsub.f32 %v4403, 1.0
  %v4405 = vmul.f32 %v4402, %v4312
  %4407 = vrot.lane.b32.xlu0 %v4404, 64
  %v4408 = vpop.permute.xlu0 %4407
  %v4410 = vmul.f32 %v4402, %v4408
  %4412 = vrot.lane.b32.xlu0 %v4410, 32
  %v4413 = vpop.permute.xlu0 %4412
  %v4415 = vadd.f32 %v4405, %v4413
  %v4416 = vtanh.pop %v4415
  %4418 = vrot.lane.b32.xlu0 %v4416, 64
  %v4419 = vpop.permute.xlu0 %4418
  %v4421 = vmul.f32 %v4402, %v4419
  %v4422 = vadd.f32 %v2874, %v2786
  %v4423 = vadd.f32 %v4422, %v2882
  %4425 = vrot.lane.b32.xlu0 %v4421, 32
  %v4426 = vpop.permute.xlu0 %4425
  %v4427 = vsel %vm910, %v4426, 0
  %4429 = vmatprep.subr.mxu0 0.0
  %4430 = vmatpush1.msra.mxu0 %v1013
  %4431 = vmatprep.subr.mxu0 0.0
  %4432 = vmatpush1.msra.mxu0 %v1014
  %4433 = vmatprep.subr.mxu0 0.0
  %4434 = vmatpush1.msra.mxu0 %v1015
  %4435 = vmatprep.subr.mxu0 0.0
  %4436 = vmatpush1.msra.mxu0 %v1016
  %4437 = vmatprep.subr.mxu0 0.0
  %4438 = vmatpush1.msra.mxu0 0.0
  %4439 = vmatprep.subr.mxu0 0.0
  %4440 = vmatpush1.msra.mxu0 0.0
  %4441 = vmatprep.subr.mxu0 0.0
  %4442 = vmatpush1.msra.mxu0 0.0
  %4443 = vmatprep.subr.mxu0 0.0
  %4444 = vmatpush1.msra.mxu0 0.0
  %4445 = vmatprep.subr.mxu0 0.0
  %4446 = vmatpush1.msra.mxu0 0.0
  %4447 = vmatprep.subr.mxu0 0.0
  %4448 = vmatpush1.msra.mxu0 0.0
  %4449 = vmatprep.subr.mxu0 0.0
  %4450 = vmatpush1.msra.mxu0 0.0
  %4451 = vmatprep.subr.mxu0 0.0
  %4452 = vmatpush1.msra.mxu0 0.0
  %4453 = vmatprep.subr.mxu0 0.0
  %4454 = vmatpush1.msra.mxu0 0.0
  %4455 = vmatprep.subr.mxu0 0.0
  %4456 = vmatpush1.msra.mxu0 0.0
  %4457 = vmatprep.subr.mxu0 0.0
  %4458 = vmatpush1.msra.mxu0 0.0
  %4459 = vmatprep.subr.mxu0 0.0
  %4460 = vmatpush1.msra.mxu0 0.0
  %4461 = vmatprep.subr.mxu0 0.0
  %4462 = vmatpush1.msra.mxu0 0.0
  %4463 = vmatprep.subr.mxu0 0.0
  %4464 = vmatpush1.msra.mxu0 0.0
  %4465 = vmatprep.subr.mxu0 0.0
  %4466 = vmatpush1.msra.mxu0 0.0
  %4467 = vmatprep.subr.mxu0 0.0
  %4468 = vmatpush1.msra.mxu0 0.0
  %4469 = vmatprep.subr.mxu0 0.0
  %4470 = vmatpush1.msra.mxu0 0.0
  %4471 = vmatprep.subr.mxu0 0.0
  %4472 = vmatpush1.msra.mxu0 0.0
  %4473 = vmatprep.subr.mxu0 0.0
  %4474 = vmatpush1.msra.mxu0 0.0
  %4475 = vmatprep.subr.mxu0 0.0
  %4476 = vmatpush1.msra.mxu0 0.0
  %4477 = vmatprep.subr.mxu0 0.0
  %4478 = vmatpush1.msra.mxu0 0.0
  %4479 = vmatprep.subr.mxu0 0.0
  %4480 = vmatpush1.msra.mxu0 0.0
  %4481 = vmatprep.subr.mxu0 0.0
  %4482 = vmatpush1.msra.mxu0 0.0
  %4483 = vmatprep.subr.mxu0 0.0
  %4484 = vmatpush1.msra.mxu0 0.0
  %4485 = vmatprep.subr.mxu0 0.0
  %4486 = vmatpush1.msra.mxu0 0.0
  %4487 = vmatprep.subr.mxu0 0.0
  %4488 = vmatpush1.msra.mxu0 0.0
  %4489 = vmatprep.subr.mxu0 0.0
  %4490 = vmatpush1.msra.mxu0 0.0
  %4491 = vmatprep.subr.mxu0 0.0
  %4492 = vmatpush1.msra.mxu0 0.0
  %4493 = vmatprep.mubr.f32.mxu0 0.0
  %4494 = vmatmul.mubr.f32.gmra.mrb[0].mxu0 %v4427
  %v4495 = vpop.f32.mrb[0].mxu0
  %v4496 = vadd.f32 0.0, %v4495
  %v4497 = vpop.f32.mrb[0].mxu0
  %4498 = vdwg.mxu0
  %v4499 = vadd.f32 %v4423, %v4496
  %v4500 = vxor.u32 %v4499, 2147483648
  %v4501 = vmul.f32 %v4500, 1.442695
  %v4502 = vpow.pop %v4501
  %v4503 = vadd.f32 %v4502, 1.0
  %v4504 = vrcp.pop %v4503
  %v4505 = vmul.f32 1.0, %v4504
  %v4506 = vmul.f32 %v4505, 2.0
  %v4507 = vsub.f32 %v4506, 1.0
  %v4508 = vmul.f32 %v4505, %v4415
  %4510 = vrot.lane.b32.xlu0 %v4507, 64
  %v4511 = vpop.permute.xlu0 %4510
  %v4513 = vmul.f32 %v4505, %v4511
  %4515 = vrot.lane.b32.xlu0 %v4513, 32
  %v4516 = vpop.permute.xlu0 %4515
  %v4518 = vadd.f32 %v4508, %v4516
  %v4519 = vtanh.pop %v4518
  %4521 = vrot.lane.b32.xlu0 %v4519, 64
  %v4522 = vpop.permute.xlu0 %4521
  %v4524 = vmul.f32 %v4505, %v4522
  %v4525 = vlaneseq
  %v4526 = vshrl.u32 %v4525, 7
  %v4527 = vsub.s32 3, %v4526
  %v4528 = vrot.slane %v17, %v4527
  %4530 = vrot.lane.b32.xlu0 %v4524, 32
  %v4531 = vpop.permute.xlu0 %4530
  %v4532 = vsel %vm910, %v4531, 0
  %4534 = vmatprep.subr.mxu0 0.0
  %4535 = vmatpush1.msra.mxu0 %v1017
  %4536 = vmatprep.subr.mxu0 0.0
  %4537 = vmatpush1.msra.mxu0 %v1018
  %4538 = vmatprep.subr.mxu0 0.0
  %4539 = vmatpush1.msra.mxu0 %v1019
  %4540 = vmatprep.subr.mxu0 0.0
  %4541 = vmatpush1.msra.mxu0 %v1020
  %4542 = vmatprep.subr.mxu0 0.0
  %4543 = vmatpush1.msra.mxu0 0.0
  %4544 = vmatprep.subr.mxu0 0.0
  %4545 = vmatpush1.msra.mxu0 0.0
  %4546 = vmatprep.subr.mxu0 0.0
  %4547 = vmatpush1.msra.mxu0 0.0
  %4548 = vmatprep.subr.mxu0 0.0
  %4549 = vmatpush1.msra.mxu0 0.0
  %4550 = vmatprep.subr.mxu0 0.0
  %4551 = vmatpush1.msra.mxu0 0.0
  %4552 = vmatprep.subr.mxu0 0.0
  %4553 = vmatpush1.msra.mxu0 0.0
  %4554 = vmatprep.subr.mxu0 0.0
  %4555 = vmatpush1.msra.mxu0 0.0
  %4556 = vmatprep.subr.mxu0 0.0
  %4557 = vmatpush1.msra.mxu0 0.0
  %4558 = vmatprep.subr.mxu0 0.0
  %4559 = vmatpush1.msra.mxu0 0.0
  %4560 = vmatprep.subr.mxu0 0.0
  %4561 = vmatpush1.msra.mxu0 0.0
  %4562 = vmatprep.subr.mxu0 0.0
  %4563 = vmatpush1.msra.mxu0 0.0
  %4564 = vmatprep.subr.mxu0 0.0
  %4565 = vmatpush1.msra.mxu0 0.0
  %4566 = vmatprep.subr.mxu0 0.0
  %4567 = vmatpush1.msra.mxu0 0.0
  %4568 = vmatprep.subr.mxu0 0.0
  %4569 = vmatpush1.msra.mxu0 0.0
  %4570 = vmatprep.subr.mxu0 0.0
  %4571 = vmatpush1.msra.mxu0 0.0
  %4572 = vmatprep.subr.mxu0 0.0
  %4573 = vmatpush1.msra.mxu0 0.0
  %4574 = vmatprep.subr.mxu0 0.0
  %4575 = vmatpush1.msra.mxu0 0.0
  %4576 = vmatprep.subr.mxu0 0.0
  %4577 = vmatpush1.msra.mxu0 0.0
  %4578 = vmatprep.subr.mxu0 0.0
  %4579 = vmatpush1.msra.mxu0 0.0
  %4580 = vmatprep.subr.mxu0 0.0
  %4581 = vmatpush1.msra.mxu0 0.0
  %4582 = vmatprep.subr.mxu0 0.0
  %4583 = vmatpush1.msra.mxu0 0.0
  %4584 = vmatprep.subr.mxu0 0.0
  %4585 = vmatpush1.msra.mxu0 0.0
  %4586 = vmatprep.subr.mxu0 0.0
  %4587 = vmatpush1.msra.mxu0 0.0
  %4588 = vmatprep.subr.mxu0 0.0
  %4589 = vmatpush1.msra.mxu0 0.0
  %4590 = vmatprep.subr.mxu0 0.0
  %4591 = vmatpush1.msra.mxu0 0.0
  %4592 = vmatprep.subr.mxu0 0.0
  %4593 = vmatpush1.msra.mxu0 0.0
  %4594 = vmatprep.subr.mxu0 0.0
  %4595 = vmatpush1.msra.mxu0 0.0
  %4596 = vmatprep.subr.mxu0 0.0
  %4597 = vmatpush1.msra.mxu0 0.0
  %4598 = vmatprep.mubr.f32.mxu0 0.0
  %4599 = vmatmul.mubr.f32.gmra.mrb[0].mxu0 %v4532
  %v4600 = vpop.f32.mrb[0].mxu0
  %v4601 = vadd.f32 %v4528, %v4600
  %v4602 = vpop.f32.mrb[0].mxu0
  %4603 = vdwg.mxu0
  %4604 = vst [vmem:[%s4] sm:$0xff] %v4601
  // Predicated region
  $region18: #{hybrid_forward.1} parent=0 // pred_check
    _
  $region19: #{hybrid_forward.1} parent=0 // pred_check_branch
    %4606 = sbr.rel (0) target = $region21
  $region20: #{hybrid_forward.1} parent=0 // pred_region
    _
  $region21: #{hybrid_forward.1} parent=0 // pred_fallthru
    _
  // Predicated region
  $region22: #{hybrid_forward.1} parent=0 // pred_check
    _
  $region23: #{hybrid_forward.1} parent=0 // pred_check_branch
    %4608 = sbr.rel (0) target = $region25
  $region24: #{hybrid_forward.1} parent=0 // pred_region
    _
  $region25: #{hybrid_forward.1} parent=0 // pred_fallthru
    _

</llo_original>
